<compile_context>
chip_gen: v6e
topology: v6e:2x2x1
jax: 0.10.0
libtpu: 0.0.40
codegen_flags: <defaults>
</compile_context>

<pallas_src>
import functools

import jax
import jax.numpy as jnp
from jax import lax
from jax.experimental import pallas as pl
from jax.experimental.pallas import tpu as pltpu

# ----------------------------- config ---------------------------------------
HIDDEN_SIZE = 128                      # C
HEAD_SIZE = 16                         # N
N_HEAD = HIDDEN_SIZE // HEAD_SIZE      # H = 8  ->  H*N = 128 lanes (one full vreg row)
HEAD_SIZE_DIVISOR = 8
D_DECAY_LORA = 64
D_AAA_LORA = 64
D_MV_LORA = 32
D_GATE_LORA = 128
GN_EPS = 1e-5 * HEAD_SIZE_DIVISOR ** 2
WKV_HAS_GATE = True
WKV_HAS_GROUP_NORM = True
# Sequence-chunk size (use 64 for production sequence lengths; 8 here so the tiny
# test below exercises the multi-chunk state-carry path).
WKV_SEQ_CHUNK = 8


# ------------------- fused WKV7 + GN + bonus + gate + output kernel -----------------
def _wkv7_fused_kernel(r_ref, w_ref, k_ref, v_ref, a_ref, g_ref, s0_ref,
                       kk_ref, ka_ref, rk_ref, lnw_ref, lnb_ref,
                       gsm_ref, bm_ref, wo_ref,
                       out_ref, sT_ref,
                       mats_ref, state_ref,
                       *, head_size, group, eps, use_gn, use_gate):
    f32 = jnp.float32
    TC, C = out_ref.shape
    N = head_size
    n_groups = TC // group
    c_idx = pl.program_id(1)

    BM = bm_ref[...]                   # (C, C) block mask: 1 iff same head (constant)
    Gs = gsm_ref[...]                  # (N, C) per-head lane mask: Gs[j, l] = (l%N == j)
    kk_row = kk_ref[...].astype(f32)   # (1, C)
    ka_row = ka_ref[...].astype(f32)

    # Initialize the carried wkv state at the first chunk of each batch element.
    @pl.when(c_idx == 0)
    def _():
        state_ref[...] = s0_ref[...].astype(f32)

    # ---- per-chunk precompute (no per-step MXU pushes inside the recurrence) ----
    r = r_ref[...].astype(f32)         # (TC, C), lane = h*N + key index
    w = w_ref[...].astype(f32)
    k_raw = k_ref[...].astype(f32)
    a = a_ref[...].astype(f32)

    # kk = F.normalize(k * k_k) within each head (p=2, eps=1e-12)
    kk = k_raw * kk_row
    kk_ss = jnp.dot(kk * kk, BM, preferred_element_type=f32)   # per-head segmented sum
    kk = kk * lax.rsqrt(jnp.maximum(kk_ss, 1e-24))

    k_mod = k_raw * (1.0 + (a - 1.0) * ka_row)
    decay = jnp.exp(-jnp.exp(w))       # one batched EUP pass for the whole chunk

    # Broadcast matrices for ALL steps of the chunk:
    #   mats[(m*TC + t)*N + j, h*N + i] = q_m[t, h*N + j]
    # for q_0..q_4 = decay, -kk, kk*a, k, r.  Built as sublane repeat * lane mask,
    # then one block-mask matmul (each output element has exactly one nonzero term,
    # so the f32 MXU result is exact).
    stack5 = jnp.concatenate([decay, -kk, kk * a, k_mod, r], axis=0)     # (5*TC, C)
    masked = (stack5[:, None, :] * Gs[None, :, :]).reshape(5 * TC * N, C)
    mats_ref[...] = jnp.dot(masked, BM, preferred_element_type=f32)

    # -------- sequential recurrence: fori over groups, 8 steps unrolled/group --------
    # state s[j, h*N + i] = per-head wkv state (key j, value i), all heads packed in lanes.
    stride = TC * N                    # rows per quantity in mats_ref

    def mat(m, t_row):
        start = pl.multiple_of(m * stride + t_row, N)
        return mats_ref[pl.ds(start, N), :]

    def group_body(gi, s):
        base = pl.multiple_of(gi * group, group)
        v_grp = v_ref[pl.ds(base, group), :].astype(f32)                 # (group, C)
        t_row0 = base * N
        o_rows = []
        for u in range(group):
            t_row = t_row0 + u * N
            Dm = mat(0, t_row)         # decay[h, j] broadcast over value lanes
            Am = mat(1, t_row)         # (-kk)[h, j]
            Bm = mat(2, t_row)         # (kk*a)[h, j]
            Km = mat(3, t_row)         # k[h, j]
            Rm = mat(4, t_row)         # r[h, j]
            v_t = v_grp[u:u + 1, :]                                      # (1, C)
            sa = jnp.sum(Am * s, axis=0, keepdims=True)                  # XLU sublane reduce
            s = Dm * s + Bm * sa + Km * v_t
            o_rows.append(jnp.sum(Rm * s, axis=0, keepdims=True))
        # one full (group, 128) slab store per group (no masked row stores)
        out_ref[pl.ds(base, group), :] = jnp.concatenate(o_rows, axis=0).astype(out_ref.dtype)
        return s

    s_final = lax.fori_loop(0, n_groups, group_body, state_ref[...])
    state_ref[...] = s_final                      # carry to next chunk
    sT_ref[...] = s_final.astype(sT_ref.dtype)    # final-state output (resident per b)

    # ------ per-head GroupNorm + bonus: one block-mask matmul for all the sums -------
    o = out_ref[...].astype(f32)
    r2 = r_ref[...].astype(f32)
    k2 = k_ref[...].astype(f32)
    a2 = a_ref[...].astype(f32)
    v2 = v_ref[...].astype(f32)
    km2 = k2 * (1.0 + (a2 - 1.0) * ka_row)
    bonus_in = r2 * km2 * rk_ref[...].astype(f32)
    stats = jnp.dot(jnp.concatenate([o, o * o, bonus_in], axis=0), BM,
                    preferred_element_type=f32)                          # (3*TC, C)
    o_sum = stats[0:TC, :]
    o_sq_sum = stats[TC:2 * TC, :]
    bonus_sum = stats[2 * TC:3 * TC, :]
    if use_gn:
        inv_n = 1.0 / N
        mu = o_sum * inv_n
        var = o_sq_sum * inv_n - mu * mu          # keep in f32 (bf16 would go unstable)
        o = (o - mu) * lax.rsqrt(var + eps) * lnw_ref[...].astype(f32) \
            + lnb_ref[...].astype(f32)
    o = o + bonus_sum * v2

    # --------------------------- gate + output projection ----------------------------
    if use_gate:
        o = o * g_ref[...].astype(f32)
    out_ref[...] = jnp.dot(o.astype(jnp.bfloat16), wo_ref[...],
                           preferred_element_type=f32).astype(out_ref.dtype)


def wkv7_fused_attention(r, w, k, v, a, g, s0, k_k, k_a, r_k, ln_w, ln_b, w_o,
                         *, seq_chunk=WKV_SEQ_CHUNK):
    B, T, C = r.shape
    N = HEAD_SIZE
    tc = T if T <= seq_chunk else seq_chunk
    assert T % tc == 0, "sequence length must be a multiple of the chunk size"
    group = 8 if tc % 8 == 0 else tc
    n_chunks = T // tc

    # Constant masks, hoisted out of the kernel body (fetched once, constant index_map).
    lane = jnp.arange(C, dtype=jnp.int32)
    bm = (lane[:, None] // N == lane[None, :] // N).astype(jnp.float32)          # (C, C)
    gsm = (jnp.arange(N, dtype=jnp.int32)[:, None] == (lane[None, :] % N)).astype(jnp.float32)

    kern = functools.partial(_wkv7_fused_kernel, head_size=N, group=group,
                             eps=GN_EPS, use_gn=WKV_HAS_GROUP_NORM, use_gate=WKV_HAS_GATE)

    seq_spec = pl.BlockSpec((None, tc, C), lambda b, c: (b, c, 0))
    state_spec = pl.BlockSpec((None, N, C), lambda b, c: (b, 0, 0))
    row_spec = pl.BlockSpec((1, C), lambda b, c: (0, 0))
    gsm_spec = pl.BlockSpec((N, C), lambda b, c: (0, 0))
    mat_spec = pl.BlockSpec((C, C), lambda b, c: (0, 0))

    # TODO(synk): for B == 1 on v7x, split heads across a second parallel grid axis so
    # both TensorCores are busy (lane-masked stores trade-off); not needed at B >= 2.
    return pl.pallas_call(
        kern,
        grid_spec=pltpu.PrefetchScalarGridSpec(
            num_scalar_prefetch=0,
            grid=(B, n_chunks),
            in_specs=[seq_spec] * 6 + [state_spec] + [row_spec] * 5
                     + [gsm_spec, mat_spec, mat_spec],
            out_specs=(seq_spec, state_spec),
            scratch_shapes=[pltpu.VMEM((5 * tc * N, C), jnp.float32),   # broadcast mats
                            pltpu.VMEM((N, C), jnp.float32)],           # carried wkv state
        ),
        out_shape=(jax.ShapeDtypeStruct((B, T, C), jnp.float32),
                   jax.ShapeDtypeStruct((B, N, C), jnp.float32)),
        compiler_params=pltpu.CompilerParams(
            dimension_semantics=("parallel", "arbitrary"),
            vmem_limit_bytes=32 * 1024 * 1024),
    )(r, w, k, v, a, g, s0,
      k_k, k_a, r_k, ln_w, ln_b, gsm, bm, w_o.astype(jnp.bfloat16))


# ------------------------------ parameters -----------------------------------
def init_params(key):
    C, H, N = HIDDEN_SIZE, N_HEAD, HEAD_SIZE
    ks = jax.random.split(key, 13)

    def nrm(kk, shape, scale=0.1):
        return scale * jax.random.normal(kk, shape, dtype=jnp.float32)

    idx = jnp.arange(C, dtype=jnp.float32)
    ddd = idx / C
    p = {}
    p["x_r"] = (1.0 - ddd ** 0.2).reshape(1, 1, C)
    p["x_w"] = (1.0 - ddd ** 0.9).reshape(1, 1, C)
    p["x_k"] = (1.0 - ddd ** 0.9).reshape(1, 1, C)
    p["x_v"] = (1.0 - ddd ** 0.4).reshape(1, 1, C)
    p["x_a"] = (1.0 - ddd ** 0.9).reshape(1, 1, C)
    p["x_g"] = (1.0 - ddd ** 0.2).reshape(1, 1, C)

    decay_speed = -7.0 + 5.0 * (idx / (C - 1)) ** 0.85
    p["w0"] = (decay_speed + 0.5).reshape(1, 1, C)
    p["w1"] = nrm(ks[0], (C, D_DECAY_LORA))
    p["w2"] = nrm(ks[1], (D_DECAY_LORA, C))
    p["a0"] = jnp.zeros((1, 1, C), jnp.float32)
    p["a1"] = nrm(ks[2], (C, D_AAA_LORA))
    p["a2"] = nrm(ks[3], (D_AAA_LORA, C))
    p["v0"] = jnp.ones((1, 1, C), jnp.float32)
    p["v1"] = nrm(ks[4], (C, D_MV_LORA))
    p["v2"] = nrm(ks[5], (D_MV_LORA, C))
    p["g1"] = nrm(ks[6], (C, D_GATE_LORA))
    p["g2"] = nrm(ks[7], (D_GATE_LORA, C))
    p["k_k"] = jnp.full((1, 1, C), 0.85, jnp.float32)
    p["k_a"] = jnp.ones((1, 1, C), jnp.float32)
    p["r_k"] = nrm(ks[8], (H, N))
    # dense weights stored as (C_in, C_out) so y = x @ W  (torch Linear with weight = W.T)
    p["W_r"] = nrm(ks[9], (C, C))
    p["W_k"] = nrm(ks[10], (C, C))
    p["W_v"] = nrm(ks[11], (C, C))
    p["W_o"] = nrm(ks[12], (C, C))
    p["ln_w"] = jnp.ones((C,), jnp.float32)
    p["ln_b"] = jnp.zeros((C,), jnp.float32)
    return p


# ------------------------------ forward pass ----------------------------------
def rwkv7_attention_forward(x, params, shift_state, wkv_state, layer_id=0, v_first=None):
    """Mirrors Rwkv7Attention.forward / RWKV_Tmix_x070.forward.

    Returns (out, (token_shift_state, wkv_state), v_first).
    """
    # TODO(synk): past_key_value cache update and update_v_first/get_v_first callbacks are
    # host-side state plumbing; state is returned to the caller instead.
    B, T, C = x.shape
    H, N = N_HEAD, HEAD_SIZE
    p = params

    xprev = jnp.concatenate([shift_state[:, None, :], x[:, :-1]], axis=1)
    xx = xprev - x
    lx = x[:, -1]

    xr = x + xx * p["x_r"]
    xw = x + xx * p["x_w"]
    xk = x + xx * p["x_k"]
    xv = x + xx * p["x_v"]
    xa = x + xx * p["x_a"]
    xg = x + xx * p["x_g"]

    # Small dense / LoRA projections: plain XLA ops (they fuse with the surrounding
    # tanh / sigmoid / softplus; per-matmul pallas_calls would be launch/DMA bound).
    r = xr @ p["W_r"]
    w = -jax.nn.softplus(-(p["w0"] + jnp.tanh(xw @ p["w1"]) @ p["w2"])) - 0.5
    k = xk @ p["W_k"]
    v = xv @ p["W_v"]
    if layer_id == 0:
        v_first = v
    else:
        v = v + (v_first - v) * jax.nn.sigmoid(p["v0"] + (xv @ p["v1"]) @ p["v2"])
    a = jax.nn.sigmoid(p["a0"] + (xa @ p["a1"]) @ p["a2"])
    if WKV_HAS_GATE:
        g = jax.nn.sigmoid(xg @ p["g1"]) @ p["g2"]
    else:
        g = jnp.ones_like(x)

    # Pack the recurrent state: (B, H, N_key, N_value) -> (B, N_key, H*N_value),
    # i.e. key index on sublanes, heads*value packed into lanes (kernel layout).
    s0 = wkv_state.transpose(0, 2, 1, 3).reshape(B, N, C)

    out, sT = wkv7_fused_attention(
        r, w, k, v, a, g, s0,
        p["k_k"].reshape(1, C), p["k_a"].reshape(1, C), p["r_k"].reshape(1, C),
        p["ln_w"].reshape(1, C), p["ln_b"].reshape(1, C), p["W_o"])

    new_wkv = sT.reshape(B, N, H, N).transpose(0, 2, 1, 3)
    return out, (lx, new_wkv), v_first


# ---------------------------------- main --------------------------------------
if __name__ == "__main__":
    key = jax.random.PRNGKey(0)
    kx, kp = jax.random.split(key)

    B, T, C = 2, 16, HIDDEN_SIZE     # T=16 with chunk=8 exercises the multi-chunk carry
    x = jax.random.normal(kx, (B, T, C), dtype=jnp.float32)
    params = init_params(kp)

    # last_state as built by Rwkv7Attention when no cache entry exists:
    shift_state = jnp.zeros((B, C), jnp.float32)
    wkv_state = jnp.zeros((B, N_HEAD, HEAD_SIZE, HEAD_SIZE), jnp.float32)

    fwd = jax.jit(functools.partial(rwkv7_attention_forward, layer_id=0))
    out, (token_shift, new_state), v_first = fwd(x, params, shift_state, wkv_state)

    jax.block_until_ready((out, token_shift, new_state, v_first))
    assert out.shape == (B, T, C)
    assert token_shift.shape == (B, C)
    assert new_state.shape == (B, N_HEAD, HEAD_SIZE, HEAD_SIZE)
    assert v_first.shape == (B, T, C)
    print("KERNEL_OK")
</pallas_src>

<mosaic_0001>
module attributes {stable_mosaic.version = 11 : i64} {
  func.func @_wkv7_fused_kernel(%arg0: i32, %arg1: i32, %arg2: memref<1x8x128xf32, #tpu.memory_space<vmem>>, %arg3: memref<1x8x128xf32, #tpu.memory_space<vmem>>, %arg4: memref<1x8x128xf32, #tpu.memory_space<vmem>>, %arg5: memref<1x8x128xf32, #tpu.memory_space<vmem>>, %arg6: memref<1x8x128xf32, #tpu.memory_space<vmem>>, %arg7: memref<1x8x128xf32, #tpu.memory_space<vmem>>, %arg8: memref<1x16x128xf32, #tpu.memory_space<vmem>>, %arg9: memref<1x128xf32, #tpu.memory_space<vmem>>, %arg10: memref<1x128xf32, #tpu.memory_space<vmem>>, %arg11: memref<1x128xf32, #tpu.memory_space<vmem>>, %arg12: memref<1x128xf32, #tpu.memory_space<vmem>>, %arg13: memref<1x128xf32, #tpu.memory_space<vmem>>, %arg14: memref<16x128xf32, #tpu.memory_space<vmem>>, %arg15: memref<128x128xf32, #tpu.memory_space<vmem>>, %arg16: memref<128x128xbf16, #tpu.memory_space<vmem>>, %arg17: memref<1x8x128xf32, #tpu.memory_space<vmem>>, %arg18: memref<1x16x128xf32, #tpu.memory_space<vmem>>, %arg19: memref<640x128xf32, #tpu.memory_space<vmem>>, %arg20: memref<16x128xf32, #tpu.memory_space<vmem>>) attributes {dimension_semantics = [#tpu.dimension_semantics<parallel>, #tpu.dimension_semantics<arbitrary>], iteration_bounds = array<i64: 2, 2>, scalar_prefetch = 0 : i64, scratch_operands = 2 : i64, tpu.core_type = #tpu.core_type<tc>, window_params = [{transform_indices = @transform_0, window_bounds = array<i64: 1, 8, 128>}, {transform_indices = @transform_1, window_bounds = array<i64: 1, 8, 128>}, {transform_indices = @transform_2, window_bounds = array<i64: 1, 8, 128>}, {transform_indices = @transform_3, window_bounds = array<i64: 1, 8, 128>}, {transform_indices = @transform_4, window_bounds = array<i64: 1, 8, 128>}, {transform_indices = @transform_5, window_bounds = array<i64: 1, 8, 128>}, {transform_indices = @transform_6, window_bounds = array<i64: 1, 16, 128>}, {pipeline_mode = #tpu.pipeline_mode<synchronous>, transform_indices = @transform_7, window_bounds = array<i64: 1, 128>}, {pipeline_mode = #tpu.pipeline_mode<synchronous>, transform_indices = @transform_8, window_bounds = array<i64: 1, 128>}, {pipeline_mode = #tpu.pipeline_mode<synchronous>, transform_indices = @transform_9, window_bounds = array<i64: 1, 128>}, {pipeline_mode = #tpu.pipeline_mode<synchronous>, transform_indices = @transform_10, window_bounds = array<i64: 1, 128>}, {pipeline_mode = #tpu.pipeline_mode<synchronous>, transform_indices = @transform_11, window_bounds = array<i64: 1, 128>}, {pipeline_mode = #tpu.pipeline_mode<synchronous>, transform_indices = @transform_12, window_bounds = array<i64: 16, 128>}, {pipeline_mode = #tpu.pipeline_mode<synchronous>, transform_indices = @transform_13, window_bounds = array<i64: 128, 128>}, {pipeline_mode = #tpu.pipeline_mode<synchronous>, transform_indices = @transform_14, window_bounds = array<i64: 128, 128>}, {transform_indices = @transform_15, window_bounds = array<i64: 1, 8, 128>}, {transform_indices = @transform_16, window_bounds = array<i64: 1, 16, 128>}]} {
    %c0 = arith.constant 0 : index
    %c0_0 = arith.constant 0 : index
    %0 = vector.load %arg15[%c0, %c0_0] : memref<128x128xf32, #tpu.memory_space<vmem>>, vector<128x128xf32>
    %c0_1 = arith.constant 0 : index
    %c0_2 = arith.constant 0 : index
    %1 = vector.load %arg14[%c0_1, %c0_2] : memref<16x128xf32, #tpu.memory_space<vmem>>, vector<16x128xf32>
    %c0_3 = arith.constant 0 : index
    %c0_4 = arith.constant 0 : index
    %2 = vector.load %arg9[%c0_3, %c0_4] : memref<1x128xf32, #tpu.memory_space<vmem>>, vector<1x128xf32>
    %c0_5 = arith.constant 0 : index
    %c0_6 = arith.constant 0 : index
    %3 = vector.load %arg10[%c0_5, %c0_6] : memref<1x128xf32, #tpu.memory_space<vmem>>, vector<1x128xf32>
    %c0_i32 = arith.constant 0 : i32
    %4 = arith.cmpi eq, %arg1, %c0_i32 : i32
    %5 = arith.extui %4 : i1 to i32
    %c0_i32_7 = arith.constant 0 : i32
    %6 = arith.cmpi ne, %5, %c0_i32_7 : i32
    scf.if %6 {
      %c0_170 = arith.constant 0 : index
      %c0_171 = arith.constant 0 : index
      %c0_172 = arith.constant 0 : index
      %397 = vector.load %arg8[%c0_170, %c0_171, %c0_172] : memref<1x16x128xf32, #tpu.memory_space<vmem>>, vector<1x16x128xf32>
      %398 = vector.shape_cast %397 : vector<1x16x128xf32> to vector<16x128xf32>
      %c0_173 = arith.constant 0 : index
      %c0_174 = arith.constant 0 : index
      %399 = vector.load %arg20[%c0_173, %c0_174] : memref<16x128xf32, #tpu.memory_space<vmem>>, vector<16x128xf32>
      tpu.vector_store %arg20[%c0_173, %c0_174], %398 {strides = array<i32>} : memref<16x128xf32, #tpu.memory_space<vmem>>, vector<16x128xf32>,
    } else {
    }
    %c0_8 = arith.constant 0 : index
    %c0_9 = arith.constant 0 : index
    %c0_10 = arith.constant 0 : index
    %7 = vector.load %arg2[%c0_8, %c0_9, %c0_10] : memref<1x8x128xf32, #tpu.memory_space<vmem>>, vector<1x8x128xf32>
    %8 = vector.shape_cast %7 : vector<1x8x128xf32> to vector<8x128xf32>
    %c0_11 = arith.constant 0 : index
    %c0_12 = arith.constant 0 : index
    %c0_13 = arith.constant 0 : index
    %9 = vector.load %arg3[%c0_11, %c0_12, %c0_13] : memref<1x8x128xf32, #tpu.memory_space<vmem>>, vector<1x8x128xf32>
    %10 = vector.shape_cast %9 : vector<1x8x128xf32> to vector<8x128xf32>
    %c0_14 = arith.constant 0 : index
    %c0_15 = arith.constant 0 : index
    %c0_16 = arith.constant 0 : index
    %11 = vector.load %arg4[%c0_14, %c0_15, %c0_16] : memref<1x8x128xf32, #tpu.memory_space<vmem>>, vector<1x8x128xf32>
    %12 = vector.shape_cast %11 : vector<1x8x128xf32> to vector<8x128xf32>
    %c0_17 = arith.constant 0 : index
    %c0_18 = arith.constant 0 : index
    %c0_19 = arith.constant 0 : index
    %13 = vector.load %arg6[%c0_17, %c0_18, %c0_19] : memref<1x8x128xf32, #tpu.memory_space<vmem>>, vector<1x8x128xf32>
    %14 = vector.shape_cast %13 : vector<1x8x128xf32> to vector<8x128xf32>
    %15 = vector.broadcast %2 : vector<1x128xf32> to vector<8x128xf32>
    %16 = arith.mulf %12, %15 : vector<8x128xf32>
    %17 = arith.mulf %16, %16 : vector<8x128xf32>
    %cst = arith.constant dense<0.000000e+00> : vector<8x128xf32>
    %18 = tpu.matmul %17, %0, %cst {dimension_numbers = #tpu.dot_dimension_numbers<[1], [0], [0], [1], [0, 0, 1, 1], [], []>} : vector<8x128xf32>, vector<128x128xf32>, vector<8x128xf32> -> vector<8x128xf32>
    %cst_20 = arith.constant 1.000000e-24 : f32
    %19 = vector.broadcast %cst_20 : f32 to vector<8x128xf32>
    %20 = arith.maximumf %18, %19 : vector<8x128xf32>
    %21 = math.rsqrt %20 : vector<8x128xf32>
    %22 = arith.mulf %16, %21 : vector<8x128xf32>
    %cst_21 = arith.constant 1.000000e+00 : f32
    %23 = vector.broadcast %cst_21 : f32 to vector<8x128xf32>
    %24 = arith.subf %14, %23 : vector<8x128xf32>
    %25 = vector.broadcast %3 : vector<1x128xf32> to vector<8x128xf32>
    %26 = arith.mulf %24, %25 : vector<8x128xf32>
    %cst_22 = arith.constant 1.000000e+00 : f32
    %27 = vector.broadcast %cst_22 : f32 to vector<8x128xf32>
    %28 = arith.addf %27, %26 : vector<8x128xf32>
    %29 = arith.mulf %12, %28 : vector<8x128xf32>
    %30 = math.exp %10 : vector<8x128xf32>
    %cst_23 = arith.constant 0.000000e+00 : f32
    %31 = vector.broadcast %cst_23 : f32 to vector<8x128xf32>
    %32 = arith.subf %31, %30 : vector<8x128xf32>
    %33 = math.exp %32 : vector<8x128xf32>
    %cst_24 = arith.constant 0.000000e+00 : f32
    %34 = vector.broadcast %cst_24 : f32 to vector<8x128xf32>
    %35 = arith.subf %34, %22 : vector<8x128xf32>
    %36 = arith.mulf %22, %14 : vector<8x128xf32>
    %37 = tpu.concatenate %33, %35, %36, %29, %8 in 0 : vector<8x128xf32>, vector<8x128xf32>, vector<8x128xf32>, vector<8x128xf32>, vector<8x128xf32> -> vector<40x128xf32>
    %38 = vector.shape_cast %37 : vector<40x128xf32> to vector<40x1x128xf32>
    %39 = vector.shape_cast %1 : vector<16x128xf32> to vector<1x16x128xf32>
    %40 = vector.broadcast %38 : vector<40x1x128xf32> to vector<40x16x128xf32>
    %41 = vector.broadcast %39 : vector<1x16x128xf32> to vector<40x16x128xf32>
    %42 = arith.mulf %40, %41 : vector<40x16x128xf32>
    %43 = vector.shape_cast %42 : vector<40x16x128xf32> to vector<640x128xf32>
    %cst_25 = arith.constant dense<0.000000e+00> : vector<640x128xf32>
    %44 = tpu.matmul %43, %0, %cst_25 {dimension_numbers = #tpu.dot_dimension_numbers<[1], [0], [0], [1], [0, 0, 1, 1], [], []>} : vector<640x128xf32>, vector<128x128xf32>, vector<640x128xf32> -> vector<640x128xf32>
    %c0_26 = arith.constant 0 : index
    %c0_27 = arith.constant 0 : index
    %45 = vector.load %arg19[%c0_26, %c0_27] : memref<640x128xf32, #tpu.memory_space<vmem>>, vector<640x128xf32>
    tpu.vector_store %arg19[%c0_26, %c0_27], %44 {strides = array<i32>} : memref<640x128xf32, #tpu.memory_space<vmem>>, vector<640x128xf32>,
    %c0_28 = arith.constant 0 : index
    %c0_29 = arith.constant 0 : index
    %46 = vector.load %arg20[%c0_28, %c0_29] : memref<16x128xf32, #tpu.memory_space<vmem>>, vector<16x128xf32>
    %c0_i32_30 = arith.constant 0 : i32
    %c8_i32 = arith.constant 8 : i32
    %47 = arith.muli %c0_i32_30, %c8_i32 : i32
    %48 = tpu.assume_multiple %47, 8 : i32
    %c0_31 = arith.constant 0 : index
    %49 = arith.index_cast %48 : i32 to index
    %c0_32 = arith.constant 0 : index
    %50 = vector.load %arg5[%c0_31, %49, %c0_32] : memref<1x8x128xf32, #tpu.memory_space<vmem>>, vector<1x8x128xf32>
    %51 = vector.shape_cast %50 : vector<1x8x128xf32> to vector<8x128xf32>
    %c16_i32 = arith.constant 16 : i32
    %52 = arith.muli %48, %c16_i32 : i32
    %c0_i32_33 = arith.constant 0 : i32
    %53 = arith.addi %52, %c0_i32_33 : i32
    %c0_i32_34 = arith.constant 0 : i32
    %54 = arith.addi %c0_i32_34, %53 : i32
    %55 = tpu.assume_multiple %54, 16 : i32
    %56 = arith.index_cast %55 : i32 to index
    %c0_35 = arith.constant 0 : index
    %57 = vector.load %arg19[%56, %c0_35] : memref<640x128xf32, #tpu.memory_space<vmem>>, vector<16x128xf32>
    %c128_i32 = arith.constant 128 : i32
    %58 = arith.addi %c128_i32, %53 : i32
    %59 = tpu.assume_multiple %58, 16 : i32
    %60 = arith.index_cast %59 : i32 to index
    %c0_36 = arith.constant 0 : index
    %61 = vector.load %arg19[%60, %c0_36] : memref<640x128xf32, #tpu.memory_space<vmem>>, vector<16x128xf32>
    %c256_i32 = arith.constant 256 : i32
    %62 = arith.addi %c256_i32, %53 : i32
    %63 = tpu.assume_multiple %62, 16 : i32
    %64 = arith.index_cast %63 : i32 to index
    %c0_37 = arith.constant 0 : index
    %65 = vector.load %arg19[%64, %c0_37] : memref<640x128xf32, #tpu.memory_space<vmem>>, vector<16x128xf32>
    %c384_i32 = arith.constant 384 : i32
    %66 = arith.addi %c384_i32, %53 : i32
    %67 = tpu.assume_multiple %66, 16 : i32
    %68 = arith.index_cast %67 : i32 to index
    %c0_38 = arith.constant 0 : index
    %69 = vector.load %arg19[%68, %c0_38] : memref<640x128xf32, #tpu.memory_space<vmem>>, vector<16x128xf32>
    %c512_i32 = arith.constant 512 : i32
    %70 = arith.addi %c512_i32, %53 : i32
    %71 = tpu.assume_multiple %70, 16 : i32
    %72 = arith.index_cast %71 : i32 to index
    %c0_39 = arith.constant 0 : index
    %73 = vector.load %arg19[%72, %c0_39] : memref<640x128xf32, #tpu.memory_space<vmem>>, vector<16x128xf32>
    %74 = vector.extract_strided_slice %51 {offsets = [0, 0], sizes = [1, 128], strides = [1, 1]} : vector<8x128xf32> to vector<1x128xf32>
    %75 = arith.mulf %61, %46 : vector<16x128xf32>
    %cst_40 = arith.constant dense<0.000000e+00> : vector<128xf32>
    %76 = vector.multi_reduction <add>, %75, %cst_40 [0] : vector<16x128xf32> to vector<128xf32>
    %77 = vector.shape_cast %76 : vector<128xf32> to vector<1x128xf32>
    %78 = arith.mulf %57, %46 : vector<16x128xf32>
    %79 = vector.broadcast %77 : vector<1x128xf32> to vector<16x128xf32>
    %80 = arith.mulf %65, %79 : vector<16x128xf32>
    %81 = arith.addf %78, %80 : vector<16x128xf32>
    %82 = vector.broadcast %74 : vector<1x128xf32> to vector<16x128xf32>
    %83 = arith.mulf %69, %82 : vector<16x128xf32>
    %84 = arith.addf %81, %83 : vector<16x128xf32>
    %85 = arith.mulf %73, %84 : vector<16x128xf32>
    %cst_41 = arith.constant dense<0.000000e+00> : vector<128xf32>
    %86 = vector.multi_reduction <add>, %85, %cst_41 [0] : vector<16x128xf32> to vector<128xf32>
    %87 = vector.shape_cast %86 : vector<128xf32> to vector<1x128xf32>
    %c16_i32_42 = arith.constant 16 : i32
    %88 = arith.addi %52, %c16_i32_42 : i32
    %c0_i32_43 = arith.constant 0 : i32
    %89 = arith.addi %c0_i32_43, %88 : i32
    %90 = tpu.assume_multiple %89, 16 : i32
    %91 = arith.index_cast %90 : i32 to index
    %c0_44 = arith.constant 0 : index
    %92 = vector.load %arg19[%91, %c0_44] : memref<640x128xf32, #tpu.memory_space<vmem>>, vector<16x128xf32>
    %c128_i32_45 = arith.constant 128 : i32
    %93 = arith.addi %c128_i32_45, %88 : i32
    %94 = tpu.assume_multiple %93, 16 : i32
    %95 = arith.index_cast %94 : i32 to index
    %c0_46 = arith.constant 0 : index
    %96 = vector.load %arg19[%95, %c0_46] : memref<640x128xf32, #tpu.memory_space<vmem>>, vector<16x128xf32>
    %c256_i32_47 = arith.constant 256 : i32
    %97 = arith.addi %c256_i32_47, %88 : i32
    %98 = tpu.assume_multiple %97, 16 : i32
    %99 = arith.index_cast %98 : i32 to index
    %c0_48 = arith.constant 0 : index
    %100 = vector.load %arg19[%99, %c0_48] : memref<640x128xf32, #tpu.memory_space<vmem>>, vector<16x128xf32>
    %c384_i32_49 = arith.constant 384 : i32
    %101 = arith.addi %c384_i32_49, %88 : i32
    %102 = tpu.assume_multiple %101, 16 : i32
    %103 = arith.index_cast %102 : i32 to index
    %c0_50 = arith.constant 0 : index
    %104 = vector.load %arg19[%103, %c0_50] : memref<640x128xf32, #tpu.memory_space<vmem>>, vector<16x128xf32>
    %c512_i32_51 = arith.constant 512 : i32
    %105 = arith.addi %c512_i32_51, %88 : i32
    %106 = tpu.assume_multiple %105, 16 : i32
    %107 = arith.index_cast %106 : i32 to index
    %c0_52 = arith.constant 0 : index
    %108 = vector.load %arg19[%107, %c0_52] : memref<640x128xf32, #tpu.memory_space<vmem>>, vector<16x128xf32>
    %109 = vector.extract_strided_slice %51 {offsets = [1, 0], sizes = [1, 128], strides = [1, 1]} : vector<8x128xf32> to vector<1x128xf32>
    %110 = arith.mulf %96, %84 : vector<16x128xf32>
    %cst_53 = arith.constant dense<0.000000e+00> : vector<128xf32>
    %111 = vector.multi_reduction <add>, %110, %cst_53 [0] : vector<16x128xf32> to vector<128xf32>
    %112 = vector.shape_cast %111 : vector<128xf32> to vector<1x128xf32>
    %113 = arith.mulf %92, %84 : vector<16x128xf32>
    %114 = vector.broadcast %112 : vector<1x128xf32> to vector<16x128xf32>
    %115 = arith.mulf %100, %114 : vector<16x128xf32>
    %116 = arith.addf %113, %115 : vector<16x128xf32>
    %117 = vector.broadcast %109 : vector<1x128xf32> to vector<16x128xf32>
    %118 = arith.mulf %104, %117 : vector<16x128xf32>
    %119 = arith.addf %116, %118 : vector<16x128xf32>
    %120 = arith.mulf %108, %119 : vector<16x128xf32>
    %cst_54 = arith.constant dense<0.000000e+00> : vector<128xf32>
    %121 = vector.multi_reduction <add>, %120, %cst_54 [0] : vector<16x128xf32> to vector<128xf32>
    %122 = vector.shape_cast %121 : vector<128xf32> to vector<1x128xf32>
    %c32_i32 = arith.constant 32 : i32
    %123 = arith.addi %52, %c32_i32 : i32
    %c0_i32_55 = arith.constant 0 : i32
    %124 = arith.addi %c0_i32_55, %123 : i32
    %125 = tpu.assume_multiple %124, 16 : i32
    %126 = arith.index_cast %125 : i32 to index
    %c0_56 = arith.constant 0 : index
    %127 = vector.load %arg19[%126, %c0_56] : memref<640x128xf32, #tpu.memory_space<vmem>>, vector<16x128xf32>
    %c128_i32_57 = arith.constant 128 : i32
    %128 = arith.addi %c128_i32_57, %123 : i32
    %129 = tpu.assume_multiple %128, 16 : i32
    %130 = arith.index_cast %129 : i32 to index
    %c0_58 = arith.constant 0 : index
    %131 = vector.load %arg19[%130, %c0_58] : memref<640x128xf32, #tpu.memory_space<vmem>>, vector<16x128xf32>
    %c256_i32_59 = arith.constant 256 : i32
    %132 = arith.addi %c256_i32_59, %123 : i32
    %133 = tpu.assume_multiple %132, 16 : i32
    %134 = arith.index_cast %133 : i32 to index
    %c0_60 = arith.constant 0 : index
    %135 = vector.load %arg19[%134, %c0_60] : memref<640x128xf32, #tpu.memory_space<vmem>>, vector<16x128xf32>
    %c384_i32_61 = arith.constant 384 : i32
    %136 = arith.addi %c384_i32_61, %123 : i32
    %137 = tpu.assume_multiple %136, 16 : i32
    %138 = arith.index_cast %137 : i32 to index
    %c0_62 = arith.constant 0 : index
    %139 = vector.load %arg19[%138, %c0_62] : memref<640x128xf32, #tpu.memory_space<vmem>>, vector<16x128xf32>
    %c512_i32_63 = arith.constant 512 : i32
    %140 = arith.addi %c512_i32_63, %123 : i32
    %141 = tpu.assume_multiple %140, 16 : i32
    %142 = arith.index_cast %141 : i32 to index
    %c0_64 = arith.constant 0 : index
    %143 = vector.load %arg19[%142, %c0_64] : memref<640x128xf32, #tpu.memory_space<vmem>>, vector<16x128xf32>
    %144 = vector.extract_strided_slice %51 {offsets = [2, 0], sizes = [1, 128], strides = [1, 1]} : vector<8x128xf32> to vector<1x128xf32>
    %145 = arith.mulf %131, %119 : vector<16x128xf32>
    %cst_65 = arith.constant dense<0.000000e+00> : vector<128xf32>
    %146 = vector.multi_reduction <add>, %145, %cst_65 [0] : vector<16x128xf32> to vector<128xf32>
    %147 = vector.shape_cast %146 : vector<128xf32> to vector<1x128xf32>
    %148 = arith.mulf %127, %119 : vector<16x128xf32>
    %149 = vector.broadcast %147 : vector<1x128xf32> to vector<16x128xf32>
    %150 = arith.mulf %135, %149 : vector<16x128xf32>
    %151 = arith.addf %148, %150 : vector<16x128xf32>
    %152 = vector.broadcast %144 : vector<1x128xf32> to vector<16x128xf32>
    %153 = arith.mulf %139, %152 : vector<16x128xf32>
    %154 = arith.addf %151, %153 : vector<16x128xf32>
    %155 = arith.mulf %143, %154 : vector<16x128xf32>
    %cst_66 = arith.constant dense<0.000000e+00> : vector<128xf32>
    %156 = vector.multi_reduction <add>, %155, %cst_66 [0] : vector<16x128xf32> to vector<128xf32>
    %157 = vector.shape_cast %156 : vector<128xf32> to vector<1x128xf32>
    %c48_i32 = arith.constant 48 : i32
    %158 = arith.addi %52, %c48_i32 : i32
    %c0_i32_67 = arith.constant 0 : i32
    %159 = arith.addi %c0_i32_67, %158 : i32
    %160 = tpu.assume_multiple %159, 16 : i32
    %161 = arith.index_cast %160 : i32 to index
    %c0_68 = arith.constant 0 : index
    %162 = vector.load %arg19[%161, %c0_68] : memref<640x128xf32, #tpu.memory_space<vmem>>, vector<16x128xf32>
    %c128_i32_69 = arith.constant 128 : i32
    %163 = arith.addi %c128_i32_69, %158 : i32
    %164 = tpu.assume_multiple %163, 16 : i32
    %165 = arith.index_cast %164 : i32 to index
    %c0_70 = arith.constant 0 : index
    %166 = vector.load %arg19[%165, %c0_70] : memref<640x128xf32, #tpu.memory_space<vmem>>, vector<16x128xf32>
    %c256_i32_71 = arith.constant 256 : i32
    %167 = arith.addi %c256_i32_71, %158 : i32
    %168 = tpu.assume_multiple %167, 16 : i32
    %169 = arith.index_cast %168 : i32 to index
    %c0_72 = arith.constant 0 : index
    %170 = vector.load %arg19[%169, %c0_72] : memref<640x128xf32, #tpu.memory_space<vmem>>, vector<16x128xf32>
    %c384_i32_73 = arith.constant 384 : i32
    %171 = arith.addi %c384_i32_73, %158 : i32
    %172 = tpu.assume_multiple %171, 16 : i32
    %173 = arith.index_cast %172 : i32 to index
    %c0_74 = arith.constant 0 : index
    %174 = vector.load %arg19[%173, %c0_74] : memref<640x128xf32, #tpu.memory_space<vmem>>, vector<16x128xf32>
    %c512_i32_75 = arith.constant 512 : i32
    %175 = arith.addi %c512_i32_75, %158 : i32
    %176 = tpu.assume_multiple %175, 16 : i32
    %177 = arith.index_cast %176 : i32 to index
    %c0_76 = arith.constant 0 : index
    %178 = vector.load %arg19[%177, %c0_76] : memref<640x128xf32, #tpu.memory_space<vmem>>, vector<16x128xf32>
    %179 = vector.extract_strided_slice %51 {offsets = [3, 0], sizes = [1, 128], strides = [1, 1]} : vector<8x128xf32> to vector<1x128xf32>
    %180 = arith.mulf %166, %154 : vector<16x128xf32>
    %cst_77 = arith.constant dense<0.000000e+00> : vector<128xf32>
    %181 = vector.multi_reduction <add>, %180, %cst_77 [0] : vector<16x128xf32> to vector<128xf32>
    %182 = vector.shape_cast %181 : vector<128xf32> to vector<1x128xf32>
    %183 = arith.mulf %162, %154 : vector<16x128xf32>
    %184 = vector.broadcast %182 : vector<1x128xf32> to vector<16x128xf32>
    %185 = arith.mulf %170, %184 : vector<16x128xf32>
    %186 = arith.addf %183, %185 : vector<16x128xf32>
    %187 = vector.broadcast %179 : vector<1x128xf32> to vector<16x128xf32>
    %188 = arith.mulf %174, %187 : vector<16x128xf32>
    %189 = arith.addf %186, %188 : vector<16x128xf32>
    %190 = arith.mulf %178, %189 : vector<16x128xf32>
    %cst_78 = arith.constant dense<0.000000e+00> : vector<128xf32>
    %191 = vector.multi_reduction <add>, %190, %cst_78 [0] : vector<16x128xf32> to vector<128xf32>
    %192 = vector.shape_cast %191 : vector<128xf32> to vector<1x128xf32>
    %c64_i32 = arith.constant 64 : i32
    %193 = arith.addi %52, %c64_i32 : i32
    %c0_i32_79 = arith.constant 0 : i32
    %194 = arith.addi %c0_i32_79, %193 : i32
    %195 = tpu.assume_multiple %194, 16 : i32
    %196 = arith.index_cast %195 : i32 to index
    %c0_80 = arith.constant 0 : index
    %197 = vector.load %arg19[%196, %c0_80] : memref<640x128xf32, #tpu.memory_space<vmem>>, vector<16x128xf32>
    %c128_i32_81 = arith.constant 128 : i32
    %198 = arith.addi %c128_i32_81, %193 : i32
    %199 = tpu.assume_multiple %198, 16 : i32
    %200 = arith.index_cast %199 : i32 to index
    %c0_82 = arith.constant 0 : index
    %201 = vector.load %arg19[%200, %c0_82] : memref<640x128xf32, #tpu.memory_space<vmem>>, vector<16x128xf32>
    %c256_i32_83 = arith.constant 256 : i32
    %202 = arith.addi %c256_i32_83, %193 : i32
    %203 = tpu.assume_multiple %202, 16 : i32
    %204 = arith.index_cast %203 : i32 to index
    %c0_84 = arith.constant 0 : index
    %205 = vector.load %arg19[%204, %c0_84] : memref<640x128xf32, #tpu.memory_space<vmem>>, vector<16x128xf32>
    %c384_i32_85 = arith.constant 384 : i32
    %206 = arith.addi %c384_i32_85, %193 : i32
    %207 = tpu.assume_multiple %206, 16 : i32
    %208 = arith.index_cast %207 : i32 to index
    %c0_86 = arith.constant 0 : index
    %209 = vector.load %arg19[%208, %c0_86] : memref<640x128xf32, #tpu.memory_space<vmem>>, vector<16x128xf32>
    %c512_i32_87 = arith.constant 512 : i32
    %210 = arith.addi %c512_i32_87, %193 : i32
    %211 = tpu.assume_multiple %210, 16 : i32
    %212 = arith.index_cast %211 : i32 to index
    %c0_88 = arith.constant 0 : index
    %213 = vector.load %arg19[%212, %c0_88] : memref<640x128xf32, #tpu.memory_space<vmem>>, vector<16x128xf32>
    %214 = vector.extract_strided_slice %51 {offsets = [4, 0], sizes = [1, 128], strides = [1, 1]} : vector<8x128xf32> to vector<1x128xf32>
    %215 = arith.mulf %201, %189 : vector<16x128xf32>
    %cst_89 = arith.constant dense<0.000000e+00> : vector<128xf32>
    %216 = vector.multi_reduction <add>, %215, %cst_89 [0] : vector<16x128xf32> to vector<128xf32>
    %217 = vector.shape_cast %216 : vector<128xf32> to vector<1x128xf32>
    %218 = arith.mulf %197, %189 : vector<16x128xf32>
    %219 = vector.broadcast %217 : vector<1x128xf32> to vector<16x128xf32>
    %220 = arith.mulf %205, %219 : vector<16x128xf32>
    %221 = arith.addf %218, %220 : vector<16x128xf32>
    %222 = vector.broadcast %214 : vector<1x128xf32> to vector<16x128xf32>
    %223 = arith.mulf %209, %222 : vector<16x128xf32>
    %224 = arith.addf %221, %223 : vector<16x128xf32>
    %225 = arith.mulf %213, %224 : vector<16x128xf32>
    %cst_90 = arith.constant dense<0.000000e+00> : vector<128xf32>
    %226 = vector.multi_reduction <add>, %225, %cst_90 [0] : vector<16x128xf32> to vector<128xf32>
    %227 = vector.shape_cast %226 : vector<128xf32> to vector<1x128xf32>
    %c80_i32 = arith.constant 80 : i32
    %228 = arith.addi %52, %c80_i32 : i32
    %c0_i32_91 = arith.constant 0 : i32
    %229 = arith.addi %c0_i32_91, %228 : i32
    %230 = tpu.assume_multiple %229, 16 : i32
    %231 = arith.index_cast %230 : i32 to index
    %c0_92 = arith.constant 0 : index
    %232 = vector.load %arg19[%231, %c0_92] : memref<640x128xf32, #tpu.memory_space<vmem>>, vector<16x128xf32>
    %c128_i32_93 = arith.constant 128 : i32
    %233 = arith.addi %c128_i32_93, %228 : i32
    %234 = tpu.assume_multiple %233, 16 : i32
    %235 = arith.index_cast %234 : i32 to index
    %c0_94 = arith.constant 0 : index
    %236 = vector.load %arg19[%235, %c0_94] : memref<640x128xf32, #tpu.memory_space<vmem>>, vector<16x128xf32>
    %c256_i32_95 = arith.constant 256 : i32
    %237 = arith.addi %c256_i32_95, %228 : i32
    %238 = tpu.assume_multiple %237, 16 : i32
    %239 = arith.index_cast %238 : i32 to index
    %c0_96 = arith.constant 0 : index
    %240 = vector.load %arg19[%239, %c0_96] : memref<640x128xf32, #tpu.memory_space<vmem>>, vector<16x128xf32>
    %c384_i32_97 = arith.constant 384 : i32
    %241 = arith.addi %c384_i32_97, %228 : i32
    %242 = tpu.assume_multiple %241, 16 : i32
    %243 = arith.index_cast %242 : i32 to index
    %c0_98 = arith.constant 0 : index
    %244 = vector.load %arg19[%243, %c0_98] : memref<640x128xf32, #tpu.memory_space<vmem>>, vector<16x128xf32>
    %c512_i32_99 = arith.constant 512 : i32
    %245 = arith.addi %c512_i32_99, %228 : i32
    %246 = tpu.assume_multiple %245, 16 : i32
    %247 = arith.index_cast %246 : i32 to index
    %c0_100 = arith.constant 0 : index
    %248 = vector.load %arg19[%247, %c0_100] : memref<640x128xf32, #tpu.memory_space<vmem>>, vector<16x128xf32>
    %249 = vector.extract_strided_slice %51 {offsets = [5, 0], sizes = [1, 128], strides = [1, 1]} : vector<8x128xf32> to vector<1x128xf32>
    %250 = arith.mulf %236, %224 : vector<16x128xf32>
    %cst_101 = arith.constant dense<0.000000e+00> : vector<128xf32>
    %251 = vector.multi_reduction <add>, %250, %cst_101 [0] : vector<16x128xf32> to vector<128xf32>
    %252 = vector.shape_cast %251 : vector<128xf32> to vector<1x128xf32>
    %253 = arith.mulf %232, %224 : vector<16x128xf32>
    %254 = vector.broadcast %252 : vector<1x128xf32> to vector<16x128xf32>
    %255 = arith.mulf %240, %254 : vector<16x128xf32>
    %256 = arith.addf %253, %255 : vector<16x128xf32>
    %257 = vector.broadcast %249 : vector<1x128xf32> to vector<16x128xf32>
    %258 = arith.mulf %244, %257 : vector<16x128xf32>
    %259 = arith.addf %256, %258 : vector<16x128xf32>
    %260 = arith.mulf %248, %259 : vector<16x128xf32>
    %cst_102 = arith.constant dense<0.000000e+00> : vector<128xf32>
    %261 = vector.multi_reduction <add>, %260, %cst_102 [0] : vector<16x128xf32> to vector<128xf32>
    %262 = vector.shape_cast %261 : vector<128xf32> to vector<1x128xf32>
    %c96_i32 = arith.constant 96 : i32
    %263 = arith.addi %52, %c96_i32 : i32
    %c0_i32_103 = arith.constant 0 : i32
    %264 = arith.addi %c0_i32_103, %263 : i32
    %265 = tpu.assume_multiple %264, 16 : i32
    %266 = arith.index_cast %265 : i32 to index
    %c0_104 = arith.constant 0 : index
    %267 = vector.load %arg19[%266, %c0_104] : memref<640x128xf32, #tpu.memory_space<vmem>>, vector<16x128xf32>
    %c128_i32_105 = arith.constant 128 : i32
    %268 = arith.addi %c128_i32_105, %263 : i32
    %269 = tpu.assume_multiple %268, 16 : i32
    %270 = arith.index_cast %269 : i32 to index
    %c0_106 = arith.constant 0 : index
    %271 = vector.load %arg19[%270, %c0_106] : memref<640x128xf32, #tpu.memory_space<vmem>>, vector<16x128xf32>
    %c256_i32_107 = arith.constant 256 : i32
    %272 = arith.addi %c256_i32_107, %263 : i32
    %273 = tpu.assume_multiple %272, 16 : i32
    %274 = arith.index_cast %273 : i32 to index
    %c0_108 = arith.constant 0 : index
    %275 = vector.load %arg19[%274, %c0_108] : memref<640x128xf32, #tpu.memory_space<vmem>>, vector<16x128xf32>
    %c384_i32_109 = arith.constant 384 : i32
    %276 = arith.addi %c384_i32_109, %263 : i32
    %277 = tpu.assume_multiple %276, 16 : i32
    %278 = arith.index_cast %277 : i32 to index
    %c0_110 = arith.constant 0 : index
    %279 = vector.load %arg19[%278, %c0_110] : memref<640x128xf32, #tpu.memory_space<vmem>>, vector<16x128xf32>
    %c512_i32_111 = arith.constant 512 : i32
    %280 = arith.addi %c512_i32_111, %263 : i32
    %281 = tpu.assume_multiple %280, 16 : i32
    %282 = arith.index_cast %281 : i32 to index
    %c0_112 = arith.constant 0 : index
    %283 = vector.load %arg19[%282, %c0_112] : memref<640x128xf32, #tpu.memory_space<vmem>>, vector<16x128xf32>
    %284 = vector.extract_strided_slice %51 {offsets = [6, 0], sizes = [1, 128], strides = [1, 1]} : vector<8x128xf32> to vector<1x128xf32>
    %285 = arith.mulf %271, %259 : vector<16x128xf32>
    %cst_113 = arith.constant dense<0.000000e+00> : vector<128xf32>
    %286 = vector.multi_reduction <add>, %285, %cst_113 [0] : vector<16x128xf32> to vector<128xf32>
    %287 = vector.shape_cast %286 : vector<128xf32> to vector<1x128xf32>
    %288 = arith.mulf %267, %259 : vector<16x128xf32>
    %289 = vector.broadcast %287 : vector<1x128xf32> to vector<16x128xf32>
    %290 = arith.mulf %275, %289 : vector<16x128xf32>
    %291 = arith.addf %288, %290 : vector<16x128xf32>
    %292 = vector.broadcast %284 : vector<1x128xf32> to vector<16x128xf32>
    %293 = arith.mulf %279, %292 : vector<16x128xf32>
    %294 = arith.addf %291, %293 : vector<16x128xf32>
    %295 = arith.mulf %283, %294 : vector<16x128xf32>
    %cst_114 = arith.constant dense<0.000000e+00> : vector<128xf32>
    %296 = vector.multi_reduction <add>, %295, %cst_114 [0] : vector<16x128xf32> to vector<128xf32>
    %297 = vector.shape_cast %296 : vector<128xf32> to vector<1x128xf32>
    %c112_i32 = arith.constant 112 : i32
    %298 = arith.addi %52, %c112_i32 : i32
    %c0_i32_115 = arith.constant 0 : i32
    %299 = arith.addi %c0_i32_115, %298 : i32
    %300 = tpu.assume_multiple %299, 16 : i32
    %301 = arith.index_cast %300 : i32 to index
    %c0_116 = arith.constant 0 : index
    %302 = vector.load %arg19[%301, %c0_116] : memref<640x128xf32, #tpu.memory_space<vmem>>, vector<16x128xf32>
    %c128_i32_117 = arith.constant 128 : i32
    %303 = arith.addi %c128_i32_117, %298 : i32
    %304 = tpu.assume_multiple %303, 16 : i32
    %305 = arith.index_cast %304 : i32 to index
    %c0_118 = arith.constant 0 : index
    %306 = vector.load %arg19[%305, %c0_118] : memref<640x128xf32, #tpu.memory_space<vmem>>, vector<16x128xf32>
    %c256_i32_119 = arith.constant 256 : i32
    %307 = arith.addi %c256_i32_119, %298 : i32
    %308 = tpu.assume_multiple %307, 16 : i32
    %309 = arith.index_cast %308 : i32 to index
    %c0_120 = arith.constant 0 : index
    %310 = vector.load %arg19[%309, %c0_120] : memref<640x128xf32, #tpu.memory_space<vmem>>, vector<16x128xf32>
    %c384_i32_121 = arith.constant 384 : i32
    %311 = arith.addi %c384_i32_121, %298 : i32
    %312 = tpu.assume_multiple %311, 16 : i32
    %313 = arith.index_cast %312 : i32 to index
    %c0_122 = arith.constant 0 : index
    %314 = vector.load %arg19[%313, %c0_122] : memref<640x128xf32, #tpu.memory_space<vmem>>, vector<16x128xf32>
    %c512_i32_123 = arith.constant 512 : i32
    %315 = arith.addi %c512_i32_123, %298 : i32
    %316 = tpu.assume_multiple %315, 16 : i32
    %317 = arith.index_cast %316 : i32 to index
    %c0_124 = arith.constant 0 : index
    %318 = vector.load %arg19[%317, %c0_124] : memref<640x128xf32, #tpu.memory_space<vmem>>, vector<16x128xf32>
    %319 = vector.extract_strided_slice %51 {offsets = [7, 0], sizes = [1, 128], strides = [1, 1]} : vector<8x128xf32> to vector<1x128xf32>
    %320 = arith.mulf %306, %294 : vector<16x128xf32>
    %cst_125 = arith.constant dense<0.000000e+00> : vector<128xf32>
    %321 = vector.multi_reduction <add>, %320, %cst_125 [0] : vector<16x128xf32> to vector<128xf32>
    %322 = vector.shape_cast %321 : vector<128xf32> to vector<1x128xf32>
    %323 = arith.mulf %302, %294 : vector<16x128xf32>
    %324 = vector.broadcast %322 : vector<1x128xf32> to vector<16x128xf32>
    %325 = arith.mulf %310, %324 : vector<16x128xf32>
    %326 = arith.addf %323, %325 : vector<16x128xf32>
    %327 = vector.broadcast %319 : vector<1x128xf32> to vector<16x128xf32>
    %328 = arith.mulf %314, %327 : vector<16x128xf32>
    %329 = arith.addf %326, %328 : vector<16x128xf32>
    %330 = arith.mulf %318, %329 : vector<16x128xf32>
    %cst_126 = arith.constant dense<0.000000e+00> : vector<128xf32>
    %331 = vector.multi_reduction <add>, %330, %cst_126 [0] : vector<16x128xf32> to vector<128xf32>
    %332 = vector.shape_cast %331 : vector<128xf32> to vector<1x128xf32>
    %333 = tpu.concatenate %87, %122, %157, %192, %227, %262, %297, %332 in 0 : vector<1x128xf32>, vector<1x128xf32>, vector<1x128xf32>, vector<1x128xf32>, vector<1x128xf32>, vector<1x128xf32>, vector<1x128xf32>, vector<1x128xf32> -> vector<8x128xf32>
    %c0_127 = arith.constant 0 : index
    %334 = arith.index_cast %48 : i32 to index
    %c0_128 = arith.constant 0 : index
    %335 = vector.load %arg17[%c0_127, %334, %c0_128] : memref<1x8x128xf32, #tpu.memory_space<vmem>>, vector<1x8x128xf32>
    %336 = vector.shape_cast %335 : vector<1x8x128xf32> to vector<8x128xf32>
    %337 = vector.shape_cast %333 : vector<8x128xf32> to vector<1x8x128xf32>
    tpu.vector_store %arg17[%c0_127, %334, %c0_128], %337 {strides = array<i32>} : memref<1x8x128xf32, #tpu.memory_space<vmem>>, vector<1x8x128xf32>,
    %c1_i32 = arith.constant 1 : i32
    %c0_129 = arith.constant 0 : index
    %c0_130 = arith.constant 0 : index
    %338 = vector.load %arg20[%c0_129, %c0_130] : memref<16x128xf32, #tpu.memory_space<vmem>>, vector<16x128xf32>
    tpu.vector_store %arg20[%c0_129, %c0_130], %329 {strides = array<i32>} : memref<16x128xf32, #tpu.memory_space<vmem>>, vector<16x128xf32>,
    %c0_131 = arith.constant 0 : index
    %c0_132 = arith.constant 0 : index
    %c0_133 = arith.constant 0 : index
    %339 = vector.load %arg18[%c0_131, %c0_132, %c0_133] : memref<1x16x128xf32, #tpu.memory_space<vmem>>, vector<1x16x128xf32>
    %340 = vector.shape_cast %339 : vector<1x16x128xf32> to vector<16x128xf32>
    %341 = vector.shape_cast %329 : vector<16x128xf32> to vector<1x16x128xf32>
    tpu.vector_store %arg18[%c0_131, %c0_132, %c0_133], %341 {strides = array<i32>} : memref<1x16x128xf32, #tpu.memory_space<vmem>>, vector<1x16x128xf32>,
    %c0_134 = arith.constant 0 : index
    %c0_135 = arith.constant 0 : index
    %c0_136 = arith.constant 0 : index
    %342 = vector.load %arg17[%c0_134, %c0_135, %c0_136] : memref<1x8x128xf32, #tpu.memory_space<vmem>>, vector<1x8x128xf32>
    %343 = vector.shape_cast %342 : vector<1x8x128xf32> to vector<8x128xf32>
    %c0_137 = arith.constant 0 : index
    %c0_138 = arith.constant 0 : index
    %c0_139 = arith.constant 0 : index
    %344 = vector.load %arg2[%c0_137, %c0_138, %c0_139] : memref<1x8x128xf32, #tpu.memory_space<vmem>>, vector<1x8x128xf32>
    %345 = vector.shape_cast %344 : vector<1x8x128xf32> to vector<8x128xf32>
    %c0_140 = arith.constant 0 : index
    %c0_141 = arith.constant 0 : index
    %c0_142 = arith.constant 0 : index
    %346 = vector.load %arg4[%c0_140, %c0_141, %c0_142] : memref<1x8x128xf32, #tpu.memory_space<vmem>>, vector<1x8x128xf32>
    %347 = vector.shape_cast %346 : vector<1x8x128xf32> to vector<8x128xf32>
    %c0_143 = arith.constant 0 : index
    %c0_144 = arith.constant 0 : index
    %c0_145 = arith.constant 0 : index
    %348 = vector.load %arg6[%c0_143, %c0_144, %c0_145] : memref<1x8x128xf32, #tpu.memory_space<vmem>>, vector<1x8x128xf32>
    %349 = vector.shape_cast %348 : vector<1x8x128xf32> to vector<8x128xf32>
    %c0_146 = arith.constant 0 : index
    %c0_147 = arith.constant 0 : index
    %c0_148 = arith.constant 0 : index
    %350 = vector.load %arg5[%c0_146, %c0_147, %c0_148] : memref<1x8x128xf32, #tpu.memory_space<vmem>>, vector<1x8x128xf32>
    %351 = vector.shape_cast %350 : vector<1x8x128xf32> to vector<8x128xf32>
    %cst_149 = arith.constant 1.000000e+00 : f32
    %352 = vector.broadcast %cst_149 : f32 to vector<8x128xf32>
    %353 = arith.subf %349, %352 : vector<8x128xf32>
    %354 = vector.broadcast %3 : vector<1x128xf32> to vector<8x128xf32>
    %355 = arith.mulf %353, %354 : vector<8x128xf32>
    %cst_150 = arith.constant 1.000000e+00 : f32
    %356 = vector.broadcast %cst_150 : f32 to vector<8x128xf32>
    %357 = arith.addf %356, %355 : vector<8x128xf32>
    %358 = arith.mulf %347, %357 : vector<8x128xf32>
    %359 = arith.mulf %345, %358 : vector<8x128xf32>
    %c0_151 = arith.constant 0 : index
    %c0_152 = arith.constant 0 : index
    %360 = vector.load %arg11[%c0_151, %c0_152] : memref<1x128xf32, #tpu.memory_space<vmem>>, vector<1x128xf32>
    %361 = vector.broadcast %360 : vector<1x128xf32> to vector<8x128xf32>
    %362 = arith.mulf %359, %361 : vector<8x128xf32>
    %363 = arith.mulf %343, %343 : vector<8x128xf32>
    %364 = tpu.concatenate %343, %363, %362 in 0 : vector<8x128xf32>, vector<8x128xf32>, vector<8x128xf32> -> vector<24x128xf32>
    %cst_153 = arith.constant dense<0.000000e+00> : vector<24x128xf32>
    %365 = tpu.matmul %364, %0, %cst_153 {dimension_numbers = #tpu.dot_dimension_numbers<[1], [0], [0], [1], [0, 0, 1, 1], [], []>} : vector<24x128xf32>, vector<128x128xf32>, vector<24x128xf32> -> vector<24x128xf32>
    %366 = vector.extract_strided_slice %365 {offsets = [0, 0], sizes = [8, 128], strides = [1, 1]} : vector<24x128xf32> to vector<8x128xf32>
    %367 = vector.extract_strided_slice %365 {offsets = [8, 0], sizes = [8, 128], strides = [1, 1]} : vector<24x128xf32> to vector<8x128xf32>
    %368 = vector.extract_strided_slice %365 {offsets = [16, 0], sizes = [8, 128], strides = [1, 1]} : vector<24x128xf32> to vector<8x128xf32>
    %cst_154 = arith.constant 6.250000e-02 : f32
    %369 = vector.broadcast %cst_154 : f32 to vector<8x128xf32>
    %370 = arith.mulf %366, %369 : vector<8x128xf32>
    %cst_155 = arith.constant 6.250000e-02 : f32
    %371 = vector.broadcast %cst_155 : f32 to vector<8x128xf32>
    %372 = arith.mulf %367, %371 : vector<8x128xf32>
    %373 = arith.mulf %370, %370 : vector<8x128xf32>
    %374 = arith.subf %372, %373 : vector<8x128xf32>
    %375 = arith.subf %343, %370 : vector<8x128xf32>
    %cst_156 = arith.constant 6.400000e-04 : f32
    %376 = vector.broadcast %cst_156 : f32 to vector<8x128xf32>
    %377 = arith.addf %374, %376 : vector<8x128xf32>
    %378 = math.rsqrt %377 : vector<8x128xf32>
    %379 = arith.mulf %375, %378 : vector<8x128xf32>
    %c0_157 = arith.constant 0 : index
    %c0_158 = arith.constant 0 : index
    %380 = vector.load %arg12[%c0_157, %c0_158] : memref<1x128xf32, #tpu.memory_space<vmem>>, vector<1x128xf32>
    %381 = vector.broadcast %380 : vector<1x128xf32> to vector<8x128xf32>
    %382 = arith.mulf %379, %381 : vector<8x128xf32>
    %c0_159 = arith.constant 0 : index
    %c0_160 = arith.constant 0 : index
    %383 = vector.load %arg13[%c0_159, %c0_160] : memref<1x128xf32, #tpu.memory_space<vmem>>, vector<1x128xf32>
    %384 = vector.broadcast %383 : vector<1x128xf32> to vector<8x128xf32>
    %385 = arith.addf %382, %384 : vector<8x128xf32>
    %386 = arith.mulf %368, %351 : vector<8x128xf32>
    %387 = arith.addf %385, %386 : vector<8x128xf32>
    %c0_161 = arith.constant 0 : index
    %c0_162 = arith.constant 0 : index
    %c0_163 = arith.constant 0 : index
    %388 = vector.load %arg7[%c0_161, %c0_162, %c0_163] : memref<1x8x128xf32, #tpu.memory_space<vmem>>, vector<1x8x128xf32>
    %389 = vector.shape_cast %388 : vector<1x8x128xf32> to vector<8x128xf32>
    %390 = arith.mulf %387, %389 : vector<8x128xf32>
    %391 = arith.truncf %390 : vector<8x128xf32> to vector<8x128xbf16>
    %c0_164 = arith.constant 0 : index
    %c0_165 = arith.constant 0 : index
    %392 = vector.load %arg16[%c0_164, %c0_165] : memref<128x128xbf16, #tpu.memory_space<vmem>>, vector<128x128xbf16>
    %cst_166 = arith.constant dense<0.000000e+00> : vector<8x128xf32>
    %393 = tpu.matmul %391, %392, %cst_166 {dimension_numbers = #tpu.dot_dimension_numbers<[1], [0], [0], [1], [0, 0, 1, 1], [], []>} : vector<8x128xbf16>, vector<128x128xbf16>, vector<8x128xf32> -> vector<8x128xf32>
    %c0_167 = arith.constant 0 : index
    %c0_168 = arith.constant 0 : index
    %c0_169 = arith.constant 0 : index
    %394 = vector.load %arg17[%c0_167, %c0_168, %c0_169] : memref<1x8x128xf32, #tpu.memory_space<vmem>>, vector<1x8x128xf32>
    %395 = vector.shape_cast %394 : vector<1x8x128xf32> to vector<8x128xf32>
    %396 = vector.shape_cast %393 : vector<8x128xf32> to vector<1x8x128xf32>
    tpu.vector_store %arg17[%c0_167, %c0_168, %c0_169], %396 {strides = array<i32>} : memref<1x8x128xf32, #tpu.memory_space<vmem>>, vector<1x8x128xf32>,
    return
  }
  func.func @transform_0(%arg0: i32, %arg1: i32) -> (i32, i32, i32) {
    %c0_i32 = arith.constant 0 : i32
    %c0_i32_0 = arith.constant 0 : i32
    return %arg0, %arg1, %c0_i32 : i32, i32, i32
  }
  func.func @transform_1(%arg0: i32, %arg1: i32) -> (i32, i32, i32) {
    %c0_i32 = arith.constant 0 : i32
    %c0_i32_0 = arith.constant 0 : i32
    return %arg0, %arg1, %c0_i32 : i32, i32, i32
  }
  func.func @transform_2(%arg0: i32, %arg1: i32) -> (i32, i32, i32) {
    %c0_i32 = arith.constant 0 : i32
    %c0_i32_0 = arith.constant 0 : i32
    return %arg0, %arg1, %c0_i32 : i32, i32, i32
  }
  func.func @transform_3(%arg0: i32, %arg1: i32) -> (i32, i32, i32) {
    %c0_i32 = arith.constant 0 : i32
    %c0_i32_0 = arith.constant 0 : i32
    return %arg0, %arg1, %c0_i32 : i32, i32, i32
  }
  func.func @transform_4(%arg0: i32, %arg1: i32) -> (i32, i32, i32) {
    %c0_i32 = arith.constant 0 : i32
    %c0_i32_0 = arith.constant 0 : i32
    return %arg0, %arg1, %c0_i32 : i32, i32, i32
  }
  func.func @transform_5(%arg0: i32, %arg1: i32) -> (i32, i32, i32) {
    %c0_i32 = arith.constant 0 : i32
    %c0_i32_0 = arith.constant 0 : i32
    return %arg0, %arg1, %c0_i32 : i32, i32, i32
  }
  func.func @transform_6(%arg0: i32, %arg1: i32) -> (i32, i32, i32) {
    %c0_i32 = arith.constant 0 : i32
    %c0_i32_0 = arith.constant 0 : i32
    %c0_i32_1 = arith.constant 0 : i32
    return %arg0, %c0_i32, %c0_i32_0 : i32, i32, i32
  }
  func.func @transform_7(%arg0: i32, %arg1: i32) -> (i32, i32) {
    %c0_i32 = arith.constant 0 : i32
    %c0_i32_0 = arith.constant 0 : i32
    %c0_i32_1 = arith.constant 0 : i32
    return %c0_i32, %c0_i32_0 : i32, i32
  }
  func.func @transform_8(%arg0: i32, %arg1: i32) -> (i32, i32) {
    %c0_i32 = arith.constant 0 : i32
    %c0_i32_0 = arith.constant 0 : i32
    %c0_i32_1 = arith.constant 0 : i32
    return %c0_i32, %c0_i32_0 : i32, i32
  }
  func.func @transform_9(%arg0: i32, %arg1: i32) -> (i32, i32) {
    %c0_i32 = arith.constant 0 : i32
    %c0_i32_0 = arith.constant 0 : i32
    %c0_i32_1 = arith.constant 0 : i32
    return %c0_i32, %c0_i32_0 : i32, i32
  }
  func.func @transform_10(%arg0: i32, %arg1: i32) -> (i32, i32) {
    %c0_i32 = arith.constant 0 : i32
    %c0_i32_0 = arith.constant 0 : i32
    %c0_i32_1 = arith.constant 0 : i32
    return %c0_i32, %c0_i32_0 : i32, i32
  }
  func.func @transform_11(%arg0: i32, %arg1: i32) -> (i32, i32) {
    %c0_i32 = arith.constant 0 : i32
    %c0_i32_0 = arith.constant 0 : i32
    %c0_i32_1 = arith.constant 0 : i32
    return %c0_i32, %c0_i32_0 : i32, i32
  }
  func.func @transform_12(%arg0: i32, %arg1: i32) -> (i32, i32) {
    %c0_i32 = arith.constant 0 : i32
    %c0_i32_0 = arith.constant 0 : i32
    %c0_i32_1 = arith.constant 0 : i32
    return %c0_i32, %c0_i32_0 : i32, i32
  }
  func.func @transform_13(%arg0: i32, %arg1: i32) -> (i32, i32) {
    %c0_i32 = arith.constant 0 : i32
    %c0_i32_0 = arith.constant 0 : i32
    %c0_i32_1 = arith.constant 0 : i32
    return %c0_i32, %c0_i32_0 : i32, i32
  }
  func.func @transform_14(%arg0: i32, %arg1: i32) -> (i32, i32) {
    %c0_i32 = arith.constant 0 : i32
    %c0_i32_0 = arith.constant 0 : i32
    %c0_i32_1 = arith.constant 0 : i32
    return %c0_i32, %c0_i32_0 : i32, i32
  }
  func.func @transform_15(%arg0: i32, %arg1: i32) -> (i32, i32, i32) {
    %c0_i32 = arith.constant 0 : i32
    %c0_i32_0 = arith.constant 0 : i32
    return %arg0, %arg1, %c0_i32 : i32, i32, i32
  }
  func.func @transform_16(%arg0: i32, %arg1: i32) -> (i32, i32, i32) {
    %c0_i32 = arith.constant 0 : i32
    %c0_i32_0 = arith.constant 0 : i32
    %c0_i32_1 = arith.constant 0 : i32
    return %arg0, %c0_i32, %c0_i32_0 : i32, i32, i32
  }
}

</mosaic_0001>

<llo_original>
// kernel: rwkv7_attention_forward.1
$region0: #{rwkv7_attention_forward.1}
  #allocation0 [shape = 'u32[]', space=smem, size = 0x4, offset = 0x4, fixed_abs, tag = 'smem constant byte address 0x4 - core index']
  #allocation1 [shape = 'u32[144,128]{1,0:T(1,128)}', space=vmem, size = 0x12000, scoped, tag = 'internal scratch']
  #allocation2 [shape = 'f32[640,128]{1,0:T(8,128)}', space=vmem, size = 0x50000, scoped, tag = 'scratch operand']
  #allocation3 [shape = 'f32[16,128]{1,0:T(8,128)}', space=vmem, size = 0x2000, scoped, tag = 'scratch operand']
  %s0 = inlined_call_operand.vmem [shape: f32[2,16,128], index: 0, kind: input, shape index: {}]
  %s1 = inlined_call_operand.vmem [shape: f32[2,16,128], index: 1, kind: input, shape index: {}]
  %s2 = inlined_call_operand.vmem [shape: f32[2,16,128], index: 2, kind: input, shape index: {}]
  %s3 = inlined_call_operand.vmem [shape: f32[2,16,128], index: 3, kind: input, shape index: {}]
  %s4 = inlined_call_operand.vmem [shape: f32[2,16,128], index: 4, kind: input, shape index: {}]
  %s5 = inlined_call_operand.vmem [shape: f32[2,16,128], index: 5, kind: input, shape index: {}]
  %s6 = inlined_call_operand.vmem [shape: f32[2,16,128], index: 6, kind: input, shape index: {}]
  %s7 = inlined_call_operand.vmem [shape: f32[1,128], index: 7, kind: input, shape index: {}]
  %s8 = inlined_call_operand.vmem [shape: f32[1,128], index: 8, kind: input, shape index: {}]
  %s9 = inlined_call_operand.vmem [shape: f32[1,128], index: 9, kind: input, shape index: {}]
  %s10 = inlined_call_operand.vmem [shape: f32[1,128], index: 10, kind: input, shape index: {}]
  %s11 = inlined_call_operand.vmem [shape: f32[1,128], index: 11, kind: input, shape index: {}]
  %s12 = inlined_call_operand.vmem [shape: f32[16,128], index: 12, kind: input, shape index: {}]
  %s13 = inlined_call_operand.vmem [shape: f32[128,128], index: 13, kind: input, shape index: {}]
  %s14 = inlined_call_operand.vmem [shape: bf16[128,128], index: 14, kind: input, shape index: {}]
  %s15 = inlined_call_operand.hbm [shape: f32[2,16,128], index: 15, kind: output, shape index: {0}]
  %s16 = inlined_call_operand.vmem [shape: f32[2,16,128], index: 16, kind: output, shape index: {1}]
  %17 = xla_tuple %s15, %s16
  %s18 = sld [smem:[#allocation0]]
  $region105: #{rwkv7_attention_forward.1} parent=0
    _
  %s20 = ssub.s32 1, %s18
  %s21 = scalar_select 0, %s20, %s18
  $region1: #{rwkv7_attention_forward.1} parent=0
    #allocation4 [shape = 'u8[8192]{0}', space=vmem, size = 0x2000, scoped, tag = 'output window, operand 0']
    #allocation5 [shape = 's32[2]{0}', space=sflag, size = 0x8, scoped, tag = 'scoped memory for rwkv7_attention_forward.1']
    %22 = vsyncpa [#allocation5], 0
    %s23 = scalar_lea.sflag [#allocation5], 1
    %24 = vsyncpa %s23, 0
    loop: start=0, step=1, limit=6
    $region2: #{rwkv7_attention_forward.1} parent=1 // loop_pre_header
      _
    $region3: #{rwkv7_attention_forward.1} parent=1 // loop_header
      %s26 = sphi 0, %s30
      %p27 = scmp.ge.s32.totalorder %s26, 6
      %s33 = sphi 0, %s45
      %s34 = sphi 0, %s41
      %s35 = sphi 0, %s33
      %s36 = sphi 0, %s34
      %s37 = sphi 0, %s35
      %s38 = sphi 0, %s36
      %s50 = sphi 0, %s52
      %s53 = sphi 0, %s50
      %s54 = sphi 0, %s53
      %s70 = sphi 0, %s54
      %s78 = sphi 0, %s80
      %s81 = sphi 0, %s78
      %s82 = sphi 0, %s81
      %s98 = sphi 0, %s82
      %s106 = sphi 0, %s108
      %s109 = sphi 0, %s106
      %s110 = sphi 0, %s109
      %s126 = sphi 0, %s110
      %s134 = sphi 0, %s136
      %s137 = sphi 0, %s134
      %s138 = sphi 0, %s137
      %s154 = sphi 0, %s138
      %s162 = sphi 0, %s164
      %s165 = sphi 0, %s162
      %s166 = sphi 0, %s165
      %s182 = sphi 0, %s166
      %s190 = sphi 0, %s192
      %s193 = sphi 0, %s190
      %s194 = sphi 0, %s193
      %s210 = sphi 0, %s194
      %s216 = sphi 0, %s218
      %s219 = sphi 0, %s216
      %s220 = sphi 0, %s219
      %s236 = sphi 0, %s220
      %s240 = sphi 0, %s240
      %s242 = sphi 0, %s240
      %s243 = sphi 0, %s242
      %s257 = sphi 0, %s243
      %s261 = sphi 0, %s261
      %s263 = sphi 0, %s261
      %s264 = sphi 0, %s263
      %s278 = sphi 0, %s264
      %s282 = sphi 0, %s282
      %s284 = sphi 0, %s282
      %s285 = sphi 0, %s284
      %s299 = sphi 0, %s285
      %s303 = sphi 0, %s303
      %s305 = sphi 0, %s303
      %s306 = sphi 0, %s305
      %s320 = sphi 0, %s306
      %s324 = sphi 0, %s324
      %s326 = sphi 0, %s324
      %s327 = sphi 0, %s326
      %s341 = sphi 0, %s327
      %s345 = sphi 0, %s345
      %s347 = sphi 0, %s345
      %s348 = sphi 0, %s347
      %s362 = sphi 0, %s348
      %s366 = sphi 0, %s366
      %s368 = sphi 0, %s366
      %s369 = sphi 0, %s368
      %s383 = sphi 0, %s369
      %s387 = sphi 0, %s387
      %s389 = sphi 0, %s387
      %s390 = sphi 0, %s389
      %s404 = sphi 0, %s390
      %s412 = sphi 0, %s414
      %s415 = sphi 0, %s412
      %s416 = sphi 0, %s415
      %s432 = sphi 0, %s416
      %s438 = sphi 0, %s440
      %s441 = sphi 0, %s438
      %s442 = sphi 0, %s441
      %s458 = sphi 0, %s442
    $region4: #{rwkv7_attention_forward.1} parent=1 // loop_header_branch
      %29 = sbr.rel (%p27) target = $region8
    $region5: #{rwkv7_attention_forward.1} parent=1 // loop_body
      %s31 = ssub.s32 %s26, 1
      %s32 = ssub.s32 %s26, 2
      %s39 = sadd.s32 1, %s34
      %p40 = scmp.ge.s32.totalorder %s39, 2
      %s41 = scalar_select %p40, 0, %s39
      %s42 = sadd.s32 1, %s33
      %s43 = scalar_select %p40, %s42, %s33
      %p44 = scmp.ge.s32.totalorder %s43, 2
      %s45 = scalar_select %p44, 0, %s43
      %s46 = ssub.s32 %s33, %s45
      %s47 = ssub.s32 %s34, %s41
      %s48 = sor.u32 %s46, %s47
      %p49 = scmp.eq.s32.totalorder %s48, 0
      %s51 = sadd.s32 %s50, 1
      %s52 = scalar_select %p49, %s50, %s51
      %p55 = pneg %p49
      %p56 = scmp.eq.s32.totalorder %s26, 3
      %p57 = por %p55, %p56
      %p58 = scmp.ne.s32.totalorder %s50, %s53
      %p59 = scmp.eq.s32.totalorder %s26, 0
      %p60 = por %p58, %p59
      %p61 = scmp.ne.s32.totalorder %s50, %s53
      %p62 = scmp.eq.s32.totalorder %s31, 3
      %p63 = por %p61, %p62
      %p64 = scmp.ne.s32.totalorder %s53, %s54
      %p65 = scmp.eq.s32.totalorder %s31, 0
      %p66 = por %p64, %p65
      %p67 = scmp.ne.s32.totalorder %s53, %s54
      %p68 = scmp.eq.s32.totalorder %s32, 3
      %p69 = por %p67, %p68
      %p71 = scmp.ne.s32.totalorder %s54, %s70
      %p72 = scmp.eq.s32.totalorder %s32, 0
      %p73 = por %p71, %p72
      %s74 = ssub.s32 %s33, %s45
      %s75 = ssub.s32 %s34, %s41
      %s76 = sor.u32 %s74, %s75
      %p77 = scmp.eq.s32.totalorder %s76, 0
      %s79 = sadd.s32 %s78, 1
      %s80 = scalar_select %p77, %s78, %s79
      %p83 = pneg %p77
      %p84 = scmp.eq.s32.totalorder %s26, 3
      %p85 = por %p83, %p84
      %p86 = scmp.ne.s32.totalorder %s78, %s81
      %p87 = scmp.eq.s32.totalorder %s26, 0
      %p88 = por %p86, %p87
      %p89 = scmp.ne.s32.totalorder %s78, %s81
      %p90 = scmp.eq.s32.totalorder %s31, 3
      %p91 = por %p89, %p90
      %p92 = scmp.ne.s32.totalorder %s81, %s82
      %p93 = scmp.eq.s32.totalorder %s31, 0
      %p94 = por %p92, %p93
      %p95 = scmp.ne.s32.totalorder %s81, %s82
      %p96 = scmp.eq.s32.totalorder %s32, 3
      %p97 = por %p95, %p96
      %p99 = scmp.ne.s32.totalorder %s82, %s98
      %p100 = scmp.eq.s32.totalorder %s32, 0
      %p101 = por %p99, %p100
      %s102 = ssub.s32 %s33, %s45
      %s103 = ssub.s32 %s34, %s41
      %s104 = sor.u32 %s102, %s103
      %p105 = scmp.eq.s32.totalorder %s104, 0
      %s107 = sadd.s32 %s106, 1
      %s108 = scalar_select %p105, %s106, %s107
      %p111 = pneg %p105
      %p112 = scmp.eq.s32.totalorder %s26, 3
      %p113 = por %p111, %p112
      %p114 = scmp.ne.s32.totalorder %s106, %s109
      %p115 = scmp.eq.s32.totalorder %s26, 0
      %p116 = por %p114, %p115
      %p117 = scmp.ne.s32.totalorder %s106, %s109
      %p118 = scmp.eq.s32.totalorder %s31, 3
      %p119 = por %p117, %p118
      %p120 = scmp.ne.s32.totalorder %s109, %s110
      %p121 = scmp.eq.s32.totalorder %s31, 0
      %p122 = por %p120, %p121
      %p123 = scmp.ne.s32.totalorder %s109, %s110
      %p124 = scmp.eq.s32.totalorder %s32, 3
      %p125 = por %p123, %p124
      %p127 = scmp.ne.s32.totalorder %s110, %s126
      %p128 = scmp.eq.s32.totalorder %s32, 0
      %p129 = por %p127, %p128
      %s130 = ssub.s32 %s33, %s45
      %s131 = ssub.s32 %s34, %s41
      %s132 = sor.u32 %s130, %s131
      %p133 = scmp.eq.s32.totalorder %s132, 0
      %s135 = sadd.s32 %s134, 1
      %s136 = scalar_select %p133, %s134, %s135
      %p139 = pneg %p133
      %p140 = scmp.eq.s32.totalorder %s26, 3
      %p141 = por %p139, %p140
      %p142 = scmp.ne.s32.totalorder %s134, %s137
      %p143 = scmp.eq.s32.totalorder %s26, 0
      %p144 = por %p142, %p143
      %p145 = scmp.ne.s32.totalorder %s134, %s137
      %p146 = scmp.eq.s32.totalorder %s31, 3
      %p147 = por %p145, %p146
      %p148 = scmp.ne.s32.totalorder %s137, %s138
      %p149 = scmp.eq.s32.totalorder %s31, 0
      %p150 = por %p148, %p149
      %p151 = scmp.ne.s32.totalorder %s137, %s138
      %p152 = scmp.eq.s32.totalorder %s32, 3
      %p153 = por %p151, %p152
      %p155 = scmp.ne.s32.totalorder %s138, %s154
      %p156 = scmp.eq.s32.totalorder %s32, 0
      %p157 = por %p155, %p156
      %s158 = ssub.s32 %s33, %s45
      %s159 = ssub.s32 %s34, %s41
      %s160 = sor.u32 %s158, %s159
      %p161 = scmp.eq.s32.totalorder %s160, 0
      %s163 = sadd.s32 %s162, 1
      %s164 = scalar_select %p161, %s162, %s163
      %p167 = pneg %p161
      %p168 = scmp.eq.s32.totalorder %s26, 3
      %p169 = por %p167, %p168
      %p170 = scmp.ne.s32.totalorder %s162, %s165
      %p171 = scmp.eq.s32.totalorder %s26, 0
      %p172 = por %p170, %p171
      %p173 = scmp.ne.s32.totalorder %s162, %s165
      %p174 = scmp.eq.s32.totalorder %s31, 3
      %p175 = por %p173, %p174
      %p176 = scmp.ne.s32.totalorder %s165, %s166
      %p177 = scmp.eq.s32.totalorder %s31, 0
      %p178 = por %p176, %p177
      %p179 = scmp.ne.s32.totalorder %s165, %s166
      %p180 = scmp.eq.s32.totalorder %s32, 3
      %p181 = por %p179, %p180
      %p183 = scmp.ne.s32.totalorder %s166, %s182
      %p184 = scmp.eq.s32.totalorder %s32, 0
      %p185 = por %p183, %p184
      %s186 = ssub.s32 %s33, %s45
      %s187 = ssub.s32 %s34, %s41
      %s188 = sor.u32 %s186, %s187
      %p189 = scmp.eq.s32.totalorder %s188, 0
      %s191 = sadd.s32 %s190, 1
      %s192 = scalar_select %p189, %s190, %s191
      %p195 = pneg %p189
      %p196 = scmp.eq.s32.totalorder %s26, 3
      %p197 = por %p195, %p196
      %p198 = scmp.ne.s32.totalorder %s190, %s193
      %p199 = scmp.eq.s32.totalorder %s26, 0
      %p200 = por %p198, %p199
      %p201 = scmp.ne.s32.totalorder %s190, %s193
      %p202 = scmp.eq.s32.totalorder %s31, 3
      %p203 = por %p201, %p202
      %p204 = scmp.ne.s32.totalorder %s193, %s194
      %p205 = scmp.eq.s32.totalorder %s31, 0
      %p206 = por %p204, %p205
      %p207 = scmp.ne.s32.totalorder %s193, %s194
      %p208 = scmp.eq.s32.totalorder %s32, 3
      %p209 = por %p207, %p208
      %p211 = scmp.ne.s32.totalorder %s194, %s210
      %p212 = scmp.eq.s32.totalorder %s32, 0
      %p213 = por %p211, %p212
      %s214 = ssub.s32 %s33, %s45
      %p215 = scmp.eq.s32.totalorder %s214, 0
      %s217 = sadd.s32 %s216, 1
      %s218 = scalar_select %p215, %s216, %s217
      %p221 = pneg %p215
      %p222 = scmp.eq.s32.totalorder %s26, 3
      %p223 = por %p221, %p222
      %p224 = scmp.ne.s32.totalorder %s216, %s219
      %p225 = scmp.eq.s32.totalorder %s26, 0
      %p226 = por %p224, %p225
      %p227 = scmp.ne.s32.totalorder %s216, %s219
      %p228 = scmp.eq.s32.totalorder %s31, 3
      %p229 = por %p227, %p228
      %p230 = scmp.ne.s32.totalorder %s219, %s220
      %p231 = scmp.eq.s32.totalorder %s31, 0
      %p232 = por %p230, %p231
      %p233 = scmp.ne.s32.totalorder %s219, %s220
      %p234 = scmp.eq.s32.totalorder %s32, 3
      %p235 = por %p233, %p234
      %p237 = scmp.ne.s32.totalorder %s220, %s236
      %p238 = scmp.eq.s32.totalorder %s32, 0
      %p239 = por %p237, %p238
      %s241 = sadd.s32 %s240, 1
      %p244 = scmp.eq.s32.totalorder %s26, 3
      %p245 = scmp.ne.s32.totalorder %s240, %s242
      %p246 = scmp.eq.s32.totalorder %s26, 0
      %p247 = por %p245, %p246
      %p248 = scmp.ne.s32.totalorder %s240, %s242
      %p249 = scmp.eq.s32.totalorder %s31, 3
      %p250 = por %p248, %p249
      %p251 = scmp.ne.s32.totalorder %s242, %s243
      %p252 = scmp.eq.s32.totalorder %s31, 0
      %p253 = por %p251, %p252
      %p254 = scmp.ne.s32.totalorder %s242, %s243
      %p255 = scmp.eq.s32.totalorder %s32, 3
      %p256 = por %p254, %p255
      %p258 = scmp.ne.s32.totalorder %s243, %s257
      %p259 = scmp.eq.s32.totalorder %s32, 0
      %p260 = por %p258, %p259
      %s262 = sadd.s32 %s261, 1
      %p265 = scmp.eq.s32.totalorder %s26, 3
      %p266 = scmp.ne.s32.totalorder %s261, %s263
      %p267 = scmp.eq.s32.totalorder %s26, 0
      %p268 = por %p266, %p267
      %p269 = scmp.ne.s32.totalorder %s261, %s263
      %p270 = scmp.eq.s32.totalorder %s31, 3
      %p271 = por %p269, %p270
      %p272 = scmp.ne.s32.totalorder %s263, %s264
      %p273 = scmp.eq.s32.totalorder %s31, 0
      %p274 = por %p272, %p273
      %p275 = scmp.ne.s32.totalorder %s263, %s264
      %p276 = scmp.eq.s32.totalorder %s32, 3
      %p277 = por %p275, %p276
      %p279 = scmp.ne.s32.totalorder %s264, %s278
      %p280 = scmp.eq.s32.totalorder %s32, 0
      %p281 = por %p279, %p280
      %s283 = sadd.s32 %s282, 1
      %p286 = scmp.eq.s32.totalorder %s26, 3
      %p287 = scmp.ne.s32.totalorder %s282, %s284
      %p288 = scmp.eq.s32.totalorder %s26, 0
      %p289 = por %p287, %p288
      %p290 = scmp.ne.s32.totalorder %s282, %s284
      %p291 = scmp.eq.s32.totalorder %s31, 3
      %p292 = por %p290, %p291
      %p293 = scmp.ne.s32.totalorder %s284, %s285
      %p294 = scmp.eq.s32.totalorder %s31, 0
      %p295 = por %p293, %p294
      %p296 = scmp.ne.s32.totalorder %s284, %s285
      %p297 = scmp.eq.s32.totalorder %s32, 3
      %p298 = por %p296, %p297
      %p300 = scmp.ne.s32.totalorder %s285, %s299
      %p301 = scmp.eq.s32.totalorder %s32, 0
      %p302 = por %p300, %p301
      %s304 = sadd.s32 %s303, 1
      %p307 = scmp.eq.s32.totalorder %s26, 3
      %p308 = scmp.ne.s32.totalorder %s303, %s305
      %p309 = scmp.eq.s32.totalorder %s26, 0
      %p310 = por %p308, %p309
      %p311 = scmp.ne.s32.totalorder %s303, %s305
      %p312 = scmp.eq.s32.totalorder %s31, 3
      %p313 = por %p311, %p312
      %p314 = scmp.ne.s32.totalorder %s305, %s306
      %p315 = scmp.eq.s32.totalorder %s31, 0
      %p316 = por %p314, %p315
      %p317 = scmp.ne.s32.totalorder %s305, %s306
      %p318 = scmp.eq.s32.totalorder %s32, 3
      %p319 = por %p317, %p318
      %p321 = scmp.ne.s32.totalorder %s306, %s320
      %p322 = scmp.eq.s32.totalorder %s32, 0
      %p323 = por %p321, %p322
      %s325 = sadd.s32 %s324, 1
      %p328 = scmp.eq.s32.totalorder %s26, 3
      %p329 = scmp.ne.s32.totalorder %s324, %s326
      %p330 = scmp.eq.s32.totalorder %s26, 0
      %p331 = por %p329, %p330
      %p332 = scmp.ne.s32.totalorder %s324, %s326
      %p333 = scmp.eq.s32.totalorder %s31, 3
      %p334 = por %p332, %p333
      %p335 = scmp.ne.s32.totalorder %s326, %s327
      %p336 = scmp.eq.s32.totalorder %s31, 0
      %p337 = por %p335, %p336
      %p338 = scmp.ne.s32.totalorder %s326, %s327
      %p339 = scmp.eq.s32.totalorder %s32, 3
      %p340 = por %p338, %p339
      %p342 = scmp.ne.s32.totalorder %s327, %s341
      %p343 = scmp.eq.s32.totalorder %s32, 0
      %p344 = por %p342, %p343
      %s346 = sadd.s32 %s345, 1
      %p349 = scmp.eq.s32.totalorder %s26, 3
      %p350 = scmp.ne.s32.totalorder %s345, %s347
      %p351 = scmp.eq.s32.totalorder %s26, 0
      %p352 = por %p350, %p351
      %p353 = scmp.ne.s32.totalorder %s345, %s347
      %p354 = scmp.eq.s32.totalorder %s31, 3
      %p355 = por %p353, %p354
      %p356 = scmp.ne.s32.totalorder %s347, %s348
      %p357 = scmp.eq.s32.totalorder %s31, 0
      %p358 = por %p356, %p357
      %p359 = scmp.ne.s32.totalorder %s347, %s348
      %p360 = scmp.eq.s32.totalorder %s32, 3
      %p361 = por %p359, %p360
      %p363 = scmp.ne.s32.totalorder %s348, %s362
      %p364 = scmp.eq.s32.totalorder %s32, 0
      %p365 = por %p363, %p364
      %s367 = sadd.s32 %s366, 1
      %p370 = scmp.eq.s32.totalorder %s26, 3
      %p371 = scmp.ne.s32.totalorder %s366, %s368
      %p372 = scmp.eq.s32.totalorder %s26, 0
      %p373 = por %p371, %p372
      %p374 = scmp.ne.s32.totalorder %s366, %s368
      %p375 = scmp.eq.s32.totalorder %s31, 3
      %p376 = por %p374, %p375
      %p377 = scmp.ne.s32.totalorder %s368, %s369
      %p378 = scmp.eq.s32.totalorder %s31, 0
      %p379 = por %p377, %p378
      %p380 = scmp.ne.s32.totalorder %s368, %s369
      %p381 = scmp.eq.s32.totalorder %s32, 3
      %p382 = por %p380, %p381
      %p384 = scmp.ne.s32.totalorder %s369, %s383
      %p385 = scmp.eq.s32.totalorder %s32, 0
      %p386 = por %p384, %p385
      %s388 = sadd.s32 %s387, 1
      %p391 = scmp.eq.s32.totalorder %s26, 3
      %p392 = scmp.ne.s32.totalorder %s387, %s389
      %p393 = scmp.eq.s32.totalorder %s26, 0
      %p394 = por %p392, %p393
      %p395 = scmp.ne.s32.totalorder %s387, %s389
      %p396 = scmp.eq.s32.totalorder %s31, 3
      %p397 = por %p395, %p396
      %p398 = scmp.ne.s32.totalorder %s389, %s390
      %p399 = scmp.eq.s32.totalorder %s31, 0
      %p400 = por %p398, %p399
      %p401 = scmp.ne.s32.totalorder %s389, %s390
      %p402 = scmp.eq.s32.totalorder %s32, 3
      %p403 = por %p401, %p402
      %p405 = scmp.ne.s32.totalorder %s390, %s404
      %p406 = scmp.eq.s32.totalorder %s32, 0
      %p407 = por %p405, %p406
      %s408 = ssub.s32 %s33, %s45
      %s409 = ssub.s32 %s34, %s41
      %s410 = sor.u32 %s408, %s409
      %p411 = scmp.eq.s32.totalorder %s410, 0
      %s413 = sadd.s32 %s412, 1
      %s414 = scalar_select %p411, %s412, %s413
      %p417 = pneg %p411
      %p418 = scmp.eq.s32.totalorder %s26, 3
      %p419 = por %p417, %p418
      %p420 = scmp.ne.s32.totalorder %s412, %s415
      %p421 = scmp.eq.s32.totalorder %s26, 0
      %p422 = por %p420, %p421
      %p423 = scmp.ne.s32.totalorder %s412, %s415
      %p424 = scmp.eq.s32.totalorder %s31, 3
      %p425 = por %p423, %p424
      %p426 = scmp.ne.s32.totalorder %s415, %s416
      %p427 = scmp.eq.s32.totalorder %s31, 0
      %p428 = por %p426, %p427
      %p429 = scmp.ne.s32.totalorder %s415, %s416
      %p430 = scmp.eq.s32.totalorder %s32, 3
      %p431 = por %p429, %p430
      %p433 = scmp.ne.s32.totalorder %s416, %s432
      %p434 = scmp.eq.s32.totalorder %s32, 0
      %p435 = por %p433, %p434
      %s436 = ssub.s32 %s33, %s45
      %p437 = scmp.eq.s32.totalorder %s436, 0
      %s439 = sadd.s32 %s438, 1
      %s440 = scalar_select %p437, %s438, %s439
      %p443 = pneg %p437
      %p444 = scmp.eq.s32.totalorder %s26, 3
      %p445 = por %p443, %p444
      %p446 = scmp.ne.s32.totalorder %s438, %s441
      %p447 = scmp.eq.s32.totalorder %s26, 0
      %p448 = por %p446, %p447
      %p449 = scmp.ne.s32.totalorder %s438, %s441
      %p450 = scmp.eq.s32.totalorder %s31, 3
      %p451 = por %p449, %p450
      %p452 = scmp.ne.s32.totalorder %s441, %s442
      %p453 = scmp.eq.s32.totalorder %s31, 0
      %p454 = por %p452, %p453
      %p455 = scmp.ne.s32.totalorder %s441, %s442
      %p456 = scmp.eq.s32.totalorder %s32, 3
      %p457 = por %p455, %p456
      %p459 = scmp.ne.s32.totalorder %s442, %s458
      %p460 = scmp.eq.s32.totalorder %s32, 0
      %p461 = por %p459, %p460
      %p462 = scmp.le.s32.totalorder 1, %s26
      %p463 = scmp.lt.s32.totalorder %s26, 5
      %p464 = pnand %p462, %p463
      %p465 = pneg %p464
      // Predicated region
      $region9: #{rwkv7_attention_forward.1} parent=5 // pred_check
        _
      $region10: #{rwkv7_attention_forward.1} parent=5 // pred_check_branch
        %467 = sbr.rel (%p464) target = $region12
      $region11: #{rwkv7_attention_forward.1} parent=5 // pred_region
        %s468 = ssub.s32 %s26, 1
        // Predicated region
        $region13: #{rwkv7_attention_forward.1} parent=11 // pred_check
          %p469 = pneg %p253
        $region14: #{rwkv7_attention_forward.1} parent=11 // pred_check_branch
          %471 = sbr.rel (%p469) target = $region16
        $region15: #{rwkv7_attention_forward.1} parent=11 // pred_region
          _
        $region16: #{rwkv7_attention_forward.1} parent=11 // pred_fallthru
          _
        // Predicated region
        $region17: #{rwkv7_attention_forward.1} parent=11 // pred_check
          %p472 = pneg %p274
        $region18: #{rwkv7_attention_forward.1} parent=11 // pred_check_branch
          %474 = sbr.rel (%p472) target = $region20
        $region19: #{rwkv7_attention_forward.1} parent=11 // pred_region
          _
        $region20: #{rwkv7_attention_forward.1} parent=11 // pred_fallthru
          _
        // Predicated region
        $region21: #{rwkv7_attention_forward.1} parent=11 // pred_check
          %p475 = pneg %p295
        $region22: #{rwkv7_attention_forward.1} parent=11 // pred_check_branch
          %477 = sbr.rel (%p475) target = $region24
        $region23: #{rwkv7_attention_forward.1} parent=11 // pred_region
          _
        $region24: #{rwkv7_attention_forward.1} parent=11 // pred_fallthru
          _
        // Predicated region
        $region25: #{rwkv7_attention_forward.1} parent=11 // pred_check
          %p478 = pneg %p316
        $region26: #{rwkv7_attention_forward.1} parent=11 // pred_check_branch
          %480 = sbr.rel (%p478) target = $region28
        $region27: #{rwkv7_attention_forward.1} parent=11 // pred_region
          _
        $region28: #{rwkv7_attention_forward.1} parent=11 // pred_fallthru
          _
        // Predicated region
        $region29: #{rwkv7_attention_forward.1} parent=11 // pred_check
          %p481 = pneg %p337
        $region30: #{rwkv7_attention_forward.1} parent=11 // pred_check_branch
          %483 = sbr.rel (%p481) target = $region32
        $region31: #{rwkv7_attention_forward.1} parent=11 // pred_region
          _
        $region32: #{rwkv7_attention_forward.1} parent=11 // pred_fallthru
          _
        // Predicated region
        $region33: #{rwkv7_attention_forward.1} parent=11 // pred_check
          %p484 = pneg %p358
        $region34: #{rwkv7_attention_forward.1} parent=11 // pred_check_branch
          %486 = sbr.rel (%p484) target = $region36
        $region35: #{rwkv7_attention_forward.1} parent=11 // pred_region
          _
        $region36: #{rwkv7_attention_forward.1} parent=11 // pred_fallthru
          _
        // Predicated region
        $region37: #{rwkv7_attention_forward.1} parent=11 // pred_check
          %p487 = pneg %p379
        $region38: #{rwkv7_attention_forward.1} parent=11 // pred_check_branch
          %489 = sbr.rel (%p487) target = $region40
        $region39: #{rwkv7_attention_forward.1} parent=11 // pred_region
          _
        $region40: #{rwkv7_attention_forward.1} parent=11 // pred_fallthru
          _
        // Predicated region
        $region41: #{rwkv7_attention_forward.1} parent=11 // pred_check
          %p490 = pneg %p400
        $region42: #{rwkv7_attention_forward.1} parent=11 // pred_check_branch
          %492 = sbr.rel (%p490) target = $region44
        $region43: #{rwkv7_attention_forward.1} parent=11 // pred_region
          _
        $region44: #{rwkv7_attention_forward.1} parent=11 // pred_fallthru
          _
      $region12: #{rwkv7_attention_forward.1} parent=5 // pred_fallthru
        _
      %p493 = scmp.lt.s32.totalorder %s26, 4
      // Predicated region
      $region45: #{rwkv7_attention_forward.1} parent=5 // pred_check
        %p494 = pneg %p493
      $region46: #{rwkv7_attention_forward.1} parent=5 // pred_check_branch
        %496 = sbr.rel (%p494) target = $region48
      $region47: #{rwkv7_attention_forward.1} parent=5 // pred_region
        // Predicated region
        $region49: #{rwkv7_attention_forward.1} parent=47 // pred_check
          %p497 = pneg %p60
        $region50: #{rwkv7_attention_forward.1} parent=47 // pred_check_branch
          %499 = sbr.rel (%p497) target = $region52
        $region51: #{rwkv7_attention_forward.1} parent=47 // pred_region
          %p500 = scmp.lt.s32.totalorder %s33, 1
          %s501 = scalar_select %p500, %s33, 1
          %p502 = scmp.lt.s32.totalorder %s34, 1
          %s503 = scalar_select %p502, %s34, 1
          %s504 = smul.addr %s501, 2
          %s505 = sadd.s32 %s503, %s504
          %s506 = smul.addr %s505, 8
          %s507 = scalar_lea.vmem %s0, %s506
        $region52: #{rwkv7_attention_forward.1} parent=47 // pred_fallthru
          _
        // Predicated region
        $region53: #{rwkv7_attention_forward.1} parent=47 // pred_check
          %p508 = pneg %p88
        $region54: #{rwkv7_attention_forward.1} parent=47 // pred_check_branch
          %510 = sbr.rel (%p508) target = $region56
        $region55: #{rwkv7_attention_forward.1} parent=47 // pred_region
          %p511 = scmp.lt.s32.totalorder %s33, 1
          %s512 = scalar_select %p511, %s33, 1
          %p513 = scmp.lt.s32.totalorder %s34, 1
          %s514 = scalar_select %p513, %s34, 1
          %s515 = smul.addr %s512, 2
          %s516 = sadd.s32 %s514, %s515
          %s517 = smul.addr %s516, 8
          %s518 = scalar_lea.vmem %s1, %s517
        $region56: #{rwkv7_attention_forward.1} parent=47 // pred_fallthru
          _
        // Predicated region
        $region57: #{rwkv7_attention_forward.1} parent=47 // pred_check
          %p519 = pneg %p116
        $region58: #{rwkv7_attention_forward.1} parent=47 // pred_check_branch
          %521 = sbr.rel (%p519) target = $region60
        $region59: #{rwkv7_attention_forward.1} parent=47 // pred_region
          %p522 = scmp.lt.s32.totalorder %s33, 1
          %s523 = scalar_select %p522, %s33, 1
          %p524 = scmp.lt.s32.totalorder %s34, 1
          %s525 = scalar_select %p524, %s34, 1
          %s526 = smul.addr %s523, 2
          %s527 = sadd.s32 %s525, %s526
          %s528 = smul.addr %s527, 8
          %s529 = scalar_lea.vmem %s2, %s528
        $region60: #{rwkv7_attention_forward.1} parent=47 // pred_fallthru
          _
        // Predicated region
        $region61: #{rwkv7_attention_forward.1} parent=47 // pred_check
          %p530 = pneg %p144
        $region62: #{rwkv7_attention_forward.1} parent=47 // pred_check_branch
          %532 = sbr.rel (%p530) target = $region64
        $region63: #{rwkv7_attention_forward.1} parent=47 // pred_region
          %p533 = scmp.lt.s32.totalorder %s33, 1
          %s534 = scalar_select %p533, %s33, 1
          %p535 = scmp.lt.s32.totalorder %s34, 1
          %s536 = scalar_select %p535, %s34, 1
          %s537 = smul.addr %s534, 2
          %s538 = sadd.s32 %s536, %s537
          %s539 = smul.addr %s538, 8
          %s540 = scalar_lea.vmem %s3, %s539
        $region64: #{rwkv7_attention_forward.1} parent=47 // pred_fallthru
          _
        // Predicated region
        $region65: #{rwkv7_attention_forward.1} parent=47 // pred_check
          %p541 = pneg %p172
        $region66: #{rwkv7_attention_forward.1} parent=47 // pred_check_branch
          %543 = sbr.rel (%p541) target = $region68
        $region67: #{rwkv7_attention_forward.1} parent=47 // pred_region
          %p544 = scmp.lt.s32.totalorder %s33, 1
          %s545 = scalar_select %p544, %s33, 1
          %p546 = scmp.lt.s32.totalorder %s34, 1
          %s547 = scalar_select %p546, %s34, 1
          %s548 = smul.addr %s545, 2
          %s549 = sadd.s32 %s547, %s548
          %s550 = smul.addr %s549, 8
          %s551 = scalar_lea.vmem %s4, %s550
        $region68: #{rwkv7_attention_forward.1} parent=47 // pred_fallthru
          _
        // Predicated region
        $region69: #{rwkv7_attention_forward.1} parent=47 // pred_check
          %p552 = pneg %p200
        $region70: #{rwkv7_attention_forward.1} parent=47 // pred_check_branch
          %554 = sbr.rel (%p552) target = $region72
        $region71: #{rwkv7_attention_forward.1} parent=47 // pred_region
          %p555 = scmp.lt.s32.totalorder %s33, 1
          %s556 = scalar_select %p555, %s33, 1
          %p557 = scmp.lt.s32.totalorder %s34, 1
          %s558 = scalar_select %p557, %s34, 1
          %s559 = smul.addr %s556, 2
          %s560 = sadd.s32 %s558, %s559
          %s561 = smul.addr %s560, 8
          %s562 = scalar_lea.vmem %s5, %s561
        $region72: #{rwkv7_attention_forward.1} parent=47 // pred_fallthru
          _
        // Predicated region
        $region73: #{rwkv7_attention_forward.1} parent=47 // pred_check
          %p563 = pneg %p226
        $region74: #{rwkv7_attention_forward.1} parent=47 // pred_check_branch
          %565 = sbr.rel (%p563) target = $region76
        $region75: #{rwkv7_attention_forward.1} parent=47 // pred_region
          %p566 = scmp.lt.s32.totalorder %s33, 1
          %s567 = scalar_select %p566, %s33, 1
          %s568 = smul.addr %s567, 2
          %s569 = smul.addr %s568, 8
          %s570 = scalar_lea.vmem %s6, %s569
        $region76: #{rwkv7_attention_forward.1} parent=47 // pred_fallthru
          _
      $region48: #{rwkv7_attention_forward.1} parent=5 // pred_fallthru
        _
      %p571 = scmp.le.s32.totalorder 1, %s26
      %p572 = scmp.lt.s32.totalorder %s26, 5
      %p573 = pnand %p571, %p572
      %p574 = pneg %p573
      // Predicated region
      $region77: #{rwkv7_attention_forward.1} parent=5 // pred_check
        _
      $region78: #{rwkv7_attention_forward.1} parent=5 // pred_check_branch
        %576 = sbr.rel (%p573) target = $region80
      $region79: #{rwkv7_attention_forward.1} parent=5 // pred_region
        %s577 = ssub.s32 %s26, 1
        %p578 = scmp.lt.s32.totalorder %s35, 1
        %s579 = scalar_select %p578, %s35, 1
        %p580 = scmp.lt.s32.totalorder %s36, 1
        %s581 = scalar_select %p580, %s36, 1
        %s582 = smul.addr %s579, 2
        %s583 = sadd.s32 %s581, %s582
        %s584 = smul.addr %s583, 8
        %s585 = scalar_lea.vmem %s0, %s584
        %p586 = pneg %p66
        %p587 = pneg %p63
        %p588 = scmp.lt.s32.totalorder %s35, 1
        %s589 = scalar_select %p588, %s35, 1
        %p590 = scmp.lt.s32.totalorder %s36, 1
        %s591 = scalar_select %p590, %s36, 1
        %s592 = smul.addr %s589, 2
        %s593 = sadd.s32 %s591, %s592
        %s594 = smul.addr %s593, 8
        %s595 = scalar_lea.vmem %s1, %s594
        %p596 = pneg %p94
        %p597 = pneg %p91
        %p598 = scmp.lt.s32.totalorder %s35, 1
        %s599 = scalar_select %p598, %s35, 1
        %p600 = scmp.lt.s32.totalorder %s36, 1
        %s601 = scalar_select %p600, %s36, 1
        %s602 = smul.addr %s599, 2
        %s603 = sadd.s32 %s601, %s602
        %s604 = smul.addr %s603, 8
        %s605 = scalar_lea.vmem %s2, %s604
        %p606 = pneg %p122
        %p607 = pneg %p119
        %p608 = scmp.lt.s32.totalorder %s35, 1
        %s609 = scalar_select %p608, %s35, 1
        %p610 = scmp.lt.s32.totalorder %s36, 1
        %s611 = scalar_select %p610, %s36, 1
        %s612 = smul.addr %s609, 2
        %s613 = sadd.s32 %s611, %s612
        %s614 = smul.addr %s613, 8
        %s615 = scalar_lea.vmem %s3, %s614
        %p616 = pneg %p150
        %p617 = pneg %p147
        %p618 = scmp.lt.s32.totalorder %s35, 1
        %s619 = scalar_select %p618, %s35, 1
        %p620 = scmp.lt.s32.totalorder %s36, 1
        %s621 = scalar_select %p620, %s36, 1
        %s622 = smul.addr %s619, 2
        %s623 = sadd.s32 %s621, %s622
        %s624 = smul.addr %s623, 8
        %s625 = scalar_lea.vmem %s4, %s624
        %p626 = pneg %p178
        %p627 = pneg %p175
        %p628 = scmp.lt.s32.totalorder %s35, 1
        %s629 = scalar_select %p628, %s35, 1
        %p630 = scmp.lt.s32.totalorder %s36, 1
        %s631 = scalar_select %p630, %s36, 1
        %s632 = smul.addr %s629, 2
        %s633 = sadd.s32 %s631, %s632
        %s634 = smul.addr %s633, 8
        %s635 = scalar_lea.vmem %s5, %s634
        %p636 = pneg %p206
        %p637 = pneg %p203
        %p638 = scmp.lt.s32.totalorder %s35, 1
        %s639 = scalar_select %p638, %s35, 1
        %s640 = smul.addr %s639, 2
        %s641 = smul.addr %s640, 8
        %s642 = scalar_lea.vmem %s6, %s641
        %p643 = pneg %p232
        %p644 = pneg %p229
        %p645 = pneg %p253
        %p646 = pneg %p250
        %p647 = pneg %p274
        %p648 = pneg %p271
        %p649 = pneg %p295
        %p650 = pneg %p292
        %p651 = pneg %p316
        %p652 = pneg %p313
        %p653 = pneg %p337
        %p654 = pneg %p334
        %p655 = pneg %p358
        %p656 = pneg %p355
        %p657 = pneg %p379
        %p658 = pneg %p376
        %p659 = pneg %p400
        %p660 = pneg %p397
        %p661 = pneg %p428
        %p662 = pneg %p425
        %s663 = sand.u32 %s415, 1
        %s664 = scalar_lea.sflag [#allocation5], %s663
        %s665 = sand.u32 %s415, 1
        %s666 = smul.addr %s665, 8
        %s667 = scalar_lea.vmem [#allocation4], %s666
        %p668 = pneg %p454
        %p669 = pneg %p451
        %p670 = scmp.lt.s32.totalorder %s35, 1
        %s671 = scalar_select %p670, %s35, 1
        %s672 = smul.addr %s671, 2
        %s673 = smul.addr %s672, 8
        %s674 = scalar_lea.vmem %s16, %s673
        %p675 = scmp.lt.s32.totalorder %s35, 1
        %s676 = scalar_select %p675, %s35, 1
        %p677 = scmp.lt.s32.totalorder %s36, 1
        %s678 = scalar_select %p677, %s36, 1
        %s679 = smul.addr %s676, 2
        %s680 = sadd.s32 %s678, %s679
        %s681 = smul.addr %s680, 8
        %s682 = scalar_lea.vmem %s0, %s681
        %p683 = scmp.lt.s32.totalorder %s35, 1
        %s684 = scalar_select %p683, %s35, 1
        %p685 = scmp.lt.s32.totalorder %s36, 1
        %s686 = scalar_select %p685, %s36, 1
        %s687 = smul.addr %s684, 2
        %s688 = sadd.s32 %s686, %s687
        %s689 = smul.addr %s688, 8
        %s690 = scalar_lea.vmem %s1, %s689
        %p691 = scmp.lt.s32.totalorder %s35, 1
        %s692 = scalar_select %p691, %s35, 1
        %p693 = scmp.lt.s32.totalorder %s36, 1
        %s694 = scalar_select %p693, %s36, 1
        %s695 = smul.addr %s692, 2
        %s696 = sadd.s32 %s694, %s695
        %s697 = smul.addr %s696, 8
        %s698 = scalar_lea.vmem %s2, %s697
        %p699 = scmp.lt.s32.totalorder %s35, 1
        %s700 = scalar_select %p699, %s35, 1
        %p701 = scmp.lt.s32.totalorder %s36, 1
        %s702 = scalar_select %p701, %s36, 1
        %s703 = smul.addr %s700, 2
        %s704 = sadd.s32 %s702, %s703
        %s705 = smul.addr %s704, 8
        %s706 = scalar_lea.vmem %s3, %s705
        %p707 = scmp.lt.s32.totalorder %s35, 1
        %s708 = scalar_select %p707, %s35, 1
        %p709 = scmp.lt.s32.totalorder %s36, 1
        %s710 = scalar_select %p709, %s36, 1
        %s711 = smul.addr %s708, 2
        %s712 = sadd.s32 %s710, %s711
        %s713 = smul.addr %s712, 8
        %s714 = scalar_lea.vmem %s4, %s713
        %p715 = scmp.lt.s32.totalorder %s35, 1
        %s716 = scalar_select %p715, %s35, 1
        %p717 = scmp.lt.s32.totalorder %s36, 1
        %s718 = scalar_select %p717, %s36, 1
        %s719 = smul.addr %s716, 2
        %s720 = sadd.s32 %s718, %s719
        %s721 = smul.addr %s720, 8
        %s722 = scalar_lea.vmem %s5, %s721
        %p723 = scmp.lt.s32.totalorder %s35, 1
        %s724 = scalar_select %p723, %s35, 1
        %s725 = smul.addr %s724, 2
        %s726 = smul.addr %s725, 8
        %s727 = scalar_lea.vmem %s6, %s726
        %p728 = scmp.lt.s32.totalorder %s35, 1
        %s729 = scalar_select %p728, %s35, 1
        %s730 = smul.addr %s729, 2
        %s731 = smul.addr %s730, 8
        %s732 = scalar_lea.vmem %s16, %s731
        %v734 = vld [vmem:[%s13] sm:$0xff]
        %v735 = vld [vmem:[%s13 + $0x8] sm:$0xff]
        %v736 = vld [vmem:[%s13 + $0x10] sm:$0xff]
        %v737 = vld [vmem:[%s13 + $0x18] sm:$0xff]
        %v738 = vld [vmem:[%s13 + $0x20] sm:$0xff]
        %v739 = vld [vmem:[%s13 + $0x28] sm:$0xff]
        %v740 = vld [vmem:[%s13 + $0x30] sm:$0xff]
        %v741 = vld [vmem:[%s13 + $0x38] sm:$0xff]
        %v742 = vld [vmem:[%s13 + $0x40] sm:$0xff]
        %v743 = vld [vmem:[%s13 + $0x48] sm:$0xff]
        %v744 = vld [vmem:[%s13 + $0x50] sm:$0xff]
        %v745 = vld [vmem:[%s13 + $0x58] sm:$0xff]
        %v746 = vld [vmem:[%s13 + $0x60] sm:$0xff]
        %v747 = vld [vmem:[%s13 + $0x68] sm:$0xff]
        %v748 = vld [vmem:[%s13 + $0x70] sm:$0xff]
        %v749 = vld [vmem:[%s13 + $0x78] sm:$0xff]
        %v750 = vld [vmem:[%s12] sm:$0xff]
        %v751 = vld [vmem:[%s12 + $0x8] sm:$0xff]
        %v752 = vld [vmem:[%s7] sm:$0x1]
        %v753 = vld [vmem:[%s8] sm:$0x1]
        %p754 = scmp.eq.s32.totalorder %s36, 0
        // Predicated region
        $region81: #{rwkv7_attention_forward.1} parent=79 // pred_check
          %p755 = pneg %p754
        $region82: #{rwkv7_attention_forward.1} parent=79 // pred_check_branch
          %757 = sbr.rel (%p755) target = $region84
        $region83: #{rwkv7_attention_forward.1} parent=79 // pred_region
          %v758 = vld [vmem:[%s727] sm:$0xff]
          %v759 = vld [vmem:[%s727 + $0x8] sm:$0xff]
          %760 = vst [vmem:[#allocation3] sm:$0xff] %v758
          %761 = vst [vmem:[#allocation3 + $0x8] sm:$0xff] %v759
        $region84: #{rwkv7_attention_forward.1} parent=79 // pred_fallthru
          _
        %v762 = vld [vmem:[%s682] sm:$0xff]
        %v763 = vld [vmem:[%s690] sm:$0xff]
        %v764 = vld [vmem:[%s698] sm:$0xff]
        %v765 = vld [vmem:[%s714] sm:$0xff]
        %v767 = vlaneseq
        %v768 = vshrl.u32 %v767, 7
        %v769 = vsub.s32 0, %v768
        %v770 = vrot.slane %v752, %v769
        %v772 = vmul.f32 %v764, %v770
        %v773 = vmul.f32 %v772, %v772
        %774 = vmatprep.subr.mxu0 0.0
        %775 = vmatpush1.msra.mxu0 %v749
        %776 = vmatprep.subr.mxu0 0.0
        %777 = vmatpush1.msra.mxu0 %v748
        %778 = vmatprep.subr.mxu0 0.0
        %779 = vmatpush1.msra.mxu0 %v747
        %780 = vmatprep.subr.mxu0 0.0
        %781 = vmatpush1.msra.mxu0 %v746
        %782 = vmatprep.subr.mxu0 0.0
        %783 = vmatpush1.msra.mxu0 %v745
        %784 = vmatprep.subr.mxu0 0.0
        %785 = vmatpush1.msra.mxu0 %v744
        %786 = vmatprep.subr.mxu0 0.0
        %787 = vmatpush1.msra.mxu0 %v743
        %788 = vmatprep.subr.mxu0 0.0
        %789 = vmatpush1.msra.mxu0 %v742
        %790 = vmatprep.subr.mxu0 0.0
        %791 = vmatpush1.msra.mxu0 %v741
        %792 = vmatprep.subr.mxu0 0.0
        %793 = vmatpush1.msra.mxu0 %v740
        %794 = vmatprep.subr.mxu0 0.0
        %795 = vmatpush1.msra.mxu0 %v739
        %796 = vmatprep.subr.mxu0 0.0
        %797 = vmatpush1.msra.mxu0 %v738
        %798 = vmatprep.subr.mxu0 0.0
        %799 = vmatpush1.msra.mxu0 %v737
        %800 = vmatprep.subr.mxu0 0.0
        %801 = vmatpush1.msra.mxu0 %v736
        %802 = vmatprep.subr.mxu0 0.0
        %803 = vmatpush1.msra.mxu0 %v735
        %804 = vmatprep.subr.mxu0 0.0
        %805 = vmatpush1.msra.mxu0 %v734
        %806 = vmatprep.subr.mxu0 0.0
        %807 = vmatpush2.msra.mxu0 0.0
        %808 = vmatprep.subr.mxu0 0.0
        %809 = vmatpush2.msra.mxu0 0.0
        %810 = vmatprep.subr.mxu0 0.0
        %811 = vmatpush2.msra.mxu0 0.0
        %812 = vmatprep.subr.mxu0 0.0
        %813 = vmatpush2.msra.mxu0 0.0
        %814 = vmatprep.subr.mxu0 0.0
        %815 = vmatpush2.msra.mxu0 0.0
        %816 = vmatprep.subr.mxu0 0.0
        %817 = vmatpush2.msra.mxu0 0.0
        %818 = vmatprep.subr.mxu0 0.0
        %819 = vmatpush2.msra.mxu0 0.0
        %820 = vmatprep.subr.mxu0 0.0
        %821 = vmatpush2.msra.mxu0 0.0
        %822 = vmatprep.subr.mxu0 0.0
        %823 = vmatpush2.msra.mxu0 0.0
        %824 = vmatprep.subr.mxu0 0.0
        %825 = vmatpush2.msra.mxu0 0.0
        %826 = vmatprep.subr.mxu0 0.0
        %827 = vmatpush2.msra.mxu0 0.0
        %828 = vmatprep.subr.mxu0 0.0
        %829 = vmatpush2.msra.mxu0 0.0
        %830 = vmatprep.subr.mxu0 0.0
        %831 = vmatpush2.msra.mxu0 0.0
        %832 = vmatprep.subr.mxu0 0.0
        %833 = vmatpush2.msra.mxu0 0.0
        %834 = vmatprep.subr.mxu0 0.0
        %835 = vmatpush2.msra.mxu0 0.0
        %836 = vmatprep.subr.mxu0 0.0
        %837 = vmatpush2.msra.mxu0 0.0
        %838 = vmatprep.mubr.f32.mxu0 0.0
        %839 = vmatmul.mubr.f32.gmra.mxu0 %v773
        %v840 = vpop.f32.mrf.mxu0
        %v841 = vadd.f32 0.0, %v840
        %v842 = vpop.f32.mrf.mxu0
        %843 = vdwg.mxu0
        %v844 = vmax.f32 %v841, 1e-24
        %v845 = vrsqrt.pop %v844
        %v846 = vmul.f32 %v772, %v845
        %v847 = vsub.f32 %v765, 1.0
        %v849 = vlaneseq
        %v850 = vshrl.u32 %v849, 7
        %v851 = vsub.s32 0, %v850
        %v852 = vrot.slane %v753, %v851
        %v854 = vmul.f32 %v847, %v852
        %v855 = vadd.f32 %v854, 1.0
        %v856 = vmul.f32 %v764, %v855
        %v857 = vmul.f32 %v763, 1.442695
        %v858 = vpow.pop %v857
        %v859 = vsub.f32 0.0, %v858
        %v860 = vmul.f32 %v859, 1.442695
        %v861 = vpow.pop %v860
        %v862 = vsub.f32 0.0, %v846
        %v863 = vmul.f32 %v846, %v765
        %v869 = vcombine.high %v861, %v861
        %v871 = vunpack.c.l.s4 1966171168
        %v872 = vunpack.c.0.s8 %v871
        %v873 = vlaneseq
        %v874 = vshrl.u32 %v873, 7
        %v875 = vsub.s32 %v872, %v874
        %v876 = vrot.slane %v861, %v875
        %v878 = vunpack.c.l.s4 1966171168
        %v879 = vunpack.c.0.s8 %v878
        %v880 = vlaneseq
        %v881 = vshrl.u32 %v880, 7
        %v882 = vsub.s32 %v879, %v881
        %v883 = vrot.slane %v869, %v882
        %v884 = vcombine.high %v876, %v876
        %v885 = vcombine.high %v883, %v883
        %v887 = vunpack.c.l.s4 1966171168
        %v888 = vunpack.c.0.s8 %v887
        %v889 = vlaneseq
        %v890 = vshrl.u32 %v889, 7
        %v891 = vsub.s32 %v888, %v890
        %v892 = vrot.slane %v876, %v891
        %v894 = vunpack.c.l.s4 1966171168
        %v895 = vunpack.c.0.s8 %v894
        %v896 = vlaneseq
        %v897 = vshrl.u32 %v896, 7
        %v898 = vsub.s32 %v895, %v897
        %v899 = vrot.slane %v883, %v898
        %v901 = vunpack.c.l.s4 1966171168
        %v902 = vunpack.c.0.s8 %v901
        %v903 = vlaneseq
        %v904 = vshrl.u32 %v903, 7
        %v905 = vsub.s32 %v902, %v904
        %v906 = vrot.slane %v884, %v905
        %v908 = vunpack.c.l.s4 1966171168
        %v909 = vunpack.c.0.s8 %v908
        %v910 = vlaneseq
        %v911 = vshrl.u32 %v910, 7
        %v912 = vsub.s32 %v909, %v911
        %v913 = vrot.slane %v885, %v912
        %v914 = vcombine.high %v892, %v892
        %v915 = vcombine.high %v899, %v899
        %v916 = vcombine.high %v906, %v906
        %v917 = vcombine.high %v913, %v913
        %v918 = vcombine.high %v862, %v862
        %v920 = vunpack.c.l.s4 1966171168
        %v921 = vunpack.c.0.s8 %v920
        %v922 = vlaneseq
        %v923 = vshrl.u32 %v922, 7
        %v924 = vsub.s32 %v921, %v923
        %v925 = vrot.slane %v862, %v924
        %v927 = vunpack.c.l.s4 1966171168
        %v928 = vunpack.c.0.s8 %v927
        %v929 = vlaneseq
        %v930 = vshrl.u32 %v929, 7
        %v931 = vsub.s32 %v928, %v930
        %v932 = vrot.slane %v918, %v931
        %v933 = vcombine.high %v925, %v925
        %v934 = vcombine.high %v932, %v932
        %v936 = vunpack.c.l.s4 1966171168
        %v937 = vunpack.c.0.s8 %v936
        %v938 = vlaneseq
        %v939 = vshrl.u32 %v938, 7
        %v940 = vsub.s32 %v937, %v939
        %v941 = vrot.slane %v925, %v940
        %v943 = vunpack.c.l.s4 1966171168
        %v944 = vunpack.c.0.s8 %v943
        %v945 = vlaneseq
        %v946 = vshrl.u32 %v945, 7
        %v947 = vsub.s32 %v944, %v946
        %v948 = vrot.slane %v932, %v947
        %v950 = vunpack.c.l.s4 1966171168
        %v951 = vunpack.c.0.s8 %v950
        %v952 = vlaneseq
        %v953 = vshrl.u32 %v952, 7
        %v954 = vsub.s32 %v951, %v953
        %v955 = vrot.slane %v933, %v954
        %v957 = vunpack.c.l.s4 1966171168
        %v958 = vunpack.c.0.s8 %v957
        %v959 = vlaneseq
        %v960 = vshrl.u32 %v959, 7
        %v961 = vsub.s32 %v958, %v960
        %v962 = vrot.slane %v934, %v961
        %v963 = vcombine.high %v941, %v941
        %v964 = vcombine.high %v948, %v948
        %v965 = vcombine.high %v955, %v955
        %v966 = vcombine.high %v962, %v962
        %v967 = vcombine.high %v863, %v863
        %v969 = vunpack.c.l.s4 1966171168
        %v970 = vunpack.c.0.s8 %v969
        %v971 = vlaneseq
        %v972 = vshrl.u32 %v971, 7
        %v973 = vsub.s32 %v970, %v972
        %v974 = vrot.slane %v863, %v973
        %v976 = vunpack.c.l.s4 1966171168
        %v977 = vunpack.c.0.s8 %v976
        %v978 = vlaneseq
        %v979 = vshrl.u32 %v978, 7
        %v980 = vsub.s32 %v977, %v979
        %v981 = vrot.slane %v967, %v980
        %v982 = vcombine.high %v974, %v974
        %v983 = vcombine.high %v981, %v981
        %v985 = vunpack.c.l.s4 1966171168
        %v986 = vunpack.c.0.s8 %v985
        %v987 = vlaneseq
        %v988 = vshrl.u32 %v987, 7
        %v989 = vsub.s32 %v986, %v988
        %v990 = vrot.slane %v974, %v989
        %v992 = vunpack.c.l.s4 1966171168
        %v993 = vunpack.c.0.s8 %v992
        %v994 = vlaneseq
        %v995 = vshrl.u32 %v994, 7
        %v996 = vsub.s32 %v993, %v995
        %v997 = vrot.slane %v981, %v996
        %v999 = vunpack.c.l.s4 1966171168
        %v1000 = vunpack.c.0.s8 %v999
        %v1001 = vlaneseq
        %v1002 = vshrl.u32 %v1001, 7
        %v1003 = vsub.s32 %v1000, %v1002
        %v1004 = vrot.slane %v982, %v1003
        %v1006 = vunpack.c.l.s4 1966171168
        %v1007 = vunpack.c.0.s8 %v1006
        %v1008 = vlaneseq
        %v1009 = vshrl.u32 %v1008, 7
        %v1010 = vsub.s32 %v1007, %v1009
        %v1011 = vrot.slane %v983, %v1010
        %v1012 = vcombine.high %v990, %v990
        %v1013 = vcombine.high %v997, %v997
        %v1014 = vcombine.high %v1004, %v1004
        %v1015 = vcombine.high %v1011, %v1011
        %v1016 = vcombine.high %v856, %v856
        %v1018 = vunpack.c.l.s4 1966171168
        %v1019 = vunpack.c.0.s8 %v1018
        %v1020 = vlaneseq
        %v1021 = vshrl.u32 %v1020, 7
        %v1022 = vsub.s32 %v1019, %v1021
        %v1023 = vrot.slane %v856, %v1022
        %v1025 = vunpack.c.l.s4 1966171168
        %v1026 = vunpack.c.0.s8 %v1025
        %v1027 = vlaneseq
        %v1028 = vshrl.u32 %v1027, 7
        %v1029 = vsub.s32 %v1026, %v1028
        %v1030 = vrot.slane %v1016, %v1029
        %v1031 = vcombine.high %v1023, %v1023
        %v1032 = vcombine.high %v1030, %v1030
        %v1034 = vunpack.c.l.s4 1966171168
        %v1035 = vunpack.c.0.s8 %v1034
        %v1036 = vlaneseq
        %v1037 = vshrl.u32 %v1036, 7
        %v1038 = vsub.s32 %v1035, %v1037
        %v1039 = vrot.slane %v1023, %v1038
        %v1041 = vunpack.c.l.s4 1966171168
        %v1042 = vunpack.c.0.s8 %v1041
        %v1043 = vlaneseq
        %v1044 = vshrl.u32 %v1043, 7
        %v1045 = vsub.s32 %v1042, %v1044
        %v1046 = vrot.slane %v1030, %v1045
        %v1048 = vunpack.c.l.s4 1966171168
        %v1049 = vunpack.c.0.s8 %v1048
        %v1050 = vlaneseq
        %v1051 = vshrl.u32 %v1050, 7
        %v1052 = vsub.s32 %v1049, %v1051
        %v1053 = vrot.slane %v1031, %v1052
        %v1055 = vunpack.c.l.s4 1966171168
        %v1056 = vunpack.c.0.s8 %v1055
        %v1057 = vlaneseq
        %v1058 = vshrl.u32 %v1057, 7
        %v1059 = vsub.s32 %v1056, %v1058
        %v1060 = vrot.slane %v1032, %v1059
        %v1061 = vcombine.high %v1039, %v1039
        %v1062 = vcombine.high %v1046, %v1046
        %v1063 = vcombine.high %v1053, %v1053
        %v1064 = vcombine.high %v1060, %v1060
        %v1065 = vcombine.high %v762, %v762
        %v1067 = vunpack.c.l.s4 1966171168
        %v1068 = vunpack.c.0.s8 %v1067
        %v1069 = vlaneseq
        %v1070 = vshrl.u32 %v1069, 7
        %v1071 = vsub.s32 %v1068, %v1070
        %v1072 = vrot.slane %v762, %v1071
        %v1074 = vunpack.c.l.s4 1966171168
        %v1075 = vunpack.c.0.s8 %v1074
        %v1076 = vlaneseq
        %v1077 = vshrl.u32 %v1076, 7
        %v1078 = vsub.s32 %v1075, %v1077
        %v1079 = vrot.slane %v1065, %v1078
        %v1080 = vcombine.high %v1072, %v1072
        %v1081 = vcombine.high %v1079, %v1079
        %v1083 = vunpack.c.l.s4 1966171168
        %v1084 = vunpack.c.0.s8 %v1083
        %v1085 = vlaneseq
        %v1086 = vshrl.u32 %v1085, 7
        %v1087 = vsub.s32 %v1084, %v1086
        %v1088 = vrot.slane %v1072, %v1087
        %v1090 = vunpack.c.l.s4 1966171168
        %v1091 = vunpack.c.0.s8 %v1090
        %v1092 = vlaneseq
        %v1093 = vshrl.u32 %v1092, 7
        %v1094 = vsub.s32 %v1091, %v1093
        %v1095 = vrot.slane %v1079, %v1094
        %v1097 = vunpack.c.l.s4 1966171168
        %v1098 = vunpack.c.0.s8 %v1097
        %v1099 = vlaneseq
        %v1100 = vshrl.u32 %v1099, 7
        %v1101 = vsub.s32 %v1098, %v1100
        %v1102 = vrot.slane %v1080, %v1101
        %v1104 = vunpack.c.l.s4 1966171168
        %v1105 = vunpack.c.0.s8 %v1104
        %v1106 = vlaneseq
        %v1107 = vshrl.u32 %v1106, 7
        %v1108 = vsub.s32 %v1105, %v1107
        %v1109 = vrot.slane %v1081, %v1108
        %v1110 = vcombine.high %v1088, %v1088
        %v1111 = vcombine.high %v1095, %v1095
        %v1112 = vcombine.high %v1102, %v1102
        %v1113 = vcombine.high %v1109, %v1109
        %v1114 = vlaneseq
        %v1115 = vshrl.u32 %v1114, 7
        %v1116 = vsub.s32 0, %v1115
        %v1117 = vrot.slane %v892, %v1116
        %v1118 = vlaneseq
        %v1119 = vshrl.u32 %v1118, 7
        %v1120 = vsub.s32 0, %v1119
        %v1121 = vrot.slane %v906, %v1120
        %v1122 = vlaneseq
        %v1123 = vshrl.u32 %v1122, 7
        %v1124 = vsub.s32 0, %v1123
        %v1125 = vrot.slane %v914, %v1124
        %v1126 = vlaneseq
        %v1127 = vshrl.u32 %v1126, 7
        %v1128 = vsub.s32 0, %v1127
        %v1129 = vrot.slane %v916, %v1128
        %v1130 = vlaneseq
        %v1131 = vshrl.u32 %v1130, 7
        %v1132 = vsub.s32 0, %v1131
        %v1133 = vrot.slane %v899, %v1132
        %v1134 = vlaneseq
        %v1135 = vshrl.u32 %v1134, 7
        %v1136 = vsub.s32 0, %v1135
        %v1137 = vrot.slane %v913, %v1136
        %v1138 = vlaneseq
        %v1139 = vshrl.u32 %v1138, 7
        %v1140 = vsub.s32 0, %v1139
        %v1141 = vrot.slane %v915, %v1140
        %v1142 = vlaneseq
        %v1143 = vshrl.u32 %v1142, 7
        %v1144 = vsub.s32 0, %v1143
        %v1145 = vrot.slane %v917, %v1144
        %v1146 = vlaneseq
        %v1147 = vshrl.u32 %v1146, 7
        %v1148 = vsub.s32 0, %v1147
        %v1149 = vrot.slane %v941, %v1148
        %v1150 = vlaneseq
        %v1151 = vshrl.u32 %v1150, 7
        %v1152 = vsub.s32 0, %v1151
        %v1153 = vrot.slane %v955, %v1152
        %v1154 = vlaneseq
        %v1155 = vshrl.u32 %v1154, 7
        %v1156 = vsub.s32 0, %v1155
        %v1157 = vrot.slane %v963, %v1156
        %v1158 = vlaneseq
        %v1159 = vshrl.u32 %v1158, 7
        %v1160 = vsub.s32 0, %v1159
        %v1161 = vrot.slane %v965, %v1160
        %v1162 = vlaneseq
        %v1163 = vshrl.u32 %v1162, 7
        %v1164 = vsub.s32 0, %v1163
        %v1165 = vrot.slane %v948, %v1164
        %v1166 = vlaneseq
        %v1167 = vshrl.u32 %v1166, 7
        %v1168 = vsub.s32 0, %v1167
        %v1169 = vrot.slane %v962, %v1168
        %v1170 = vlaneseq
        %v1171 = vshrl.u32 %v1170, 7
        %v1172 = vsub.s32 0, %v1171
        %v1173 = vrot.slane %v964, %v1172
        %v1174 = vlaneseq
        %v1175 = vshrl.u32 %v1174, 7
        %v1176 = vsub.s32 0, %v1175
        %v1177 = vrot.slane %v966, %v1176
        %v1178 = vlaneseq
        %v1179 = vshrl.u32 %v1178, 7
        %v1180 = vsub.s32 0, %v1179
        %v1181 = vrot.slane %v990, %v1180
        %v1182 = vlaneseq
        %v1183 = vshrl.u32 %v1182, 7
        %v1184 = vsub.s32 0, %v1183
        %v1185 = vrot.slane %v1004, %v1184
        %v1186 = vlaneseq
        %v1187 = vshrl.u32 %v1186, 7
        %v1188 = vsub.s32 0, %v1187
        %v1189 = vrot.slane %v1012, %v1188
        %v1190 = vlaneseq
        %v1191 = vshrl.u32 %v1190, 7
        %v1192 = vsub.s32 0, %v1191
        %v1193 = vrot.slane %v1014, %v1192
        %v1194 = vlaneseq
        %v1195 = vshrl.u32 %v1194, 7
        %v1196 = vsub.s32 0, %v1195
        %v1197 = vrot.slane %v997, %v1196
        %v1198 = vlaneseq
        %v1199 = vshrl.u32 %v1198, 7
        %v1200 = vsub.s32 0, %v1199
        %v1201 = vrot.slane %v1011, %v1200
        %v1202 = vlaneseq
        %v1203 = vshrl.u32 %v1202, 7
        %v1204 = vsub.s32 0, %v1203
        %v1205 = vrot.slane %v1013, %v1204
        %v1206 = vlaneseq
        %v1207 = vshrl.u32 %v1206, 7
        %v1208 = vsub.s32 0, %v1207
        %v1209 = vrot.slane %v1015, %v1208
        %v1210 = vlaneseq
        %v1211 = vshrl.u32 %v1210, 7
        %v1212 = vsub.s32 0, %v1211
        %v1213 = vrot.slane %v1039, %v1212
        %v1214 = vlaneseq
        %v1215 = vshrl.u32 %v1214, 7
        %v1216 = vsub.s32 0, %v1215
        %v1217 = vrot.slane %v1053, %v1216
        %v1218 = vlaneseq
        %v1219 = vshrl.u32 %v1218, 7
        %v1220 = vsub.s32 0, %v1219
        %v1221 = vrot.slane %v1061, %v1220
        %v1222 = vlaneseq
        %v1223 = vshrl.u32 %v1222, 7
        %v1224 = vsub.s32 0, %v1223
        %v1225 = vrot.slane %v1063, %v1224
        %v1226 = vlaneseq
        %v1227 = vshrl.u32 %v1226, 7
        %v1228 = vsub.s32 0, %v1227
        %v1229 = vrot.slane %v1046, %v1228
        %v1230 = vlaneseq
        %v1231 = vshrl.u32 %v1230, 7
        %v1232 = vsub.s32 0, %v1231
        %v1233 = vrot.slane %v1060, %v1232
        %v1234 = vlaneseq
        %v1235 = vshrl.u32 %v1234, 7
        %v1236 = vsub.s32 0, %v1235
        %v1237 = vrot.slane %v1062, %v1236
        %v1238 = vlaneseq
        %v1239 = vshrl.u32 %v1238, 7
        %v1240 = vsub.s32 0, %v1239
        %v1241 = vrot.slane %v1064, %v1240
        %v1242 = vlaneseq
        %v1243 = vshrl.u32 %v1242, 7
        %v1244 = vsub.s32 0, %v1243
        %v1245 = vrot.slane %v1088, %v1244
        %v1246 = vlaneseq
        %v1247 = vshrl.u32 %v1246, 7
        %v1248 = vsub.s32 0, %v1247
        %v1249 = vrot.slane %v1102, %v1248
        %v1250 = vlaneseq
        %v1251 = vshrl.u32 %v1250, 7
        %v1252 = vsub.s32 0, %v1251
        %v1253 = vrot.slane %v1110, %v1252
        %v1254 = vlaneseq
        %v1255 = vshrl.u32 %v1254, 7
        %v1256 = vsub.s32 0, %v1255
        %v1257 = vrot.slane %v1112, %v1256
        %v1258 = vlaneseq
        %v1259 = vshrl.u32 %v1258, 7
        %v1260 = vsub.s32 0, %v1259
        %v1261 = vrot.slane %v1095, %v1260
        %v1262 = vlaneseq
        %v1263 = vshrl.u32 %v1262, 7
        %v1264 = vsub.s32 0, %v1263
        %v1265 = vrot.slane %v1109, %v1264
        %v1266 = vlaneseq
        %v1267 = vshrl.u32 %v1266, 7
        %v1268 = vsub.s32 0, %v1267
        %v1269 = vrot.slane %v1111, %v1268
        %v1270 = vlaneseq
        %v1271 = vshrl.u32 %v1270, 7
        %v1272 = vsub.s32 0, %v1271
        %v1273 = vrot.slane %v1113, %v1272
        %v1314 = vmul.f32 %v1117, %v750
        %v1315 = vmul.f32 %v1117, %v751
        %v1316 = vmul.f32 %v1121, %v750
        %v1317 = vmul.f32 %v1121, %v751
        %v1318 = vmul.f32 %v1125, %v750
        %v1319 = vmul.f32 %v1125, %v751
        %v1320 = vmul.f32 %v1129, %v750
        %v1321 = vmul.f32 %v1129, %v751
        %v1322 = vmul.f32 %v1133, %v750
        %v1323 = vmul.f32 %v1133, %v751
        %v1324 = vmul.f32 %v1137, %v750
        %v1325 = vmul.f32 %v1137, %v751
        %v1326 = vmul.f32 %v1141, %v750
        %v1327 = vmul.f32 %v1141, %v751
        %v1328 = vmul.f32 %v1145, %v750
        %v1329 = vmul.f32 %v1145, %v751
        %v1330 = vmul.f32 %v1149, %v750
        %v1331 = vmul.f32 %v1149, %v751
        %v1332 = vmul.f32 %v1153, %v750
        %v1333 = vmul.f32 %v1153, %v751
        %v1334 = vmul.f32 %v1157, %v750
        %v1335 = vmul.f32 %v1157, %v751
        %v1336 = vmul.f32 %v1161, %v750
        %v1337 = vmul.f32 %v1161, %v751
        %v1338 = vmul.f32 %v1165, %v750
        %v1339 = vmul.f32 %v1165, %v751
        %v1340 = vmul.f32 %v1169, %v750
        %v1341 = vmul.f32 %v1169, %v751
        %v1342 = vmul.f32 %v1173, %v750
        %v1343 = vmul.f32 %v1173, %v751
        %v1344 = vmul.f32 %v1177, %v750
        %v1345 = vmul.f32 %v1177, %v751
        %v1346 = vmul.f32 %v1181, %v750
        %v1347 = vmul.f32 %v1181, %v751
        %v1348 = vmul.f32 %v1185, %v750
        %v1349 = vmul.f32 %v1185, %v751
        %v1350 = vmul.f32 %v1189, %v750
        %v1351 = vmul.f32 %v1189, %v751
        %v1352 = vmul.f32 %v1193, %v750
        %v1353 = vmul.f32 %v1193, %v751
        %v1354 = vmul.f32 %v1197, %v750
        %v1355 = vmul.f32 %v1197, %v751
        %v1356 = vmul.f32 %v1201, %v750
        %v1357 = vmul.f32 %v1201, %v751
        %v1358 = vmul.f32 %v1205, %v750
        %v1359 = vmul.f32 %v1205, %v751
        %v1360 = vmul.f32 %v1209, %v750
        %v1361 = vmul.f32 %v1209, %v751
        %v1362 = vmul.f32 %v1213, %v750
        %v1363 = vmul.f32 %v1213, %v751
        %v1364 = vmul.f32 %v1217, %v750
        %v1365 = vmul.f32 %v1217, %v751
        %v1366 = vmul.f32 %v1221, %v750
        %v1367 = vmul.f32 %v1221, %v751
        %v1368 = vmul.f32 %v1225, %v750
        %v1369 = vmul.f32 %v1225, %v751
        %v1370 = vmul.f32 %v1229, %v750
        %v1371 = vmul.f32 %v1229, %v751
        %v1372 = vmul.f32 %v1233, %v750
        %v1373 = vmul.f32 %v1233, %v751
        %v1374 = vmul.f32 %v1237, %v750
        %v1375 = vmul.f32 %v1237, %v751
        %v1376 = vmul.f32 %v1241, %v750
        %v1377 = vmul.f32 %v1241, %v751
        %v1378 = vmul.f32 %v1245, %v750
        %v1379 = vmul.f32 %v1245, %v751
        %v1380 = vmul.f32 %v1249, %v750
        %v1381 = vmul.f32 %v1249, %v751
        %v1382 = vmul.f32 %v1253, %v750
        %v1383 = vmul.f32 %v1253, %v751
        %v1384 = vmul.f32 %v1257, %v750
        %v1385 = vmul.f32 %v1257, %v751
        %v1386 = vmul.f32 %v1261, %v750
        %v1387 = vmul.f32 %v1261, %v751
        %v1388 = vmul.f32 %v1265, %v750
        %v1389 = vmul.f32 %v1265, %v751
        %v1390 = vmul.f32 %v1269, %v750
        %v1391 = vmul.f32 %v1269, %v751
        %v1392 = vmul.f32 %v1273, %v750
        %v1393 = vmul.f32 %v1273, %v751
        %1394 = vmatprep.subr.mxu0 0.0
        %1395 = vmatpush1.msra.mxu0 %v749
        %1396 = vmatprep.subr.mxu0 0.0
        %1397 = vmatpush1.msra.mxu0 %v748
        %1398 = vmatprep.subr.mxu0 0.0
        %1399 = vmatpush1.msra.mxu0 %v747
        %1400 = vmatprep.subr.mxu0 0.0
        %1401 = vmatpush1.msra.mxu0 %v746
        %1402 = vmatprep.subr.mxu0 0.0
        %1403 = vmatpush1.msra.mxu0 %v745
        %1404 = vmatprep.subr.mxu0 0.0
        %1405 = vmatpush1.msra.mxu0 %v744
        %1406 = vmatprep.subr.mxu0 0.0
        %1407 = vmatpush1.msra.mxu0 %v743
        %1408 = vmatprep.subr.mxu0 0.0
        %1409 = vmatpush1.msra.mxu0 %v742
        %1410 = vmatprep.subr.mxu0 0.0
        %1411 = vmatpush1.msra.mxu0 %v741
        %1412 = vmatprep.subr.mxu0 0.0
        %1413 = vmatpush1.msra.mxu0 %v740
        %1414 = vmatprep.subr.mxu0 0.0
        %1415 = vmatpush1.msra.mxu0 %v739
        %1416 = vmatprep.subr.mxu0 0.0
        %1417 = vmatpush1.msra.mxu0 %v738
        %1418 = vmatprep.subr.mxu0 0.0
        %1419 = vmatpush1.msra.mxu0 %v737
        %1420 = vmatprep.subr.mxu0 0.0
        %1421 = vmatpush1.msra.mxu0 %v736
        %1422 = vmatprep.subr.mxu0 0.0
        %1423 = vmatpush1.msra.mxu0 %v735
        %1424 = vmatprep.subr.mxu0 0.0
        %1425 = vmatpush1.msra.mxu0 %v734
        %1426 = vmatprep.subr.mxu0 0.0
        %1427 = vmatpush2.msra.mxu0 0.0
        %1428 = vmatprep.subr.mxu0 0.0
        %1429 = vmatpush2.msra.mxu0 0.0
        %1430 = vmatprep.subr.mxu0 0.0
        %1431 = vmatpush2.msra.mxu0 0.0
        %1432 = vmatprep.subr.mxu0 0.0
        %1433 = vmatpush2.msra.mxu0 0.0
        %1434 = vmatprep.subr.mxu0 0.0
        %1435 = vmatpush2.msra.mxu0 0.0
        %1436 = vmatprep.subr.mxu0 0.0
        %1437 = vmatpush2.msra.mxu0 0.0
        %1438 = vmatprep.subr.mxu0 0.0
        %1439 = vmatpush2.msra.mxu0 0.0
        %1440 = vmatprep.subr.mxu0 0.0
        %1441 = vmatpush2.msra.mxu0 0.0
        %1442 = vmatprep.subr.mxu0 0.0
        %1443 = vmatpush2.msra.mxu0 0.0
        %1444 = vmatprep.subr.mxu0 0.0
        %1445 = vmatpush2.msra.mxu0 0.0
        %1446 = vmatprep.subr.mxu0 0.0
        %1447 = vmatpush2.msra.mxu0 0.0
        %1448 = vmatprep.subr.mxu0 0.0
        %1449 = vmatpush2.msra.mxu0 0.0
        %1450 = vmatprep.subr.mxu0 0.0
        %1451 = vmatpush2.msra.mxu0 0.0
        %1452 = vmatprep.subr.mxu0 0.0
        %1453 = vmatpush2.msra.mxu0 0.0
        %1454 = vmatprep.subr.mxu0 0.0
        %1455 = vmatpush2.msra.mxu0 0.0
        %1456 = vmatprep.subr.mxu0 0.0
        %1457 = vmatpush2.msra.mxu0 0.0
        %1458 = vmatprep.mubr.f32.mxu0 0.0
        %1459 = vmatmul.mubr.f32.gmra.mxu0 %v1314
        %v1460 = vpop.f32.mrf.mxu0
        %v1461 = vadd.f32 0.0, %v1460
        %v1462 = vpop.f32.mrf.mxu0
        %1463 = vmatprep.mubr.f32.mxu0 0.0
        %1464 = vmatmul.mubr.f32.gmra.mxu0 %v1315
        %v1465 = vpop.f32.mrf.mxu0
        %v1466 = vadd.f32 0.0, %v1465
        %v1467 = vpop.f32.mrf.mxu0
        %1468 = vmatprep.mubr.f32.mxu0 0.0
        %1469 = vmatmul.mubr.f32.gmra.mxu0 %v1316
        %v1470 = vpop.f32.mrf.mxu0
        %v1471 = vadd.f32 0.0, %v1470
        %v1472 = vpop.f32.mrf.mxu0
        %1473 = vmatprep.mubr.f32.mxu0 0.0
        %1474 = vmatmul.mubr.f32.gmra.mxu0 %v1317
        %v1475 = vpop.f32.mrf.mxu0
        %v1476 = vadd.f32 0.0, %v1475
        %v1477 = vpop.f32.mrf.mxu0
        %1478 = vmatprep.mubr.f32.mxu0 0.0
        %1479 = vmatmul.mubr.f32.gmra.mxu0 %v1318
        %v1480 = vpop.f32.mrf.mxu0
        %v1481 = vadd.f32 0.0, %v1480
        %v1482 = vpop.f32.mrf.mxu0
        %1483 = vmatprep.mubr.f32.mxu0 0.0
        %1484 = vmatmul.mubr.f32.gmra.mxu0 %v1319
        %v1485 = vpop.f32.mrf.mxu0
        %v1486 = vadd.f32 0.0, %v1485
        %v1487 = vpop.f32.mrf.mxu0
        %1488 = vmatprep.mubr.f32.mxu0 0.0
        %1489 = vmatmul.mubr.f32.gmra.mxu0 %v1320
        %v1490 = vpop.f32.mrf.mxu0
        %v1491 = vadd.f32 0.0, %v1490
        %v1492 = vpop.f32.mrf.mxu0
        %1493 = vmatprep.mubr.f32.mxu0 0.0
        %1494 = vmatmul.mubr.f32.gmra.mxu0 %v1321
        %v1495 = vpop.f32.mrf.mxu0
        %v1496 = vadd.f32 0.0, %v1495
        %v1497 = vpop.f32.mrf.mxu0
        %1498 = vmatprep.mubr.f32.mxu0 0.0
        %1499 = vmatmul.mubr.f32.gmra.mxu0 %v1322
        %v1500 = vpop.f32.mrf.mxu0
        %v1501 = vadd.f32 0.0, %v1500
        %v1502 = vpop.f32.mrf.mxu0
        %1503 = vmatprep.mubr.f32.mxu0 0.0
        %1504 = vmatmul.mubr.f32.gmra.mxu0 %v1323
        %v1505 = vpop.f32.mrf.mxu0
        %v1506 = vadd.f32 0.0, %v1505
        %v1507 = vpop.f32.mrf.mxu0
        %1508 = vmatprep.mubr.f32.mxu0 0.0
        %1509 = vmatmul.mubr.f32.gmra.mxu0 %v1324
        %v1510 = vpop.f32.mrf.mxu0
        %v1511 = vadd.f32 0.0, %v1510
        %v1512 = vpop.f32.mrf.mxu0
        %1513 = vmatprep.mubr.f32.mxu0 0.0
        %1514 = vmatmul.mubr.f32.gmra.mxu0 %v1325
        %v1515 = vpop.f32.mrf.mxu0
        %v1516 = vadd.f32 0.0, %v1515
        %v1517 = vpop.f32.mrf.mxu0
        %1518 = vmatprep.mubr.f32.mxu0 0.0
        %1519 = vmatmul.mubr.f32.gmra.mxu0 %v1326
        %v1520 = vpop.f32.mrf.mxu0
        %v1521 = vadd.f32 0.0, %v1520
        %v1522 = vpop.f32.mrf.mxu0
        %1523 = vmatprep.mubr.f32.mxu0 0.0
        %1524 = vmatmul.mubr.f32.gmra.mxu0 %v1327
        %v1525 = vpop.f32.mrf.mxu0
        %v1526 = vadd.f32 0.0, %v1525
        %v1527 = vpop.f32.mrf.mxu0
        %1528 = vmatprep.mubr.f32.mxu0 0.0
        %1529 = vmatmul.mubr.f32.gmra.mxu0 %v1328
        %v1530 = vpop.f32.mrf.mxu0
        %v1531 = vadd.f32 0.0, %v1530
        %v1532 = vpop.f32.mrf.mxu0
        %1533 = vmatprep.mubr.f32.mxu0 0.0
        %1534 = vmatmul.mubr.f32.gmra.mxu0 %v1329
        %v1535 = vpop.f32.mrf.mxu0
        %v1536 = vadd.f32 0.0, %v1535
        %v1537 = vpop.f32.mrf.mxu0
        %1538 = vmatprep.mubr.f32.mxu0 0.0
        %1539 = vmatmul.mubr.f32.gmra.mxu0 %v1330
        %v1540 = vpop.f32.mrf.mxu0
        %v1541 = vadd.f32 0.0, %v1540
        %v1542 = vpop.f32.mrf.mxu0
        %1543 = vmatprep.mubr.f32.mxu0 0.0
        %1544 = vmatmul.mubr.f32.gmra.mxu0 %v1331
        %v1545 = vpop.f32.mrf.mxu0
        %v1546 = vadd.f32 0.0, %v1545
        %v1547 = vpop.f32.mrf.mxu0
        %1548 = vmatprep.mubr.f32.mxu0 0.0
        %1549 = vmatmul.mubr.f32.gmra.mxu0 %v1332
        %v1550 = vpop.f32.mrf.mxu0
        %v1551 = vadd.f32 0.0, %v1550
        %v1552 = vpop.f32.mrf.mxu0
        %1553 = vmatprep.mubr.f32.mxu0 0.0
        %1554 = vmatmul.mubr.f32.gmra.mxu0 %v1333
        %v1555 = vpop.f32.mrf.mxu0
        %v1556 = vadd.f32 0.0, %v1555
        %v1557 = vpop.f32.mrf.mxu0
        %1558 = vmatprep.mubr.f32.mxu0 0.0
        %1559 = vmatmul.mubr.f32.gmra.mxu0 %v1334
        %v1560 = vpop.f32.mrf.mxu0
        %v1561 = vadd.f32 0.0, %v1560
        %v1562 = vpop.f32.mrf.mxu0
        %1563 = vmatprep.mubr.f32.mxu0 0.0
        %1564 = vmatmul.mubr.f32.gmra.mxu0 %v1335
        %v1565 = vpop.f32.mrf.mxu0
        %v1566 = vadd.f32 0.0, %v1565
        %v1567 = vpop.f32.mrf.mxu0
        %1568 = vmatprep.mubr.f32.mxu0 0.0
        %1569 = vmatmul.mubr.f32.gmra.mxu0 %v1336
        %v1570 = vpop.f32.mrf.mxu0
        %v1571 = vadd.f32 0.0, %v1570
        %v1572 = vpop.f32.mrf.mxu0
        %1573 = vmatprep.mubr.f32.mxu0 0.0
        %1574 = vmatmul.mubr.f32.gmra.mxu0 %v1337
        %v1575 = vpop.f32.mrf.mxu0
        %v1576 = vadd.f32 0.0, %v1575
        %v1577 = vpop.f32.mrf.mxu0
        %1578 = vmatprep.mubr.f32.mxu0 0.0
        %1579 = vmatmul.mubr.f32.gmra.mxu0 %v1338
        %v1580 = vpop.f32.mrf.mxu0
        %v1581 = vadd.f32 0.0, %v1580
        %v1582 = vpop.f32.mrf.mxu0
        %1583 = vmatprep.mubr.f32.mxu0 0.0
        %1584 = vmatmul.mubr.f32.gmra.mxu0 %v1339
        %v1585 = vpop.f32.mrf.mxu0
        %v1586 = vadd.f32 0.0, %v1585
        %v1587 = vpop.f32.mrf.mxu0
        %1588 = vmatprep.mubr.f32.mxu0 0.0
        %1589 = vmatmul.mubr.f32.gmra.mxu0 %v1340
        %v1590 = vpop.f32.mrf.mxu0
        %v1591 = vadd.f32 0.0, %v1590
        %v1592 = vpop.f32.mrf.mxu0
        %1593 = vmatprep.mubr.f32.mxu0 0.0
        %1594 = vmatmul.mubr.f32.gmra.mxu0 %v1341
        %v1595 = vpop.f32.mrf.mxu0
        %v1596 = vadd.f32 0.0, %v1595
        %v1597 = vpop.f32.mrf.mxu0
        %1598 = vmatprep.mubr.f32.mxu0 0.0
        %1599 = vmatmul.mubr.f32.gmra.mxu0 %v1342
        %v1600 = vpop.f32.mrf.mxu0
        %v1601 = vadd.f32 0.0, %v1600
        %v1602 = vpop.f32.mrf.mxu0
        %1603 = vmatprep.mubr.f32.mxu0 0.0
        %1604 = vmatmul.mubr.f32.gmra.mxu0 %v1343
        %v1605 = vpop.f32.mrf.mxu0
        %v1606 = vadd.f32 0.0, %v1605
        %v1607 = vpop.f32.mrf.mxu0
        %1608 = vmatprep.mubr.f32.mxu0 0.0
        %1609 = vmatmul.mubr.f32.gmra.mxu0 %v1344
        %v1610 = vpop.f32.mrf.mxu0
        %v1611 = vadd.f32 0.0, %v1610
        %v1612 = vpop.f32.mrf.mxu0
        %1613 = vmatprep.mubr.f32.mxu0 0.0
        %1614 = vmatmul.mubr.f32.gmra.mxu0 %v1345
        %v1615 = vpop.f32.mrf.mxu0
        %v1616 = vadd.f32 0.0, %v1615
        %v1617 = vpop.f32.mrf.mxu0
        %1618 = vmatprep.mubr.f32.mxu0 0.0
        %1619 = vmatmul.mubr.f32.gmra.mxu0 %v1346
        %v1620 = vpop.f32.mrf.mxu0
        %v1621 = vadd.f32 0.0, %v1620
        %v1622 = vpop.f32.mrf.mxu0
        %1623 = vmatprep.mubr.f32.mxu0 0.0
        %1624 = vmatmul.mubr.f32.gmra.mxu0 %v1347
        %v1625 = vpop.f32.mrf.mxu0
        %v1626 = vadd.f32 0.0, %v1625
        %v1627 = vpop.f32.mrf.mxu0
        %1628 = vmatprep.mubr.f32.mxu0 0.0
        %1629 = vmatmul.mubr.f32.gmra.mxu0 %v1348
        %v1630 = vpop.f32.mrf.mxu0
        %v1631 = vadd.f32 0.0, %v1630
        %v1632 = vpop.f32.mrf.mxu0
        %1633 = vmatprep.mubr.f32.mxu0 0.0
        %1634 = vmatmul.mubr.f32.gmra.mxu0 %v1349
        %v1635 = vpop.f32.mrf.mxu0
        %v1636 = vadd.f32 0.0, %v1635
        %v1637 = vpop.f32.mrf.mxu0
        %1638 = vmatprep.mubr.f32.mxu0 0.0
        %1639 = vmatmul.mubr.f32.gmra.mxu0 %v1350
        %v1640 = vpop.f32.mrf.mxu0
        %v1641 = vadd.f32 0.0, %v1640
        %v1642 = vpop.f32.mrf.mxu0
        %1643 = vmatprep.mubr.f32.mxu0 0.0
        %1644 = vmatmul.mubr.f32.gmra.mxu0 %v1351
        %v1645 = vpop.f32.mrf.mxu0
        %v1646 = vadd.f32 0.0, %v1645
        %v1647 = vpop.f32.mrf.mxu0
        %1648 = vmatprep.mubr.f32.mxu0 0.0
        %1649 = vmatmul.mubr.f32.gmra.mxu0 %v1352
        %v1650 = vpop.f32.mrf.mxu0
        %v1651 = vadd.f32 0.0, %v1650
        %v1652 = vpop.f32.mrf.mxu0
        %1653 = vmatprep.mubr.f32.mxu0 0.0
        %1654 = vmatmul.mubr.f32.gmra.mxu0 %v1353
        %v1655 = vpop.f32.mrf.mxu0
        %v1656 = vadd.f32 0.0, %v1655
        %v1657 = vpop.f32.mrf.mxu0
        %1658 = vmatprep.mubr.f32.mxu0 0.0
        %1659 = vmatmul.mubr.f32.gmra.mxu0 %v1354
        %v1660 = vpop.f32.mrf.mxu0
        %v1661 = vadd.f32 0.0, %v1660
        %v1662 = vpop.f32.mrf.mxu0
        %1663 = vmatprep.mubr.f32.mxu0 0.0
        %1664 = vmatmul.mubr.f32.gmra.mxu0 %v1355
        %v1665 = vpop.f32.mrf.mxu0
        %v1666 = vadd.f32 0.0, %v1665
        %v1667 = vpop.f32.mrf.mxu0
        %1668 = vmatprep.mubr.f32.mxu0 0.0
        %1669 = vmatmul.mubr.f32.gmra.mxu0 %v1356
        %v1670 = vpop.f32.mrf.mxu0
        %v1671 = vadd.f32 0.0, %v1670
        %v1672 = vpop.f32.mrf.mxu0
        %1673 = vmatprep.mubr.f32.mxu0 0.0
        %1674 = vmatmul.mubr.f32.gmra.mxu0 %v1357
        %v1675 = vpop.f32.mrf.mxu0
        %v1676 = vadd.f32 0.0, %v1675
        %v1677 = vpop.f32.mrf.mxu0
        %1678 = vmatprep.mubr.f32.mxu0 0.0
        %1679 = vmatmul.mubr.f32.gmra.mxu0 %v1358
        %v1680 = vpop.f32.mrf.mxu0
        %v1681 = vadd.f32 0.0, %v1680
        %v1682 = vpop.f32.mrf.mxu0
        %1683 = vmatprep.mubr.f32.mxu0 0.0
        %1684 = vmatmul.mubr.f32.gmra.mxu0 %v1359
        %v1685 = vpop.f32.mrf.mxu0
        %v1686 = vadd.f32 0.0, %v1685
        %v1687 = vpop.f32.mrf.mxu0
        %1688 = vmatprep.mubr.f32.mxu0 0.0
        %1689 = vmatmul.mubr.f32.gmra.mxu0 %v1360
        %v1690 = vpop.f32.mrf.mxu0
        %v1691 = vadd.f32 0.0, %v1690
        %v1692 = vpop.f32.mrf.mxu0
        %1693 = vmatprep.mubr.f32.mxu0 0.0
        %1694 = vmatmul.mubr.f32.gmra.mxu0 %v1361
        %v1695 = vpop.f32.mrf.mxu0
        %v1696 = vadd.f32 0.0, %v1695
        %v1697 = vpop.f32.mrf.mxu0
        %1698 = vmatprep.mubr.f32.mxu0 0.0
        %1699 = vmatmul.mubr.f32.gmra.mxu0 %v1362
        %v1700 = vpop.f32.mrf.mxu0
        %v1701 = vadd.f32 0.0, %v1700
        %v1702 = vpop.f32.mrf.mxu0
        %1703 = vmatprep.mubr.f32.mxu0 0.0
        %1704 = vmatmul.mubr.f32.gmra.mxu0 %v1363
        %v1705 = vpop.f32.mrf.mxu0
        %v1706 = vadd.f32 0.0, %v1705
        %v1707 = vpop.f32.mrf.mxu0
        %1708 = vmatprep.mubr.f32.mxu0 0.0
        %1709 = vmatmul.mubr.f32.gmra.mxu0 %v1364
        %v1710 = vpop.f32.mrf.mxu0
        %v1711 = vadd.f32 0.0, %v1710
        %v1712 = vpop.f32.mrf.mxu0
        %1713 = vmatprep.mubr.f32.mxu0 0.0
        %1714 = vmatmul.mubr.f32.gmra.mxu0 %v1365
        %v1715 = vpop.f32.mrf.mxu0
        %v1716 = vadd.f32 0.0, %v1715
        %v1717 = vpop.f32.mrf.mxu0
        %1718 = vmatprep.mubr.f32.mxu0 0.0
        %1719 = vmatmul.mubr.f32.gmra.mxu0 %v1366
        %v1720 = vpop.f32.mrf.mxu0
        %v1721 = vadd.f32 0.0, %v1720
        %v1722 = vpop.f32.mrf.mxu0
        %1723 = vmatprep.mubr.f32.mxu0 0.0
        %1724 = vmatmul.mubr.f32.gmra.mxu0 %v1367
        %v1725 = vpop.f32.mrf.mxu0
        %v1726 = vadd.f32 0.0, %v1725
        %v1727 = vpop.f32.mrf.mxu0
        %1728 = vmatprep.mubr.f32.mxu0 0.0
        %1729 = vmatmul.mubr.f32.gmra.mxu0 %v1368
        %v1730 = vpop.f32.mrf.mxu0
        %v1731 = vadd.f32 0.0, %v1730
        %v1732 = vpop.f32.mrf.mxu0
        %1733 = vmatprep.mubr.f32.mxu0 0.0
        %1734 = vmatmul.mubr.f32.gmra.mxu0 %v1369
        %v1735 = vpop.f32.mrf.mxu0
        %v1736 = vadd.f32 0.0, %v1735
        %v1737 = vpop.f32.mrf.mxu0
        %1738 = vmatprep.mubr.f32.mxu0 0.0
        %1739 = vmatmul.mubr.f32.gmra.mxu0 %v1370
        %v1740 = vpop.f32.mrf.mxu0
        %v1741 = vadd.f32 0.0, %v1740
        %v1742 = vpop.f32.mrf.mxu0
        %1743 = vmatprep.mubr.f32.mxu0 0.0
        %1744 = vmatmul.mubr.f32.gmra.mxu0 %v1371
        %v1745 = vpop.f32.mrf.mxu0
        %v1746 = vadd.f32 0.0, %v1745
        %v1747 = vpop.f32.mrf.mxu0
        %1748 = vmatprep.mubr.f32.mxu0 0.0
        %1749 = vmatmul.mubr.f32.gmra.mxu0 %v1372
        %v1750 = vpop.f32.mrf.mxu0
        %v1751 = vadd.f32 0.0, %v1750
        %v1752 = vpop.f32.mrf.mxu0
        %1753 = vmatprep.mubr.f32.mxu0 0.0
        %1754 = vmatmul.mubr.f32.gmra.mxu0 %v1373
        %v1755 = vpop.f32.mrf.mxu0
        %v1756 = vadd.f32 0.0, %v1755
        %v1757 = vpop.f32.mrf.mxu0
        %1758 = vmatprep.mubr.f32.mxu0 0.0
        %1759 = vmatmul.mubr.f32.gmra.mxu0 %v1374
        %v1760 = vpop.f32.mrf.mxu0
        %v1761 = vadd.f32 0.0, %v1760
        %v1762 = vpop.f32.mrf.mxu0
        %1763 = vmatprep.mubr.f32.mxu0 0.0
        %1764 = vmatmul.mubr.f32.gmra.mxu0 %v1375
        %v1765 = vpop.f32.mrf.mxu0
        %v1766 = vadd.f32 0.0, %v1765
        %v1767 = vpop.f32.mrf.mxu0
        %1768 = vmatprep.mubr.f32.mxu0 0.0
        %1769 = vmatmul.mubr.f32.gmra.mxu0 %v1376
        %v1770 = vpop.f32.mrf.mxu0
        %v1771 = vadd.f32 0.0, %v1770
        %v1772 = vpop.f32.mrf.mxu0
        %1773 = vmatprep.mubr.f32.mxu0 0.0
        %1774 = vmatmul.mubr.f32.gmra.mxu0 %v1377
        %v1775 = vpop.f32.mrf.mxu0
        %v1776 = vadd.f32 0.0, %v1775
        %v1777 = vpop.f32.mrf.mxu0
        %1778 = vmatprep.mubr.f32.mxu0 0.0
        %1779 = vmatmul.mubr.f32.gmra.mxu0 %v1378
        %v1780 = vpop.f32.mrf.mxu0
        %v1781 = vadd.f32 0.0, %v1780
        %v1782 = vpop.f32.mrf.mxu0
        %1783 = vmatprep.mubr.f32.mxu0 0.0
        %1784 = vmatmul.mubr.f32.gmra.mxu0 %v1379
        %v1785 = vpop.f32.mrf.mxu0
        %v1786 = vadd.f32 0.0, %v1785
        %v1787 = vpop.f32.mrf.mxu0
        %1788 = vmatprep.mubr.f32.mxu0 0.0
        %1789 = vmatmul.mubr.f32.gmra.mxu0 %v1380
        %v1790 = vpop.f32.mrf.mxu0
        %v1791 = vadd.f32 0.0, %v1790
        %v1792 = vpop.f32.mrf.mxu0
        %1793 = vmatprep.mubr.f32.mxu0 0.0
        %1794 = vmatmul.mubr.f32.gmra.mxu0 %v1381
        %v1795 = vpop.f32.mrf.mxu0
        %v1796 = vadd.f32 0.0, %v1795
        %v1797 = vpop.f32.mrf.mxu0
        %1798 = vmatprep.mubr.f32.mxu0 0.0
        %1799 = vmatmul.mubr.f32.gmra.mxu0 %v1382
        %v1800 = vpop.f32.mrf.mxu0
        %v1801 = vadd.f32 0.0, %v1800
        %v1802 = vpop.f32.mrf.mxu0
        %1803 = vmatprep.mubr.f32.mxu0 0.0
        %1804 = vmatmul.mubr.f32.gmra.mxu0 %v1383
        %v1805 = vpop.f32.mrf.mxu0
        %v1806 = vadd.f32 0.0, %v1805
        %v1807 = vpop.f32.mrf.mxu0
        %1808 = vmatprep.mubr.f32.mxu0 0.0
        %1809 = vmatmul.mubr.f32.gmra.mxu0 %v1384
        %v1810 = vpop.f32.mrf.mxu0
        %v1811 = vadd.f32 0.0, %v1810
        %v1812 = vpop.f32.mrf.mxu0
        %1813 = vmatprep.mubr.f32.mxu0 0.0
        %1814 = vmatmul.mubr.f32.gmra.mxu0 %v1385
        %v1815 = vpop.f32.mrf.mxu0
        %v1816 = vadd.f32 0.0, %v1815
        %v1817 = vpop.f32.mrf.mxu0
        %1818 = vmatprep.mubr.f32.mxu0 0.0
        %1819 = vmatmul.mubr.f32.gmra.mxu0 %v1386
        %v1820 = vpop.f32.mrf.mxu0
        %v1821 = vadd.f32 0.0, %v1820
        %v1822 = vpop.f32.mrf.mxu0
        %1823 = vmatprep.mubr.f32.mxu0 0.0
        %1824 = vmatmul.mubr.f32.gmra.mxu0 %v1387
        %v1825 = vpop.f32.mrf.mxu0
        %v1826 = vadd.f32 0.0, %v1825
        %v1827 = vpop.f32.mrf.mxu0
        %1828 = vmatprep.mubr.f32.mxu0 0.0
        %1829 = vmatmul.mubr.f32.gmra.mxu0 %v1388
        %v1830 = vpop.f32.mrf.mxu0
        %v1831 = vadd.f32 0.0, %v1830
        %v1832 = vpop.f32.mrf.mxu0
        %1833 = vmatprep.mubr.f32.mxu0 0.0
        %1834 = vmatmul.mubr.f32.gmra.mxu0 %v1389
        %v1835 = vpop.f32.mrf.mxu0
        %v1836 = vadd.f32 0.0, %v1835
        %v1837 = vpop.f32.mrf.mxu0
        %1838 = vmatprep.mubr.f32.mxu0 0.0
        %1839 = vmatmul.mubr.f32.gmra.mxu0 %v1390
        %v1840 = vpop.f32.mrf.mxu0
        %v1841 = vadd.f32 0.0, %v1840
        %v1842 = vpop.f32.mrf.mxu0
        %1843 = vmatprep.mubr.f32.mxu0 0.0
        %1844 = vmatmul.mubr.f32.gmra.mxu0 %v1391
        %v1845 = vpop.f32.mrf.mxu0
        %v1846 = vadd.f32 0.0, %v1845
        %v1847 = vpop.f32.mrf.mxu0
        %1848 = vmatprep.mubr.f32.mxu0 0.0
        %1849 = vmatmul.mubr.f32.gmra.mxu0 %v1392
        %v1850 = vpop.f32.mrf.mxu0
        %v1851 = vadd.f32 0.0, %v1850
        %v1852 = vpop.f32.mrf.mxu0
        %1853 = vmatprep.mubr.f32.mxu0 0.0
        %1854 = vmatmul.mubr.f32.gmra.mxu0 %v1393
        %v1855 = vpop.f32.mrf.mxu0
        %v1856 = vadd.f32 0.0, %v1855
        %v1857 = vpop.f32.mrf.mxu0
        %1858 = vdwg.mxu0
        %1859 = vst [vmem:[#allocation2] sm:$0xff] %v1461
        %1860 = vst [vmem:[#allocation2 + $0x8] sm:$0xff] %v1466
        %1861 = vst [vmem:[#allocation2 + $0x10] sm:$0xff] %v1471
        %1862 = vst [vmem:[#allocation2 + $0x18] sm:$0xff] %v1476
        %1863 = vst [vmem:[#allocation2 + $0x20] sm:$0xff] %v1481
        %1864 = vst [vmem:[#allocation2 + $0x28] sm:$0xff] %v1486
        %1865 = vst [vmem:[#allocation2 + $0x30] sm:$0xff] %v1491
        %1866 = vst [vmem:[#allocation2 + $0x38] sm:$0xff] %v1496
        %1867 = vst [vmem:[#allocation2 + $0x40] sm:$0xff] %v1501
        %1868 = vst [vmem:[#allocation2 + $0x48] sm:$0xff] %v1506
        %1869 = vst [vmem:[#allocation2 + $0x50] sm:$0xff] %v1511
        %1870 = vst [vmem:[#allocation2 + $0x58] sm:$0xff] %v1516
        %1871 = vst [vmem:[#allocation2 + $0x60] sm:$0xff] %v1521
        %1872 = vst [vmem:[#allocation2 + $0x68] sm:$0xff] %v1526
        %1873 = vst [vmem:[#allocation2 + $0x70] sm:$0xff] %v1531
        %1874 = vst [vmem:[#allocation2 + $0x78] sm:$0xff] %v1536
        %1875 = vst [vmem:[#allocation2 + $0x80] sm:$0xff] %v1541
        %1876 = vst [vmem:[#allocation2 + $0x88] sm:$0xff] %v1546
        %1877 = vst [vmem:[#allocation2 + $0x90] sm:$0xff] %v1551
        %1878 = vst [vmem:[#allocation2 + $0x98] sm:$0xff] %v1556
        %1879 = vst [vmem:[#allocation2 + $0xa0] sm:$0xff] %v1561
        %1880 = vst [vmem:[#allocation2 + $0xa8] sm:$0xff] %v1566
        %1881 = vst [vmem:[#allocation2 + $0xb0] sm:$0xff] %v1571
        %1882 = vst [vmem:[#allocation2 + $0xb8] sm:$0xff] %v1576
        %1883 = vst [vmem:[#allocation2 + $0xc0] sm:$0xff] %v1581
        %1884 = vst [vmem:[#allocation2 + $0xc8] sm:$0xff] %v1586
        %1885 = vst [vmem:[#allocation2 + $0xd0] sm:$0xff] %v1591
        %1886 = vst [vmem:[#allocation2 + $0xd8] sm:$0xff] %v1596
        %1887 = vst [vmem:[#allocation2 + $0xe0] sm:$0xff] %v1601
        %1888 = vst [vmem:[#allocation2 + $0xe8] sm:$0xff] %v1606
        %1889 = vst [vmem:[#allocation2 + $0xf0] sm:$0xff] %v1611
        %1890 = vst [vmem:[#allocation2 + $0xf8] sm:$0xff] %v1616
        %1891 = vst [vmem:[#allocation2 + $0x100] sm:$0xff] %v1621
        %1892 = vst [vmem:[#allocation2 + $0x108] sm:$0xff] %v1626
        %1893 = vst [vmem:[#allocation2 + $0x110] sm:$0xff] %v1631
        %1894 = vst [vmem:[#allocation2 + $0x118] sm:$0xff] %v1636
        %1895 = vst [vmem:[#allocation2 + $0x120] sm:$0xff] %v1641
        %1896 = vst [vmem:[#allocation2 + $0x128] sm:$0xff] %v1646
        %1897 = vst [vmem:[#allocation2 + $0x130] sm:$0xff] %v1651
        %1898 = vst [vmem:[#allocation2 + $0x138] sm:$0xff] %v1656
        %1899 = vst [vmem:[#allocation2 + $0x140] sm:$0xff] %v1661
        %1900 = vst [vmem:[#allocation2 + $0x148] sm:$0xff] %v1666
        %1901 = vst [vmem:[#allocation2 + $0x150] sm:$0xff] %v1671
        %1902 = vst [vmem:[#allocation2 + $0x158] sm:$0xff] %v1676
        %1903 = vst [vmem:[#allocation2 + $0x160] sm:$0xff] %v1681
        %1904 = vst [vmem:[#allocation2 + $0x168] sm:$0xff] %v1686
        %1905 = vst [vmem:[#allocation2 + $0x170] sm:$0xff] %v1691
        %1906 = vst [vmem:[#allocation2 + $0x178] sm:$0xff] %v1696
        %1907 = vst [vmem:[#allocation2 + $0x180] sm:$0xff] %v1701
        %1908 = vst [vmem:[#allocation2 + $0x188] sm:$0xff] %v1706
        %1909 = vst [vmem:[#allocation2 + $0x190] sm:$0xff] %v1711
        %1910 = vst [vmem:[#allocation2 + $0x198] sm:$0xff] %v1716
        %1911 = vst [vmem:[#allocation2 + $0x1a0] sm:$0xff] %v1721
        %1912 = vst [vmem:[#allocation2 + $0x1a8] sm:$0xff] %v1726
        %1913 = vst [vmem:[#allocation2 + $0x1b0] sm:$0xff] %v1731
        %1914 = vst [vmem:[#allocation2 + $0x1b8] sm:$0xff] %v1736
        %1915 = vst [vmem:[#allocation2 + $0x1c0] sm:$0xff] %v1741
        %1916 = vst [vmem:[#allocation2 + $0x1c8] sm:$0xff] %v1746
        %1917 = vst [vmem:[#allocation2 + $0x1d0] sm:$0xff] %v1751
        %1918 = vst [vmem:[#allocation2 + $0x1d8] sm:$0xff] %v1756
        %1919 = vst [vmem:[#allocation2 + $0x1e0] sm:$0xff] %v1761
        %1920 = vst [vmem:[#allocation2 + $0x1e8] sm:$0xff] %v1766
        %1921 = vst [vmem:[#allocation2 + $0x1f0] sm:$0xff] %v1771
        %1922 = vst [vmem:[#allocation2 + $0x1f8] sm:$0xff] %v1776
        %1923 = vst [vmem:[#allocation2 + $0x200] sm:$0xff] %v1781
        %1924 = vst [vmem:[#allocation2 + $0x208] sm:$0xff] %v1786
        %1925 = vst [vmem:[#allocation2 + $0x210] sm:$0xff] %v1791
        %1926 = vst [vmem:[#allocation2 + $0x218] sm:$0xff] %v1796
        %1927 = vst [vmem:[#allocation2 + $0x220] sm:$0xff] %v1801
        %1928 = vst [vmem:[#allocation2 + $0x228] sm:$0xff] %v1806
        %1929 = vst [vmem:[#allocation2 + $0x230] sm:$0xff] %v1811
        %1930 = vst [vmem:[#allocation2 + $0x238] sm:$0xff] %v1816
        %1931 = vst [vmem:[#allocation2 + $0x240] sm:$0xff] %v1821
        %1932 = vst [vmem:[#allocation2 + $0x248] sm:$0xff] %v1826
        %1933 = vst [vmem:[#allocation2 + $0x250] sm:$0xff] %v1831
        %1934 = vst [vmem:[#allocation2 + $0x258] sm:$0xff] %v1836
        %1935 = vst [vmem:[#allocation2 + $0x260] sm:$0xff] %v1841
        %1936 = vst [vmem:[#allocation2 + $0x268] sm:$0xff] %v1846
        %1937 = vst [vmem:[#allocation2 + $0x270] sm:$0xff] %v1851
        %1938 = vst [vmem:[#allocation2 + $0x278] sm:$0xff] %v1856
        %v1939 = vld [vmem:[#allocation3] sm:$0xff]
        %v1940 = vld [vmem:[#allocation3 + $0x8] sm:$0xff]
        %v1941 = vld [vmem:[%s706] sm:$0xff]
        %s1942 = smul.u32 0, 16
        %s1943 = scalar_lea.vmem [#allocation2], %s1942
        %v1944 = vld [vmem:[%s1943] sm:$0xff]
        %v1945 = vld [vmem:[%s1943 + $0x8] sm:$0xff]
        %s1946 = sadd.s32 %s1942, 128
        %s1947 = scalar_lea.vmem [#allocation2], %s1946
        %v1948 = vld [vmem:[%s1947] sm:$0xff]
        %v1949 = vld [vmem:[%s1947 + $0x8] sm:$0xff]
        %s1950 = sadd.s32 %s1942, 256
        %s1951 = scalar_lea.vmem [#allocation2], %s1950
        %v1952 = vld [vmem:[%s1951] sm:$0xff]
        %v1953 = vld [vmem:[%s1951 + $0x8] sm:$0xff]
        %s1954 = sadd.s32 %s1942, 384
        %s1955 = scalar_lea.vmem [#allocation2], %s1954
        %v1956 = vld [vmem:[%s1955] sm:$0xff]
        %v1957 = vld [vmem:[%s1955 + $0x8] sm:$0xff]
        %s1958 = sadd.s32 %s1942, 512
        %s1959 = scalar_lea.vmem [#allocation2], %s1958
        %v1960 = vld [vmem:[%s1959] sm:$0xff]
        %v1961 = vld [vmem:[%s1959 + $0x8] sm:$0xff]
        %v1962 = vmul.f32 %v1948, %v1939
        %v1963 = vmul.f32 %v1949, %v1940
        %v1964 = vadd.f32 %v1962, %v1963
        %v1965 = vrot.slane %v1964, 4
        %v1966 = vadd.f32 %v1964, %v1965
        %v1967 = vrot.slane %v1966, 2
        %v1968 = vadd.f32 %v1966, %v1967
        %v1969 = vrot.slane %v1968, 1
        %v1970 = vadd.f32 %v1968, %v1969
        %v1971 = vmul.f32 %v1944, %v1939
        %v1972 = vmul.f32 %v1945, %v1940
        %v1973 = vmul.f32 %v1952, %v1970
        %v1974 = vmul.f32 %v1953, %v1970
        %v1975 = vadd.f32 %v1971, %v1973
        %v1976 = vadd.f32 %v1972, %v1974
        %v1977 = vlaneseq
        %v1978 = vshrl.u32 %v1977, 7
        %v1979 = vsub.s32 0, %v1978
        %v1980 = vrot.slane %v1941, %v1979
        %v1981 = vmul.f32 %v1956, %v1980
        %v1982 = vmul.f32 %v1957, %v1980
        %v1983 = vadd.f32 %v1975, %v1981
        %v1984 = vadd.f32 %v1976, %v1982
        %v1985 = vmul.f32 %v1960, %v1983
        %v1986 = vmul.f32 %v1961, %v1984
        %v1987 = vadd.f32 %v1985, %v1986
        %v1988 = vrot.slane %v1987, 4
        %v1989 = vadd.f32 %v1987, %v1988
        %v1990 = vrot.slane %v1989, 2
        %v1991 = vadd.f32 %v1989, %v1990
        %v1992 = vrot.slane %v1991, 1
        %v1993 = vadd.f32 %v1991, %v1992
        %s1994 = sadd.s32 %s1942, 16
        %s1995 = scalar_lea.vmem [#allocation2], %s1994
        %v1996 = vld [vmem:[%s1995] sm:$0xff]
        %v1997 = vld [vmem:[%s1995 + $0x8] sm:$0xff]
        %s1998 = sadd.s32 %s1942, 144
        %s1999 = scalar_lea.vmem [#allocation2], %s1998
        %v2000 = vld [vmem:[%s1999] sm:$0xff]
        %v2001 = vld [vmem:[%s1999 + $0x8] sm:$0xff]
        %s2002 = sadd.s32 %s1942, 272
        %s2003 = scalar_lea.vmem [#allocation2], %s2002
        %v2004 = vld [vmem:[%s2003] sm:$0xff]
        %v2005 = vld [vmem:[%s2003 + $0x8] sm:$0xff]
        %s2006 = sadd.s32 %s1942, 400
        %s2007 = scalar_lea.vmem [#allocation2], %s2006
        %v2008 = vld [vmem:[%s2007] sm:$0xff]
        %v2009 = vld [vmem:[%s2007 + $0x8] sm:$0xff]
        %s2010 = sadd.s32 %s1942, 528
        %s2011 = scalar_lea.vmem [#allocation2], %s2010
        %v2012 = vld [vmem:[%s2011] sm:$0xff]
        %v2013 = vld [vmem:[%s2011 + $0x8] sm:$0xff]
        %v2014 = vmul.f32 %v2000, %v1983
        %v2015 = vmul.f32 %v2001, %v1984
        %v2016 = vadd.f32 %v2014, %v2015
        %v2017 = vrot.slane %v2016, 4
        %v2018 = vadd.f32 %v2016, %v2017
        %v2019 = vrot.slane %v2018, 2
        %v2020 = vadd.f32 %v2018, %v2019
        %v2021 = vrot.slane %v2020, 1
        %v2022 = vadd.f32 %v2020, %v2021
        %v2023 = vmul.f32 %v1996, %v1983
        %v2024 = vmul.f32 %v1997, %v1984
        %v2025 = vmul.f32 %v2004, %v2022
        %v2026 = vmul.f32 %v2005, %v2022
        %v2027 = vadd.f32 %v2023, %v2025
        %v2028 = vadd.f32 %v2024, %v2026
        %v2029 = vlaneseq
        %v2030 = vshrl.u32 %v2029, 7
        %v2031 = vsub.s32 1, %v2030
        %v2032 = vrot.slane %v1941, %v2031
        %v2033 = vmul.f32 %v2008, %v2032
        %v2034 = vmul.f32 %v2009, %v2032
        %v2035 = vadd.f32 %v2027, %v2033
        %v2036 = vadd.f32 %v2028, %v2034
        %v2037 = vmul.f32 %v2012, %v2035
        %v2038 = vmul.f32 %v2013, %v2036
        %v2039 = vadd.f32 %v2037, %v2038
        %v2040 = vrot.slane %v2039, 4
        %v2041 = vadd.f32 %v2039, %v2040
        %v2042 = vrot.slane %v2041, 2
        %v2043 = vadd.f32 %v2041, %v2042
        %v2044 = vrot.slane %v2043, 1
        %v2045 = vadd.f32 %v2043, %v2044
        %s2046 = sadd.s32 %s1942, 32
        %s2047 = scalar_lea.vmem [#allocation2], %s2046
        %v2048 = vld [vmem:[%s2047] sm:$0xff]
        %v2049 = vld [vmem:[%s2047 + $0x8] sm:$0xff]
        %s2050 = sadd.s32 %s1942, 160
        %s2051 = scalar_lea.vmem [#allocation2], %s2050
        %v2052 = vld [vmem:[%s2051] sm:$0xff]
        %v2053 = vld [vmem:[%s2051 + $0x8] sm:$0xff]
        %s2054 = sadd.s32 %s1942, 288
        %s2055 = scalar_lea.vmem [#allocation2], %s2054
        %v2056 = vld [vmem:[%s2055] sm:$0xff]
        %v2057 = vld [vmem:[%s2055 + $0x8] sm:$0xff]
        %s2058 = sadd.s32 %s1942, 416
        %s2059 = scalar_lea.vmem [#allocation2], %s2058
        %v2060 = vld [vmem:[%s2059] sm:$0xff]
        %v2061 = vld [vmem:[%s2059 + $0x8] sm:$0xff]
        %s2062 = sadd.s32 %s1942, 544
        %s2063 = scalar_lea.vmem [#allocation2], %s2062
        %v2064 = vld [vmem:[%s2063] sm:$0xff]
        %v2065 = vld [vmem:[%s2063 + $0x8] sm:$0xff]
        %v2066 = vmul.f32 %v2052, %v2035
        %v2067 = vmul.f32 %v2053, %v2036
        %v2068 = vadd.f32 %v2066, %v2067
        %v2069 = vrot.slane %v2068, 4
        %v2070 = vadd.f32 %v2068, %v2069
        %v2071 = vrot.slane %v2070, 2
        %v2072 = vadd.f32 %v2070, %v2071
        %v2073 = vrot.slane %v2072, 1
        %v2074 = vadd.f32 %v2072, %v2073
        %v2075 = vmul.f32 %v2048, %v2035
        %v2076 = vmul.f32 %v2049, %v2036
        %v2077 = vmul.f32 %v2056, %v2074
        %v2078 = vmul.f32 %v2057, %v2074
        %v2079 = vadd.f32 %v2075, %v2077
        %v2080 = vadd.f32 %v2076, %v2078
        %v2081 = vlaneseq
        %v2082 = vshrl.u32 %v2081, 7
        %v2083 = vsub.s32 2, %v2082
        %v2084 = vrot.slane %v1941, %v2083
        %v2085 = vmul.f32 %v2060, %v2084
        %v2086 = vmul.f32 %v2061, %v2084
        %v2087 = vadd.f32 %v2079, %v2085
        %v2088 = vadd.f32 %v2080, %v2086
        %v2089 = vmul.f32 %v2064, %v2087
        %v2090 = vmul.f32 %v2065, %v2088
        %v2091 = vadd.f32 %v2089, %v2090
        %v2092 = vrot.slane %v2091, 4
        %v2093 = vadd.f32 %v2091, %v2092
        %v2094 = vrot.slane %v2093, 2
        %v2095 = vadd.f32 %v2093, %v2094
        %v2096 = vrot.slane %v2095, 1
        %v2097 = vadd.f32 %v2095, %v2096
        %s2098 = sadd.s32 %s1942, 48
        %s2099 = scalar_lea.vmem [#allocation2], %s2098
        %v2100 = vld [vmem:[%s2099] sm:$0xff]
        %v2101 = vld [vmem:[%s2099 + $0x8] sm:$0xff]
        %s2102 = sadd.s32 %s1942, 176
        %s2103 = scalar_lea.vmem [#allocation2], %s2102
        %v2104 = vld [vmem:[%s2103] sm:$0xff]
        %v2105 = vld [vmem:[%s2103 + $0x8] sm:$0xff]
        %s2106 = sadd.s32 %s1942, 304
        %s2107 = scalar_lea.vmem [#allocation2], %s2106
        %v2108 = vld [vmem:[%s2107] sm:$0xff]
        %v2109 = vld [vmem:[%s2107 + $0x8] sm:$0xff]
        %s2110 = sadd.s32 %s1942, 432
        %s2111 = scalar_lea.vmem [#allocation2], %s2110
        %v2112 = vld [vmem:[%s2111] sm:$0xff]
        %v2113 = vld [vmem:[%s2111 + $0x8] sm:$0xff]
        %s2114 = sadd.s32 %s1942, 560
        %s2115 = scalar_lea.vmem [#allocation2], %s2114
        %v2116 = vld [vmem:[%s2115] sm:$0xff]
        %v2117 = vld [vmem:[%s2115 + $0x8] sm:$0xff]
        %v2118 = vmul.f32 %v2104, %v2087
        %v2119 = vmul.f32 %v2105, %v2088
        %v2120 = vadd.f32 %v2118, %v2119
        %v2121 = vrot.slane %v2120, 4
        %v2122 = vadd.f32 %v2120, %v2121
        %v2123 = vrot.slane %v2122, 2
        %v2124 = vadd.f32 %v2122, %v2123
        %v2125 = vrot.slane %v2124, 1
        %v2126 = vadd.f32 %v2124, %v2125
        %v2127 = vmul.f32 %v2100, %v2087
        %v2128 = vmul.f32 %v2101, %v2088
        %v2129 = vmul.f32 %v2108, %v2126
        %v2130 = vmul.f32 %v2109, %v2126
        %v2131 = vadd.f32 %v2127, %v2129
        %v2132 = vadd.f32 %v2128, %v2130
        %v2133 = vlaneseq
        %v2134 = vshrl.u32 %v2133, 7
        %v2135 = vsub.s32 3, %v2134
        %v2136 = vrot.slane %v1941, %v2135
        %v2137 = vmul.f32 %v2112, %v2136
        %v2138 = vmul.f32 %v2113, %v2136
        %v2139 = vadd.f32 %v2131, %v2137
        %v2140 = vadd.f32 %v2132, %v2138
        %v2141 = vmul.f32 %v2116, %v2139
        %v2142 = vmul.f32 %v2117, %v2140
        %v2143 = vadd.f32 %v2141, %v2142
        %v2144 = vrot.slane %v2143, 4
        %v2145 = vadd.f32 %v2143, %v2144
        %v2146 = vrot.slane %v2145, 2
        %v2147 = vadd.f32 %v2145, %v2146
        %v2148 = vrot.slane %v2147, 1
        %v2149 = vadd.f32 %v2147, %v2148
        %s2150 = sadd.s32 %s1942, 64
        %s2151 = scalar_lea.vmem [#allocation2], %s2150
        %v2152 = vld [vmem:[%s2151] sm:$0xff]
        %v2153 = vld [vmem:[%s2151 + $0x8] sm:$0xff]
        %s2154 = sadd.s32 %s1942, 192
        %s2155 = scalar_lea.vmem [#allocation2], %s2154
        %v2156 = vld [vmem:[%s2155] sm:$0xff]
        %v2157 = vld [vmem:[%s2155 + $0x8] sm:$0xff]
        %s2158 = sadd.s32 %s1942, 320
        %s2159 = scalar_lea.vmem [#allocation2], %s2158
        %v2160 = vld [vmem:[%s2159] sm:$0xff]
        %v2161 = vld [vmem:[%s2159 + $0x8] sm:$0xff]
        %s2162 = sadd.s32 %s1942, 448
        %s2163 = scalar_lea.vmem [#allocation2], %s2162
        %v2164 = vld [vmem:[%s2163] sm:$0xff]
        %v2165 = vld [vmem:[%s2163 + $0x8] sm:$0xff]
        %s2166 = sadd.s32 %s1942, 576
        %s2167 = scalar_lea.vmem [#allocation2], %s2166
        %v2168 = vld [vmem:[%s2167] sm:$0xff]
        %v2169 = vld [vmem:[%s2167 + $0x8] sm:$0xff]
        %v2170 = vmul.f32 %v2156, %v2139
        %v2171 = vmul.f32 %v2157, %v2140
        %v2172 = vadd.f32 %v2170, %v2171
        %v2173 = vrot.slane %v2172, 4
        %v2174 = vadd.f32 %v2172, %v2173
        %v2175 = vrot.slane %v2174, 2
        %v2176 = vadd.f32 %v2174, %v2175
        %v2177 = vrot.slane %v2176, 1
        %v2178 = vadd.f32 %v2176, %v2177
        %v2179 = vmul.f32 %v2152, %v2139
        %v2180 = vmul.f32 %v2153, %v2140
        %v2181 = vmul.f32 %v2160, %v2178
        %v2182 = vmul.f32 %v2161, %v2178
        %v2183 = vadd.f32 %v2179, %v2181
        %v2184 = vadd.f32 %v2180, %v2182
        %v2185 = vlaneseq
        %v2186 = vshrl.u32 %v2185, 7
        %v2187 = vsub.s32 4, %v2186
        %v2188 = vrot.slane %v1941, %v2187
        %v2189 = vmul.f32 %v2164, %v2188
        %v2190 = vmul.f32 %v2165, %v2188
        %v2191 = vadd.f32 %v2183, %v2189
        %v2192 = vadd.f32 %v2184, %v2190
        %v2193 = vmul.f32 %v2168, %v2191
        %v2194 = vmul.f32 %v2169, %v2192
        %v2195 = vadd.f32 %v2193, %v2194
        %v2196 = vrot.slane %v2195, 4
        %v2197 = vadd.f32 %v2195, %v2196
        %v2198 = vrot.slane %v2197, 2
        %v2199 = vadd.f32 %v2197, %v2198
        %v2200 = vrot.slane %v2199, 1
        %v2201 = vadd.f32 %v2199, %v2200
        %s2202 = sadd.s32 %s1942, 80
        %s2203 = scalar_lea.vmem [#allocation2], %s2202
        %v2204 = vld [vmem:[%s2203] sm:$0xff]
        %v2205 = vld [vmem:[%s2203 + $0x8] sm:$0xff]
        %s2206 = sadd.s32 %s1942, 208
        %s2207 = scalar_lea.vmem [#allocation2], %s2206
        %v2208 = vld [vmem:[%s2207] sm:$0xff]
        %v2209 = vld [vmem:[%s2207 + $0x8] sm:$0xff]
        %s2210 = sadd.s32 %s1942, 336
        %s2211 = scalar_lea.vmem [#allocation2], %s2210
        %v2212 = vld [vmem:[%s2211] sm:$0xff]
        %v2213 = vld [vmem:[%s2211 + $0x8] sm:$0xff]
        %s2214 = sadd.s32 %s1942, 464
        %s2215 = scalar_lea.vmem [#allocation2], %s2214
        %v2216 = vld [vmem:[%s2215] sm:$0xff]
        %v2217 = vld [vmem:[%s2215 + $0x8] sm:$0xff]
        %s2218 = sadd.s32 %s1942, 592
        %s2219 = scalar_lea.vmem [#allocation2], %s2218
        %v2220 = vld [vmem:[%s2219] sm:$0xff]
        %v2221 = vld [vmem:[%s2219 + $0x8] sm:$0xff]
        %v2222 = vmul.f32 %v2208, %v2191
        %v2223 = vmul.f32 %v2209, %v2192
        %v2224 = vadd.f32 %v2222, %v2223
        %v2225 = vrot.slane %v2224, 4
        %v2226 = vadd.f32 %v2224, %v2225
        %v2227 = vrot.slane %v2226, 2
        %v2228 = vadd.f32 %v2226, %v2227
        %v2229 = vrot.slane %v2228, 1
        %v2230 = vadd.f32 %v2228, %v2229
        %v2231 = vmul.f32 %v2204, %v2191
        %v2232 = vmul.f32 %v2205, %v2192
        %v2233 = vmul.f32 %v2212, %v2230
        %v2234 = vmul.f32 %v2213, %v2230
        %v2235 = vadd.f32 %v2231, %v2233
        %v2236 = vadd.f32 %v2232, %v2234
        %v2237 = vlaneseq
        %v2238 = vshrl.u32 %v2237, 7
        %v2239 = vsub.s32 5, %v2238
        %v2240 = vrot.slane %v1941, %v2239
        %v2241 = vmul.f32 %v2216, %v2240
        %v2242 = vmul.f32 %v2217, %v2240
        %v2243 = vadd.f32 %v2235, %v2241
        %v2244 = vadd.f32 %v2236, %v2242
        %v2245 = vmul.f32 %v2220, %v2243
        %v2246 = vmul.f32 %v2221, %v2244
        %v2247 = vadd.f32 %v2245, %v2246
        %v2248 = vrot.slane %v2247, 4
        %v2249 = vadd.f32 %v2247, %v2248
        %v2250 = vrot.slane %v2249, 2
        %v2251 = vadd.f32 %v2249, %v2250
        %v2252 = vrot.slane %v2251, 1
        %v2253 = vadd.f32 %v2251, %v2252
        %s2254 = sadd.s32 %s1942, 96
        %s2255 = scalar_lea.vmem [#allocation2], %s2254
        %v2256 = vld [vmem:[%s2255] sm:$0xff]
        %v2257 = vld [vmem:[%s2255 + $0x8] sm:$0xff]
        %s2258 = sadd.s32 %s1942, 224
        %s2259 = scalar_lea.vmem [#allocation2], %s2258
        %v2260 = vld [vmem:[%s2259] sm:$0xff]
        %v2261 = vld [vmem:[%s2259 + $0x8] sm:$0xff]
        %s2262 = sadd.s32 %s1942, 352
        %s2263 = scalar_lea.vmem [#allocation2], %s2262
        %v2264 = vld [vmem:[%s2263] sm:$0xff]
        %v2265 = vld [vmem:[%s2263 + $0x8] sm:$0xff]
        %s2266 = sadd.s32 %s1942, 480
        %s2267 = scalar_lea.vmem [#allocation2], %s2266
        %v2268 = vld [vmem:[%s2267] sm:$0xff]
        %v2269 = vld [vmem:[%s2267 + $0x8] sm:$0xff]
        %s2270 = sadd.s32 %s1942, 608
        %s2271 = scalar_lea.vmem [#allocation2], %s2270
        %v2272 = vld [vmem:[%s2271] sm:$0xff]
        %v2273 = vld [vmem:[%s2271 + $0x8] sm:$0xff]
        %v2274 = vmul.f32 %v2260, %v2243
        %v2275 = vmul.f32 %v2261, %v2244
        %v2276 = vadd.f32 %v2274, %v2275
        %v2277 = vrot.slane %v2276, 4
        %v2278 = vadd.f32 %v2276, %v2277
        %v2279 = vrot.slane %v2278, 2
        %v2280 = vadd.f32 %v2278, %v2279
        %v2281 = vrot.slane %v2280, 1
        %v2282 = vadd.f32 %v2280, %v2281
        %v2283 = vmul.f32 %v2256, %v2243
        %v2284 = vmul.f32 %v2257, %v2244
        %v2285 = vmul.f32 %v2264, %v2282
        %v2286 = vmul.f32 %v2265, %v2282
        %v2287 = vadd.f32 %v2283, %v2285
        %v2288 = vadd.f32 %v2284, %v2286
        %v2289 = vlaneseq
        %v2290 = vshrl.u32 %v2289, 7
        %v2291 = vsub.s32 6, %v2290
        %v2292 = vrot.slane %v1941, %v2291
        %v2293 = vmul.f32 %v2268, %v2292
        %v2294 = vmul.f32 %v2269, %v2292
        %v2295 = vadd.f32 %v2287, %v2293
        %v2296 = vadd.f32 %v2288, %v2294
        %v2297 = vmul.f32 %v2272, %v2295
        %v2298 = vmul.f32 %v2273, %v2296
        %v2299 = vadd.f32 %v2297, %v2298
        %v2300 = vrot.slane %v2299, 4
        %v2301 = vadd.f32 %v2299, %v2300
        %v2302 = vrot.slane %v2301, 2
        %v2303 = vadd.f32 %v2301, %v2302
        %v2304 = vrot.slane %v2303, 1
        %v2305 = vadd.f32 %v2303, %v2304
        %s2306 = sadd.s32 %s1942, 112
        %s2307 = scalar_lea.vmem [#allocation2], %s2306
        %v2308 = vld [vmem:[%s2307] sm:$0xff]
        %v2309 = vld [vmem:[%s2307 + $0x8] sm:$0xff]
        %s2310 = sadd.s32 %s1942, 240
        %s2311 = scalar_lea.vmem [#allocation2], %s2310
        %v2312 = vld [vmem:[%s2311] sm:$0xff]
        %v2313 = vld [vmem:[%s2311 + $0x8] sm:$0xff]
        %s2314 = sadd.s32 %s1942, 368
        %s2315 = scalar_lea.vmem [#allocation2], %s2314
        %v2316 = vld [vmem:[%s2315] sm:$0xff]
        %v2317 = vld [vmem:[%s2315 + $0x8] sm:$0xff]
        %s2318 = sadd.s32 %s1942, 496
        %s2319 = scalar_lea.vmem [#allocation2], %s2318
        %v2320 = vld [vmem:[%s2319] sm:$0xff]
        %v2321 = vld [vmem:[%s2319 + $0x8] sm:$0xff]
        %s2322 = sadd.s32 %s1942, 624
        %s2323 = scalar_lea.vmem [#allocation2], %s2322
        %v2324 = vld [vmem:[%s2323] sm:$0xff]
        %v2325 = vld [vmem:[%s2323 + $0x8] sm:$0xff]
        %v2326 = vmul.f32 %v2312, %v2295
        %v2327 = vmul.f32 %v2313, %v2296
        %v2328 = vadd.f32 %v2326, %v2327
        %v2329 = vrot.slane %v2328, 4
        %v2330 = vadd.f32 %v2328, %v2329
        %v2331 = vrot.slane %v2330, 2
        %v2332 = vadd.f32 %v2330, %v2331
        %v2333 = vrot.slane %v2332, 1
        %v2334 = vadd.f32 %v2332, %v2333
        %v2335 = vmul.f32 %v2308, %v2295
        %v2336 = vmul.f32 %v2309, %v2296
        %v2337 = vmul.f32 %v2316, %v2334
        %v2338 = vmul.f32 %v2317, %v2334
        %v2339 = vadd.f32 %v2335, %v2337
        %v2340 = vadd.f32 %v2336, %v2338
        %v2341 = vlaneseq
        %v2342 = vshrl.u32 %v2341, 7
        %v2343 = vsub.s32 7, %v2342
        %v2344 = vrot.slane %v1941, %v2343
        %v2345 = vmul.f32 %v2320, %v2344
        %v2346 = vmul.f32 %v2321, %v2344
        %v2347 = vadd.f32 %v2339, %v2345
        %v2348 = vadd.f32 %v2340, %v2346
        %v2349 = vmul.f32 %v2324, %v2347
        %v2350 = vmul.f32 %v2325, %v2348
        %v2351 = vadd.f32 %v2349, %v2350
        %v2352 = vrot.slane %v2351, 4
        %v2353 = vadd.f32 %v2351, %v2352
        %v2354 = vrot.slane %v2353, 2
        %v2355 = vadd.f32 %v2353, %v2354
        %v2356 = vrot.slane %v2355, 1
        %v2357 = vadd.f32 %v2355, %v2356
        %vm2358 = vcmask 1040384
        %v2359 = vsel %vm2358, %v1993, %v2045
        %vm2360 = vcmask 1041408
        %v2361 = vsel %vm2360, %v2359, %v2097
        %vm2362 = vcmask 1042432
        %v2363 = vsel %vm2362, %v2361, %v2149
        %vm2364 = vcmask 1043456
        %v2365 = vsel %vm2364, %v2363, %v2201
        %vm2366 = vcmask 1044480
        %v2367 = vsel %vm2366, %v2365, %v2253
        %vm2368 = vcmask 1045504
        %v2369 = vsel %vm2368, %v2367, %v2305
        %vm2370 = vcmask 1046528
        %v2371 = vsel %vm2370, %v2369, %v2357
        %2372 = vst [vmem:[%s667] sm:$0xff] %v2371
        %2373 = vst [vmem:[#allocation3] sm:$0xff] %v2347
        %2374 = vst [vmem:[#allocation3 + $0x8] sm:$0xff] %v2348
        %2375 = vst [vmem:[%s732] sm:$0xff] %v2347
        %2376 = vst [vmem:[%s732 + $0x8] sm:$0xff] %v2348
        %v2377 = vld [vmem:[%s667] sm:$0xff]
        %v2378 = vld [vmem:[%s682] sm:$0xff]
        %v2379 = vld [vmem:[%s698] sm:$0xff]
        %v2380 = vld [vmem:[%s714] sm:$0xff]
        %v2381 = vld [vmem:[%s706] sm:$0xff]
        %v2382 = vsub.f32 %v2380, 1.0
        %v2383 = vmul.f32 %v2382, %v852
        %v2384 = vadd.f32 %v2383, 1.0
        %v2385 = vmul.f32 %v2379, %v2384
        %v2386 = vmul.f32 %v2378, %v2385
        %v2387 = vld [vmem:[%s9] sm:$0x1]
        %v2389 = vlaneseq
        %v2390 = vshrl.u32 %v2389, 7
        %v2391 = vsub.s32 0, %v2390
        %v2392 = vrot.slane %v2387, %v2391
        %v2394 = vmul.f32 %v2386, %v2392
        %v2395 = vmul.f32 %v2377, %v2377
        %2396 = vmatprep.subr.mxu0 0.0
        %2397 = vmatpush1.msra.mxu0 %v749
        %2398 = vmatprep.subr.mxu0 0.0
        %2399 = vmatpush1.msra.mxu0 %v748
        %2400 = vmatprep.subr.mxu0 0.0
        %2401 = vmatpush1.msra.mxu0 %v747
        %2402 = vmatprep.subr.mxu0 0.0
        %2403 = vmatpush1.msra.mxu0 %v746
        %2404 = vmatprep.subr.mxu0 0.0
        %2405 = vmatpush1.msra.mxu0 %v745
        %2406 = vmatprep.subr.mxu0 0.0
        %2407 = vmatpush1.msra.mxu0 %v744
        %2408 = vmatprep.subr.mxu0 0.0
        %2409 = vmatpush1.msra.mxu0 %v743
        %2410 = vmatprep.subr.mxu0 0.0
        %2411 = vmatpush1.msra.mxu0 %v742
        %2412 = vmatprep.subr.mxu0 0.0
        %2413 = vmatpush1.msra.mxu0 %v741
        %2414 = vmatprep.subr.mxu0 0.0
        %2415 = vmatpush1.msra.mxu0 %v740
        %2416 = vmatprep.subr.mxu0 0.0
        %2417 = vmatpush1.msra.mxu0 %v739
        %2418 = vmatprep.subr.mxu0 0.0
        %2419 = vmatpush1.msra.mxu0 %v738
        %2420 = vmatprep.subr.mxu0 0.0
        %2421 = vmatpush1.msra.mxu0 %v737
        %2422 = vmatprep.subr.mxu0 0.0
        %2423 = vmatpush1.msra.mxu0 %v736
        %2424 = vmatprep.subr.mxu0 0.0
        %2425 = vmatpush1.msra.mxu0 %v735
        %2426 = vmatprep.subr.mxu0 0.0
        %2427 = vmatpush1.msra.mxu0 %v734
        %2428 = vmatprep.subr.mxu0 0.0
        %2429 = vmatpush2.msra.mxu0 0.0
        %2430 = vmatprep.subr.mxu0 0.0
        %2431 = vmatpush2.msra.mxu0 0.0
        %2432 = vmatprep.subr.mxu0 0.0
        %2433 = vmatpush2.msra.mxu0 0.0
        %2434 = vmatprep.subr.mxu0 0.0
        %2435 = vmatpush2.msra.mxu0 0.0
        %2436 = vmatprep.subr.mxu0 0.0
        %2437 = vmatpush2.msra.mxu0 0.0
        %2438 = vmatprep.subr.mxu0 0.0
        %2439 = vmatpush2.msra.mxu0 0.0
        %2440 = vmatprep.subr.mxu0 0.0
        %2441 = vmatpush2.msra.mxu0 0.0
        %2442 = vmatprep.subr.mxu0 0.0
        %2443 = vmatpush2.msra.mxu0 0.0
        %2444 = vmatprep.subr.mxu0 0.0
        %2445 = vmatpush2.msra.mxu0 0.0
        %2446 = vmatprep.subr.mxu0 0.0
        %2447 = vmatpush2.msra.mxu0 0.0
        %2448 = vmatprep.subr.mxu0 0.0
        %2449 = vmatpush2.msra.mxu0 0.0
        %2450 = vmatprep.subr.mxu0 0.0
        %2451 = vmatpush2.msra.mxu0 0.0
        %2452 = vmatprep.subr.mxu0 0.0
        %2453 = vmatpush2.msra.mxu0 0.0
        %2454 = vmatprep.subr.mxu0 0.0
        %2455 = vmatpush2.msra.mxu0 0.0
        %2456 = vmatprep.subr.mxu0 0.0
        %2457 = vmatpush2.msra.mxu0 0.0
        %2458 = vmatprep.subr.mxu0 0.0
        %2459 = vmatpush2.msra.mxu0 0.0
        %2460 = vmatprep.mubr.f32.mxu0 0.0
        %2461 = vmatmul.mubr.f32.gmra.mxu0 %v2377
        %v2462 = vpop.f32.mrf.mxu0
        %v2463 = vadd.f32 0.0, %v2462
        %v2464 = vpop.f32.mrf.mxu0
        %2465 = vmatprep.mubr.f32.mxu0 0.0
        %2466 = vmatmul.mubr.f32.gmra.mxu0 %v2395
        %v2467 = vpop.f32.mrf.mxu0
        %v2468 = vadd.f32 0.0, %v2467
        %v2469 = vpop.f32.mrf.mxu0
        %2470 = vmatprep.mubr.f32.mxu0 0.0
        %2471 = vmatmul.mubr.f32.gmra.mxu0 %v2394
        %v2472 = vpop.f32.mrf.mxu0
        %v2473 = vadd.f32 0.0, %v2472
        %v2474 = vpop.f32.mrf.mxu0
        %2475 = vdwg.mxu0
        %v2476 = vmul.f32 %v2463, 0.0625
        %v2477 = vmul.f32 %v2468, 0.0625
        %v2478 = vmul.f32 %v2476, %v2476
        %v2479 = vsub.f32 %v2477, %v2478
        %v2480 = vsub.f32 %v2377, %v2476
        %v2481 = vadd.f32 %v2479, 0.00064
        %v2482 = vrsqrt.pop %v2481
        %v2483 = vmul.f32 %v2480, %v2482
        %v2484 = vld [vmem:[%s10] sm:$0x1]
        %v2486 = vlaneseq
        %v2487 = vshrl.u32 %v2486, 7
        %v2488 = vsub.s32 0, %v2487
        %v2489 = vrot.slane %v2484, %v2488
        %v2491 = vmul.f32 %v2483, %v2489
        %v2492 = vld [vmem:[%s11] sm:$0x1]
        %v2494 = vlaneseq
        %v2495 = vshrl.u32 %v2494, 7
        %v2496 = vsub.s32 0, %v2495
        %v2497 = vrot.slane %v2492, %v2496
        %v2499 = vadd.f32 %v2491, %v2497
        %v2500 = vmul.f32 %v2473, %v2381
        %v2501 = vadd.f32 %v2499, %v2500
        %v2502 = vld [vmem:[%s722] sm:$0xff]
        %v2503 = vmul.f32 %v2501, %v2502
        %v2504 = vpack.c.bf16 %v2503, %v2503
        %v2505 = vld [vmem:[%s14] sm:$0xf]
        %v2506 = vld [vmem:[%s14 + $0x4] sm:$0xf]
        %v2507 = vld [vmem:[%s14 + $0x8] sm:$0xf]
        %v2508 = vld [vmem:[%s14 + $0xc] sm:$0xf]
        %v2509 = vld [vmem:[%s14 + $0x10] sm:$0xf]
        %v2510 = vld [vmem:[%s14 + $0x14] sm:$0xf]
        %v2511 = vld [vmem:[%s14 + $0x18] sm:$0xf]
        %v2512 = vld [vmem:[%s14 + $0x1c] sm:$0xf]
        %v2513 = vld [vmem:[%s14 + $0x20] sm:$0xf]
        %v2514 = vld [vmem:[%s14 + $0x24] sm:$0xf]
        %v2515 = vld [vmem:[%s14 + $0x28] sm:$0xf]
        %v2516 = vld [vmem:[%s14 + $0x2c] sm:$0xf]
        %v2517 = vld [vmem:[%s14 + $0x30] sm:$0xf]
        %v2518 = vld [vmem:[%s14 + $0x34] sm:$0xf]
        %v2519 = vld [vmem:[%s14 + $0x38] sm:$0xf]
        %v2520 = vld [vmem:[%s14 + $0x3c] sm:$0xf]
        %v2537 = vunpack.c.l.b16 %v2505
        %v2538 = vunpack.c.l.b16 %v2506
        %v2539 = vunpack.c.l.b16 %v2507
        %v2540 = vunpack.c.l.b16 %v2508
        %v2541 = vunpack.c.l.b16 %v2509
        %v2542 = vunpack.c.l.b16 %v2510
        %v2543 = vunpack.c.l.b16 %v2511
        %v2544 = vunpack.c.l.b16 %v2512
        %v2545 = vunpack.c.l.b16 %v2513
        %v2546 = vunpack.c.l.b16 %v2514
        %v2547 = vunpack.c.l.b16 %v2515
        %v2548 = vunpack.c.l.b16 %v2516
        %v2549 = vunpack.c.l.b16 %v2517
        %v2550 = vunpack.c.l.b16 %v2518
        %v2551 = vunpack.c.l.b16 %v2519
        %v2552 = vunpack.c.l.b16 %v2520
        %v2553 = vpack.c.b16 %v2538, %v2537
        %v2554 = vpack.c.b16 %v2540, %v2539
        %v2555 = vpack.c.b16 %v2542, %v2541
        %v2556 = vpack.c.b16 %v2544, %v2543
        %v2557 = vpack.c.b16 %v2546, %v2545
        %v2558 = vpack.c.b16 %v2548, %v2547
        %v2559 = vpack.c.b16 %v2550, %v2549
        %v2560 = vpack.c.b16 %v2552, %v2551
        %2569 = vmatprep.subr.bf16.mxu0 0
        %2570 = vmatpush1.bf16.msra.mxu0 %v2560
        %2571 = vmatprep.subr.bf16.mxu0 0
        %2572 = vmatpush1.bf16.msra.mxu0 %v2559
        %2573 = vmatprep.subr.bf16.mxu0 0
        %2574 = vmatpush1.bf16.msra.mxu0 %v2558
        %2575 = vmatprep.subr.bf16.mxu0 0
        %2576 = vmatpush1.bf16.msra.mxu0 %v2557
        %2577 = vmatprep.subr.bf16.mxu0 0
        %2578 = vmatpush1.bf16.msra.mxu0 %v2556
        %2579 = vmatprep.subr.bf16.mxu0 0
        %2580 = vmatpush1.bf16.msra.mxu0 %v2555
        %2581 = vmatprep.subr.bf16.mxu0 0
        %2582 = vmatpush1.bf16.msra.mxu0 %v2554
        %2583 = vmatprep.subr.bf16.mxu0 0
        %2584 = vmatpush1.bf16.msra.mxu0 %v2553
        %2585 = vmatprep.subr.bf16.mxu0 0
        %2586 = vmatpush2.bf16.msra.mxu0 0
        %2587 = vmatprep.subr.bf16.mxu0 0
        %2588 = vmatpush2.bf16.msra.mxu0 0
        %2589 = vmatprep.subr.bf16.mxu0 0
        %2590 = vmatpush2.bf16.msra.mxu0 0
        %2591 = vmatprep.subr.bf16.mxu0 0
        %2592 = vmatpush2.bf16.msra.mxu0 0
        %2593 = vmatprep.subr.bf16.mxu0 0
        %2594 = vmatpush2.bf16.msra.mxu0 0
        %2595 = vmatprep.subr.bf16.mxu0 0
        %2596 = vmatpush2.bf16.msra.mxu0 0
        %2597 = vmatprep.subr.bf16.mxu0 0
        %2598 = vmatpush2.bf16.msra.mxu0 0
        %2599 = vmatprep.subr.bf16.mxu0 0
        %2600 = vmatpush2.bf16.msra.mxu0 0
        %2601 = vmatprep.mubr.bf16.mxu0 0
        %2602 = vmatmul.mubr.bf16.gmra.mxu0 %v2504
        %v2603 = vpop.f32.mrf.mxu0
        %v2604 = vadd.f32 0.0, %v2603
        %v2605 = vpop.f32.mrf.mxu0
        %v2606 = vpop.f32.mrf.mxu0
        %v2607 = vpop.f32.mrf.mxu0
        %2608 = vdwg.mxu0
        %2609 = vst [vmem:[%s667] sm:$0xff] %v2604
        %s2610 = sand.u32 %s415, 1
        %s2611 = scalar_lea.sflag [#allocation5], %s2610
        %s2612 = sand.u32 %s415, 1
        %s2613 = smul.addr %s2612, 8
        %s2614 = scalar_lea.vmem [#allocation4], %s2613
        %p2615 = scmp.lt.s32.totalorder %s35, 1
        %s2616 = scalar_select %p2615, %s35, 1
        %s2617 = smul.addr %s2616, 2
        %s2618 = smul.addr %s2617, 8
        %s2619 = scalar_lea.vmem %s16, %s2618
        // Predicated region
        $region85: #{rwkv7_attention_forward.1} parent=79 // pred_check
          %p2620 = pneg %p425
        $region86: #{rwkv7_attention_forward.1} parent=79 // pred_check_branch
          %2622 = sbr.rel (%p2620) target = $region88
        $region87: #{rwkv7_attention_forward.1} parent=79 // pred_region
          %s2624 = ssub.s32 128, 128
          %2625 = vsyncadd %s2611, %s2624
          %s2626 = smul.addr %s35, 2
          %s2627 = sadd.s32 %s36, %s2626
          %s2628 = smul.addr %s2627, 128
          %s2629 = scalar_lea.hbm %s15, %s2628
          %s2631 = sshll.u32 %s2614, 4
          %s2632 = int_to_ptr.vmem [resolvable:$true] %s2631
          %2634 = dma.vmem_to_hbm [thread:$0]  %s2632, 128, %s2629, %s2611
        $region88: #{rwkv7_attention_forward.1} parent=79 // pred_fallthru
          _
        // Predicated region
        $region89: #{rwkv7_attention_forward.1} parent=79 // pred_check
          %p2635 = pneg %p451
        $region90: #{rwkv7_attention_forward.1} parent=79 // pred_check_branch
          %2637 = sbr.rel (%p2635) target = $region92
        $region91: #{rwkv7_attention_forward.1} parent=79 // pred_region
          _
        $region92: #{rwkv7_attention_forward.1} parent=79 // pred_fallthru
          _
      $region80: #{rwkv7_attention_forward.1} parent=5 // pred_fallthru
        _
      %p2638 = scmp.le.s32.totalorder 2, %s26
      // Predicated region
      $region93: #{rwkv7_attention_forward.1} parent=5 // pred_check
        %p2639 = pneg %p2638
      $region94: #{rwkv7_attention_forward.1} parent=5 // pred_check_branch
        %2641 = sbr.rel (%p2639) target = $region96
      $region95: #{rwkv7_attention_forward.1} parent=5 // pred_region
        %s2642 = ssub.s32 %s26, 2
        // Predicated region
        $region97: #{rwkv7_attention_forward.1} parent=95 // pred_check
          %p2643 = pneg %p431
        $region98: #{rwkv7_attention_forward.1} parent=95 // pred_check_branch
          %2645 = sbr.rel (%p2643) target = $region100
        $region99: #{rwkv7_attention_forward.1} parent=95 // pred_region
          %s2646 = sand.u32 %s416, 1
          %s2647 = scalar_lea.sflag [#allocation5], %s2646
          %s2648 = sand.u32 %s416, 1
          %s2649 = smul.addr %s2648, 8
          %s2650 = scalar_lea.vmem [#allocation4], %s2649
          %2651 = dma.done %s2647, 128
        $region100: #{rwkv7_attention_forward.1} parent=95 // pred_fallthru
          _
        // Predicated region
        $region101: #{rwkv7_attention_forward.1} parent=95 // pred_check
          %p2652 = pneg %p457
        $region102: #{rwkv7_attention_forward.1} parent=95 // pred_check_branch
          %2654 = sbr.rel (%p2652) target = $region104
        $region103: #{rwkv7_attention_forward.1} parent=95 // pred_region
          %p2655 = scmp.lt.s32.totalorder %s37, 1
          %s2656 = scalar_select %p2655, %s37, 1
          %s2657 = smul.addr %s2656, 2
          %s2658 = smul.addr %s2657, 8
          %s2659 = scalar_lea.vmem %s16, %s2658
        $region104: #{rwkv7_attention_forward.1} parent=95 // pred_fallthru
          _
      $region96: #{rwkv7_attention_forward.1} parent=5 // pred_fallthru
        _
    $region6: #{rwkv7_attention_forward.1} parent=1 // loop_footer
      %s30 = sadd.s32 1, %s26
    $region7: #{rwkv7_attention_forward.1} parent=1 // loop_footer_branch
      %25 = sbr.rel target = $region3
    $region8: #{rwkv7_attention_forward.1} parent=1 // loop_exit
      _
    %2660 = vsyncpa [#allocation5], 1
    %s2661 = scalar_lea.sflag [#allocation5], 1
    %2662 = vsyncpa %s2661, 1

</llo_original>
